<compile_context>
chip_gen: v7x
topology: tpu7x:2x2x1
jax: 0.10.0
libtpu: 0.0.40
codegen_flags: <defaults>
</compile_context>

<pallas_src>
import functools

import jax
import jax.numpy as jnp
from jax import lax
from jax.experimental import pallas as pl
from jax.experimental.pallas import tpu as pltpu


def cbam_kernel(x_ref, w1t_ref, w2t_ref, wsp_ref, o_ref, pad_ref, *, ksize, height, width):
    """One grid step processes `Nb` batch elements in lane-dense (Nb, C, H*W) layout.

    x_ref   : (Nb, C, HW)            VMEM, HW = H*W  (trailing dim multiple of 128)
    w1t_ref : (C, Cr)                VMEM  (f1 1x1-conv weight, pre-transposed)
    w2t_ref : (Cr, C)                VMEM  (f2 1x1-conv weight, pre-transposed)
    wsp_ref : (2*K*K,)               SMEM  flattened 7x7 spatial-conv weights
    o_ref   : (Nb, C, HW)            VMEM
    pad_ref : (Nb, 2, H+2p, W+2p)    VMEM scratch for zero-padded [mean, max] maps
    """
    K = ksize
    H, W = height, width
    p = (K - 1) // 2
    Nb, _, HW = x_ref.shape

    x = x_ref[...].astype(jnp.float32)                    # (Nb, C, HW)

    # ---------------- Channel attention ----------------
    # Batched + fused MLP: one pair of matmuls covers avg & max of all Nb elements.
    avg = jnp.mean(x, axis=2)                             # (Nb, C)  == AdaptiveAvgPool2d(1)
    mxv = jnp.max(x, axis=2)                              # (Nb, C)  == AdaptiveMaxPool2d(1)
    v = jnp.concatenate([avg, mxv], axis=0)               # (2*Nb, C)
    h1 = jnp.maximum(
        jnp.dot(v, w1t_ref[...], preferred_element_type=jnp.float32), 0.0)   # (2*Nb, Cr)
    z = jnp.dot(h1, w2t_ref[...], preferred_element_type=jnp.float32)        # (2*Nb, C)
    ca = jax.nn.sigmoid(z[:Nb] + z[Nb:])                  # (Nb, C)
    out1 = x * ca[:, :, None]                             # channel-attended features

    # ---------------- Spatial attention ----------------
    mean_c = jnp.mean(out1, axis=1)                       # (Nb, HW) mean over channels
    max_c = jnp.max(out1, axis=1)                         # (Nb, HW) max over channels

    # Zero-padded stacked maps in VMEM scratch (no concat-based padding).
    # Zeroed every step (a few KiB -> negligible) so megacore grid splits stay correct.
    pad_ref[...] = jnp.zeros_like(pad_ref)
    pad_ref[:, 0:1, p:p + H, p:p + W] = mean_c.reshape(Nb, 1, H, W)
    pad_ref[:, 1:2, p:p + H, p:p + W] = max_c.reshape(Nb, 1, H, W)
    padded = pad_ref[...]                                 # (Nb, 2, H+2p, W+2p)

    # Hoist the K lane (dx) shifts out of the dy loop: K lane shifts total; the
    # inner loop then only does sublane-offset slices and FMAs.
    shifted = [padded[:, :, :, dx:dx + W] for dx in range(K)]   # each (Nb, 2, H+2p, W)

    ch_is_mean = lax.broadcasted_iota(jnp.int32, (1, 2, 1, 1), 1) == 0
    acc = jnp.zeros((Nb, 2, H, W), jnp.float32)
    for dy in range(K):
        for dx in range(K):
            c_mean = wsp_ref[dy * K + dx]                 # SMEM scalar (conv channel 0: mean)
            c_max = wsp_ref[K * K + dy * K + dx]          # SMEM scalar (conv channel 1: max)
            coef = jnp.where(ch_is_mean, c_mean, c_max)   # (1, 2, 1, 1)
            acc = acc + coef * shifted[dx][:, :, dy:dy + H, :]
    sa = jax.nn.sigmoid(acc[:, 0] + acc[:, 1])            # (Nb, H, W)

    o_ref[...] = (out1 * sa.reshape(Nb, 1, HW)).astype(o_ref.dtype)


def cbam_pallas(x, w1, w2, wsp, *, ksize=7, block_n=None):
    N, C, H, W = x.shape
    Cr = w1.shape[0]
    HW = H * W
    p = (ksize - 1) // 2

    if block_n is None:                    # batch elements per grid step
        block_n = min(N, 8)
        while N % block_n:
            block_n -= 1
    assert N % block_n == 0

    # Lane-dense layout & weight transposes: free metadata ops on contiguous HBM arrays.
    x_flat = x.reshape(N, C, HW)
    w1t = jnp.transpose(w1)                # (C, Cr)
    w2t = jnp.transpose(w2)                # (Cr, C)
    wsp_flat = wsp.reshape(-1)             # (2*K*K,) -> SMEM scalars

    # VMEM budget: double-buffered in + out blocks + scratch; only raise the scoped
    # limit if the blocks actually exceed the most conservative default (v7x-safe).
    block_bytes = block_n * C * HW * x.dtype.itemsize
    scratch_bytes = block_n * 2 * (H + 2 * p) * (W + 2 * p) * 4
    vmem_needed = 4 * block_bytes + scratch_bytes + 4 * (2 * C * Cr) * 4
    vmem_limit = (int(min(1.5 * vmem_needed, 64 * 1024 * 1024))
                  if vmem_needed > (12 << 20) else None)

    kernel = functools.partial(cbam_kernel, ksize=ksize, height=H, width=W)
    out_flat = pl.pallas_call(
        kernel,
        out_shape=jax.ShapeDtypeStruct((N, C, HW), x.dtype),
        grid_spec=pltpu.PrefetchScalarGridSpec(
            num_scalar_prefetch=0,
            grid=(N // block_n,),
            in_specs=[
                pl.BlockSpec((block_n, C, HW), lambda b: (b, 0, 0)),
                pl.BlockSpec((C, Cr), lambda b: (0, 0)),
                pl.BlockSpec((Cr, C), lambda b: (0, 0)),
                pl.BlockSpec(memory_space=pltpu.MemorySpace.SMEM),
            ],
            out_specs=pl.BlockSpec((block_n, C, HW), lambda b: (b, 0, 0)),
            scratch_shapes=[
                pltpu.VMEM((block_n, 2, H + 2 * p, W + 2 * p), jnp.float32),
            ],
        ),
        compiler_params=pltpu.CompilerParams(
            dimension_semantics=("parallel",),
            vmem_limit_bytes=vmem_limit,
        ),
    )(x_flat, w1t, w2t, wsp_flat)
    return out_flat.reshape(N, C, H, W)


def cbam_reference(x, w1, w2, wsp, *, ksize=7):
    """Pure-JAX reference mirroring the PyTorch module."""
    pad = (ksize - 1) // 2

    # Channel attention
    avg = jnp.mean(x, axis=(2, 3))                      # (N, C)
    mxv = jnp.max(x, axis=(2, 3))                       # (N, C)

    def mlp(v):                                         # v: (N, C)
        h = jnp.maximum(v @ w1.T, 0.0)                  # (N, Cr)
        return h @ w2.T                                 # (N, C)

    ca = jax.nn.sigmoid(mlp(avg) + mlp(mxv))            # (N, C)
    out1 = x * ca[:, :, None, None]

    # Spatial attention (7x7 conv over [mean_c, max_c])
    mean_c = jnp.mean(out1, axis=1, keepdims=True)      # (N, 1, H, W)
    max_c = jnp.max(out1, axis=1, keepdims=True)        # (N, 1, H, W)
    cat = jnp.concatenate([mean_c, max_c], axis=1)      # (N, 2, H, W)
    conv = lax.conv_general_dilated(
        cat, wsp[None],                                 # OIHW -> (1, 2, K, K)
        window_strides=(1, 1),
        padding=[(pad, pad), (pad, pad)],
        dimension_numbers=("NCHW", "OIHW", "NCHW"),
    )                                                   # (N, 1, H, W)
    sa = jax.nn.sigmoid(conv)
    return out1 * sa


if __name__ == "__main__":
    N, C, H, W = 2, 32, 16, 16
    ratio, ksize = 16, 7
    Cr = C // ratio

    key = jax.random.PRNGKey(0)
    kx, k1, k2, ks = jax.random.split(key, 4)
    x = jax.random.normal(kx, (N, C, H, W), jnp.float32)
    # f1: Conv2d(C, C//ratio, 1, bias=False)  -> weight (Cr, C)
    w1 = jax.random.normal(k1, (Cr, C), jnp.float32) * (1.0 / jnp.sqrt(C))
    # f2: Conv2d(C//ratio, C, 1, bias=False)  -> weight (C, Cr)
    w2 = jax.random.normal(k2, (C, Cr), jnp.float32) * (1.0 / jnp.sqrt(Cr))
    # spatial conv: Conv2d(2, 1, 7, padding=3, bias=False) -> weight (2, 7, 7)
    wsp = jax.random.normal(ks, (2, ksize, ksize), jnp.float32) * 0.05

    out = cbam_pallas(x, w1, w2, wsp, ksize=ksize)
    out = jax.block_until_ready(out)

    ref = cbam_reference(x, w1, w2, wsp, ksize=ksize)
    assert out.shape == (N, C, H, W)
    max_err = float(jnp.max(jnp.abs(out - ref)))
    assert jnp.allclose(out, ref, atol=1e-4, rtol=1e-4), max_err
    print("KERNEL_OK")
</pallas_src>

<mosaic_0001>
module attributes {stable_mosaic.version = 11 : i64} {
  func.func @cbam_kernel(%arg0: i32, %arg1: memref<2x32x256xf32, #tpu.memory_space<vmem>>, %arg2: memref<32x2xf32, #tpu.memory_space<vmem>>, %arg3: memref<2x32xf32, #tpu.memory_space<vmem>>, %arg4: memref<98xf32, #tpu.memory_space<smem>>, %arg5: memref<2x32x256xf32, #tpu.memory_space<vmem>>, %arg6: memref<2x2x22x22xf32, #tpu.memory_space<vmem>>) attributes {dimension_semantics = [#tpu.dimension_semantics<parallel>], iteration_bounds = array<i64: 1>, scalar_prefetch = 0 : i64, scratch_operands = 1 : i64, tpu.core_type = #tpu.core_type<tc>, window_params = [{transform_indices = @transform_0, window_bounds = array<i64: 2, 32, 256>}, {pipeline_mode = #tpu.pipeline_mode<synchronous>, transform_indices = @transform_1, window_bounds = array<i64: 32, 2>}, {pipeline_mode = #tpu.pipeline_mode<synchronous>, transform_indices = @transform_2, window_bounds = array<i64: 2, 32>}, {transform_indices = @transform_3, window_bounds = array<i64: 98>}, {transform_indices = @transform_4, window_bounds = array<i64: 2, 32, 256>}]} {
    %c0 = arith.constant 0 : index
    %c0_0 = arith.constant 0 : index
    %c0_1 = arith.constant 0 : index
    %0 = vector.load %arg1[%c0, %c0_0, %c0_1] : memref<2x32x256xf32, #tpu.memory_space<vmem>>, vector<2x32x256xf32>
    %cst = arith.constant dense<0.000000e+00> : vector<2x32xf32>
    %1 = vector.multi_reduction <add>, %0, %cst [2] : vector<2x32x256xf32> to vector<2x32xf32>
    %cst_2 = arith.constant 2.560000e+02 : f32
    %2 = vector.broadcast %cst_2 : f32 to vector<2x32xf32>
    %3 = arith.divf %1, %2 : vector<2x32xf32>
    %cst_3 = arith.constant dense<0xFF800000> : vector<2x32xf32>
    %4 = vector.multi_reduction <maximumf>, %0, %cst_3 [2] : vector<2x32x256xf32> to vector<2x32xf32>
    %5 = tpu.concatenate %3, %4 in 0 : vector<2x32xf32>, vector<2x32xf32> -> vector<4x32xf32>
    %c0_4 = arith.constant 0 : index
    %c0_5 = arith.constant 0 : index
    %6 = vector.load %arg2[%c0_4, %c0_5] : memref<32x2xf32, #tpu.memory_space<vmem>>, vector<32x2xf32>
    %cst_6 = arith.constant dense<0.000000e+00> : vector<4x2xf32>
    %7 = tpu.matmul %5, %6, %cst_6 {dimension_numbers = #tpu.dot_dimension_numbers<[1], [0], [0], [1], [0, 0, 1, 1], [], []>} : vector<4x32xf32>, vector<32x2xf32>, vector<4x2xf32> -> vector<4x2xf32>
    %cst_7 = arith.constant 0.000000e+00 : f32
    %8 = vector.broadcast %cst_7 : f32 to vector<4x2xf32>
    %9 = arith.maximumf %7, %8 : vector<4x2xf32>
    %c0_8 = arith.constant 0 : index
    %c0_9 = arith.constant 0 : index
    %10 = vector.load %arg3[%c0_8, %c0_9] : memref<2x32xf32, #tpu.memory_space<vmem>>, vector<2x32xf32>
    %cst_10 = arith.constant dense<0.000000e+00> : vector<4x32xf32>
    %11 = tpu.matmul %9, %10, %cst_10 {dimension_numbers = #tpu.dot_dimension_numbers<[1], [0], [0], [1], [0, 0, 1, 1], [], []>} : vector<4x2xf32>, vector<2x32xf32>, vector<4x32xf32> -> vector<4x32xf32>
    %12 = vector.extract_strided_slice %11 {offsets = [0, 0], sizes = [2, 32], strides = [1, 1]} : vector<4x32xf32> to vector<2x32xf32>
    %13 = vector.extract_strided_slice %11 {offsets = [2, 0], sizes = [2, 32], strides = [1, 1]} : vector<4x32xf32> to vector<2x32xf32>
    %14 = arith.addf %12, %13 : vector<2x32xf32>
    %15 = arith.negf %14 : vector<2x32xf32>
    %16 = math.exp %15 : vector<2x32xf32>
    %cst_11 = arith.constant 1.000000e+00 : f32
    %17 = vector.broadcast %cst_11 : f32 to vector<2x32xf32>
    %18 = arith.addf %17, %16 : vector<2x32xf32>
    %19 = arith.divf %17, %18 : vector<2x32xf32>
    %20 = vector.shape_cast %19 : vector<2x32xf32> to vector<2x32x1xf32>
    %21 = vector.broadcast %20 : vector<2x32x1xf32> to vector<2x32x256xf32>
    %22 = arith.mulf %0, %21 : vector<2x32x256xf32>
    %cst_12 = arith.constant dense<0.000000e+00> : vector<2x256xf32>
    %23 = vector.multi_reduction <add>, %22, %cst_12 [1] : vector<2x32x256xf32> to vector<2x256xf32>
    %cst_13 = arith.constant 3.200000e+01 : f32
    %24 = vector.broadcast %cst_13 : f32 to vector<2x256xf32>
    %25 = arith.divf %23, %24 : vector<2x256xf32>
    %cst_14 = arith.constant dense<0xFF800000> : vector<2x256xf32>
    %26 = vector.multi_reduction <maximumf>, %22, %cst_14 [1] : vector<2x32x256xf32> to vector<2x256xf32>
    %cst_15 = arith.constant 0.000000e+00 : f32
    %27 = vector.broadcast %cst_15 : f32 to vector<2x2x22x22xf32>
    %c0_16 = arith.constant 0 : index
    %c0_17 = arith.constant 0 : index
    %c0_18 = arith.constant 0 : index
    %c0_19 = arith.constant 0 : index
    %28 = vector.load %arg6[%c0_16, %c0_17, %c0_18, %c0_19] : memref<2x2x22x22xf32, #tpu.memory_space<vmem>>, vector<2x2x22x22xf32>
    tpu.vector_store %arg6[%c0_16, %c0_17, %c0_18, %c0_19], %27 {strides = array<i32>} : memref<2x2x22x22xf32, #tpu.memory_space<vmem>>, vector<2x2x22x22xf32>,
    %29 = vector.shape_cast %25 : vector<2x256xf32> to vector<2x1x16x16xf32>
    %c0_20 = arith.constant 0 : index
    %c0_21 = arith.constant 0 : index
    %c3 = arith.constant 3 : index
    %c3_22 = arith.constant 3 : index
    %30 = vector.load %arg6[%c0_20, %c0_21, %c3, %c3_22] : memref<2x2x22x22xf32, #tpu.memory_space<vmem>>, vector<2x1x16x16xf32>
    tpu.vector_store %arg6[%c0_20, %c0_21, %c3, %c3_22], %29 {strides = array<i32>} : memref<2x2x22x22xf32, #tpu.memory_space<vmem>>, vector<2x1x16x16xf32>,
    %31 = vector.shape_cast %26 : vector<2x256xf32> to vector<2x1x16x16xf32>
    %c0_23 = arith.constant 0 : index
    %c1 = arith.constant 1 : index
    %c3_24 = arith.constant 3 : index
    %c3_25 = arith.constant 3 : index
    %32 = vector.load %arg6[%c0_23, %c1, %c3_24, %c3_25] : memref<2x2x22x22xf32, #tpu.memory_space<vmem>>, vector<2x1x16x16xf32>
    tpu.vector_store %arg6[%c0_23, %c1, %c3_24, %c3_25], %31 {strides = array<i32>} : memref<2x2x22x22xf32, #tpu.memory_space<vmem>>, vector<2x1x16x16xf32>,
    %c0_26 = arith.constant 0 : index
    %c0_27 = arith.constant 0 : index
    %c0_28 = arith.constant 0 : index
    %c0_29 = arith.constant 0 : index
    %33 = vector.load %arg6[%c0_26, %c0_27, %c0_28, %c0_29] : memref<2x2x22x22xf32, #tpu.memory_space<vmem>>, vector<2x2x22x22xf32>
    %34 = vector.extract_strided_slice %33 {offsets = [0, 0, 0, 0], sizes = [2, 2, 22, 16], strides = [1, 1, 1, 1]} : vector<2x2x22x22xf32> to vector<2x2x22x16xf32>
    %35 = vector.extract_strided_slice %33 {offsets = [0, 0, 0, 1], sizes = [2, 2, 22, 16], strides = [1, 1, 1, 1]} : vector<2x2x22x22xf32> to vector<2x2x22x16xf32>
    %36 = vector.extract_strided_slice %33 {offsets = [0, 0, 0, 2], sizes = [2, 2, 22, 16], strides = [1, 1, 1, 1]} : vector<2x2x22x22xf32> to vector<2x2x22x16xf32>
    %37 = vector.extract_strided_slice %33 {offsets = [0, 0, 0, 3], sizes = [2, 2, 22, 16], strides = [1, 1, 1, 1]} : vector<2x2x22x22xf32> to vector<2x2x22x16xf32>
    %38 = vector.extract_strided_slice %33 {offsets = [0, 0, 0, 4], sizes = [2, 2, 22, 16], strides = [1, 1, 1, 1]} : vector<2x2x22x22xf32> to vector<2x2x22x16xf32>
    %39 = vector.extract_strided_slice %33 {offsets = [0, 0, 0, 5], sizes = [2, 2, 22, 16], strides = [1, 1, 1, 1]} : vector<2x2x22x22xf32> to vector<2x2x22x16xf32>
    %40 = vector.extract_strided_slice %33 {offsets = [0, 0, 0, 6], sizes = [2, 2, 22, 16], strides = [1, 1, 1, 1]} : vector<2x2x22x22xf32> to vector<2x2x22x16xf32>
    %41 = tpu.iota {dimensions = array<i32: 1>} : vector<1x2x1x1xi32>
    %c0_i32 = arith.constant 0 : i32
    %42 = vector.broadcast %c0_i32 : i32 to vector<1x2x1x1xi32>
    %43 = arith.cmpi eq, %41, %42 : vector<1x2x1x1xi32>
    %cst_30 = arith.constant 0.000000e+00 : f32
    %44 = vector.broadcast %cst_30 : f32 to vector<2x2x16x16xf32>
    %c0_31 = arith.constant 0 : index
    %45 = memref.load %arg4[%c0_31] : memref<98xf32, #tpu.memory_space<smem>>
    %c49 = arith.constant 49 : index
    %46 = memref.load %arg4[%c49] : memref<98xf32, #tpu.memory_space<smem>>
    %47 = vector.broadcast %45 : f32 to vector<1x2x1x1xf32>
    %48 = vector.broadcast %46 : f32 to vector<1x2x1x1xf32>
    %49 = arith.select %43, %47, %48 : vector<1x2x1x1xi1>, vector<1x2x1x1xf32>
    %50 = vector.extract_strided_slice %34 {offsets = [0, 0, 0, 0], sizes = [2, 2, 16, 16], strides = [1, 1, 1, 1]} : vector<2x2x22x16xf32> to vector<2x2x16x16xf32>
    %51 = vector.broadcast %49 : vector<1x2x1x1xf32> to vector<2x2x16x16xf32>
    %52 = arith.mulf %51, %50 : vector<2x2x16x16xf32>
    %53 = arith.addf %44, %52 : vector<2x2x16x16xf32>
    %c1_32 = arith.constant 1 : index
    %54 = memref.load %arg4[%c1_32] : memref<98xf32, #tpu.memory_space<smem>>
    %c50 = arith.constant 50 : index
    %55 = memref.load %arg4[%c50] : memref<98xf32, #tpu.memory_space<smem>>
    %56 = vector.broadcast %54 : f32 to vector<1x2x1x1xf32>
    %57 = vector.broadcast %55 : f32 to vector<1x2x1x1xf32>
    %58 = arith.select %43, %56, %57 : vector<1x2x1x1xi1>, vector<1x2x1x1xf32>
    %59 = vector.extract_strided_slice %35 {offsets = [0, 0, 0, 0], sizes = [2, 2, 16, 16], strides = [1, 1, 1, 1]} : vector<2x2x22x16xf32> to vector<2x2x16x16xf32>
    %60 = vector.broadcast %58 : vector<1x2x1x1xf32> to vector<2x2x16x16xf32>
    %61 = arith.mulf %60, %59 : vector<2x2x16x16xf32>
    %62 = arith.addf %53, %61 : vector<2x2x16x16xf32>
    %c2 = arith.constant 2 : index
    %63 = memref.load %arg4[%c2] : memref<98xf32, #tpu.memory_space<smem>>
    %c51 = arith.constant 51 : index
    %64 = memref.load %arg4[%c51] : memref<98xf32, #tpu.memory_space<smem>>
    %65 = vector.broadcast %63 : f32 to vector<1x2x1x1xf32>
    %66 = vector.broadcast %64 : f32 to vector<1x2x1x1xf32>
    %67 = arith.select %43, %65, %66 : vector<1x2x1x1xi1>, vector<1x2x1x1xf32>
    %68 = vector.extract_strided_slice %36 {offsets = [0, 0, 0, 0], sizes = [2, 2, 16, 16], strides = [1, 1, 1, 1]} : vector<2x2x22x16xf32> to vector<2x2x16x16xf32>
    %69 = vector.broadcast %67 : vector<1x2x1x1xf32> to vector<2x2x16x16xf32>
    %70 = arith.mulf %69, %68 : vector<2x2x16x16xf32>
    %71 = arith.addf %62, %70 : vector<2x2x16x16xf32>
    %c3_33 = arith.constant 3 : index
    %72 = memref.load %arg4[%c3_33] : memref<98xf32, #tpu.memory_space<smem>>
    %c52 = arith.constant 52 : index
    %73 = memref.load %arg4[%c52] : memref<98xf32, #tpu.memory_space<smem>>
    %74 = vector.broadcast %72 : f32 to vector<1x2x1x1xf32>
    %75 = vector.broadcast %73 : f32 to vector<1x2x1x1xf32>
    %76 = arith.select %43, %74, %75 : vector<1x2x1x1xi1>, vector<1x2x1x1xf32>
    %77 = vector.extract_strided_slice %37 {offsets = [0, 0, 0, 0], sizes = [2, 2, 16, 16], strides = [1, 1, 1, 1]} : vector<2x2x22x16xf32> to vector<2x2x16x16xf32>
    %78 = vector.broadcast %76 : vector<1x2x1x1xf32> to vector<2x2x16x16xf32>
    %79 = arith.mulf %78, %77 : vector<2x2x16x16xf32>
    %80 = arith.addf %71, %79 : vector<2x2x16x16xf32>
    %c4 = arith.constant 4 : index
    %81 = memref.load %arg4[%c4] : memref<98xf32, #tpu.memory_space<smem>>
    %c53 = arith.constant 53 : index
    %82 = memref.load %arg4[%c53] : memref<98xf32, #tpu.memory_space<smem>>
    %83 = vector.broadcast %81 : f32 to vector<1x2x1x1xf32>
    %84 = vector.broadcast %82 : f32 to vector<1x2x1x1xf32>
    %85 = arith.select %43, %83, %84 : vector<1x2x1x1xi1>, vector<1x2x1x1xf32>
    %86 = vector.extract_strided_slice %38 {offsets = [0, 0, 0, 0], sizes = [2, 2, 16, 16], strides = [1, 1, 1, 1]} : vector<2x2x22x16xf32> to vector<2x2x16x16xf32>
    %87 = vector.broadcast %85 : vector<1x2x1x1xf32> to vector<2x2x16x16xf32>
    %88 = arith.mulf %87, %86 : vector<2x2x16x16xf32>
    %89 = arith.addf %80, %88 : vector<2x2x16x16xf32>
    %c5 = arith.constant 5 : index
    %90 = memref.load %arg4[%c5] : memref<98xf32, #tpu.memory_space<smem>>
    %c54 = arith.constant 54 : index
    %91 = memref.load %arg4[%c54] : memref<98xf32, #tpu.memory_space<smem>>
    %92 = vector.broadcast %90 : f32 to vector<1x2x1x1xf32>
    %93 = vector.broadcast %91 : f32 to vector<1x2x1x1xf32>
    %94 = arith.select %43, %92, %93 : vector<1x2x1x1xi1>, vector<1x2x1x1xf32>
    %95 = vector.extract_strided_slice %39 {offsets = [0, 0, 0, 0], sizes = [2, 2, 16, 16], strides = [1, 1, 1, 1]} : vector<2x2x22x16xf32> to vector<2x2x16x16xf32>
    %96 = vector.broadcast %94 : vector<1x2x1x1xf32> to vector<2x2x16x16xf32>
    %97 = arith.mulf %96, %95 : vector<2x2x16x16xf32>
    %98 = arith.addf %89, %97 : vector<2x2x16x16xf32>
    %c6 = arith.constant 6 : index
    %99 = memref.load %arg4[%c6] : memref<98xf32, #tpu.memory_space<smem>>
    %c55 = arith.constant 55 : index
    %100 = memref.load %arg4[%c55] : memref<98xf32, #tpu.memory_space<smem>>
    %101 = vector.broadcast %99 : f32 to vector<1x2x1x1xf32>
    %102 = vector.broadcast %100 : f32 to vector<1x2x1x1xf32>
    %103 = arith.select %43, %101, %102 : vector<1x2x1x1xi1>, vector<1x2x1x1xf32>
    %104 = vector.extract_strided_slice %40 {offsets = [0, 0, 0, 0], sizes = [2, 2, 16, 16], strides = [1, 1, 1, 1]} : vector<2x2x22x16xf32> to vector<2x2x16x16xf32>
    %105 = vector.broadcast %103 : vector<1x2x1x1xf32> to vector<2x2x16x16xf32>
    %106 = arith.mulf %105, %104 : vector<2x2x16x16xf32>
    %107 = arith.addf %98, %106 : vector<2x2x16x16xf32>
    %c7 = arith.constant 7 : index
    %108 = memref.load %arg4[%c7] : memref<98xf32, #tpu.memory_space<smem>>
    %c56 = arith.constant 56 : index
    %109 = memref.load %arg4[%c56] : memref<98xf32, #tpu.memory_space<smem>>
    %110 = vector.broadcast %108 : f32 to vector<1x2x1x1xf32>
    %111 = vector.broadcast %109 : f32 to vector<1x2x1x1xf32>
    %112 = arith.select %43, %110, %111 : vector<1x2x1x1xi1>, vector<1x2x1x1xf32>
    %113 = vector.extract_strided_slice %34 {offsets = [0, 0, 1, 0], sizes = [2, 2, 16, 16], strides = [1, 1, 1, 1]} : vector<2x2x22x16xf32> to vector<2x2x16x16xf32>
    %114 = vector.broadcast %112 : vector<1x2x1x1xf32> to vector<2x2x16x16xf32>
    %115 = arith.mulf %114, %113 : vector<2x2x16x16xf32>
    %116 = arith.addf %107, %115 : vector<2x2x16x16xf32>
    %c8 = arith.constant 8 : index
    %117 = memref.load %arg4[%c8] : memref<98xf32, #tpu.memory_space<smem>>
    %c57 = arith.constant 57 : index
    %118 = memref.load %arg4[%c57] : memref<98xf32, #tpu.memory_space<smem>>
    %119 = vector.broadcast %117 : f32 to vector<1x2x1x1xf32>
    %120 = vector.broadcast %118 : f32 to vector<1x2x1x1xf32>
    %121 = arith.select %43, %119, %120 : vector<1x2x1x1xi1>, vector<1x2x1x1xf32>
    %122 = vector.extract_strided_slice %35 {offsets = [0, 0, 1, 0], sizes = [2, 2, 16, 16], strides = [1, 1, 1, 1]} : vector<2x2x22x16xf32> to vector<2x2x16x16xf32>
    %123 = vector.broadcast %121 : vector<1x2x1x1xf32> to vector<2x2x16x16xf32>
    %124 = arith.mulf %123, %122 : vector<2x2x16x16xf32>
    %125 = arith.addf %116, %124 : vector<2x2x16x16xf32>
    %c9 = arith.constant 9 : index
    %126 = memref.load %arg4[%c9] : memref<98xf32, #tpu.memory_space<smem>>
    %c58 = arith.constant 58 : index
    %127 = memref.load %arg4[%c58] : memref<98xf32, #tpu.memory_space<smem>>
    %128 = vector.broadcast %126 : f32 to vector<1x2x1x1xf32>
    %129 = vector.broadcast %127 : f32 to vector<1x2x1x1xf32>
    %130 = arith.select %43, %128, %129 : vector<1x2x1x1xi1>, vector<1x2x1x1xf32>
    %131 = vector.extract_strided_slice %36 {offsets = [0, 0, 1, 0], sizes = [2, 2, 16, 16], strides = [1, 1, 1, 1]} : vector<2x2x22x16xf32> to vector<2x2x16x16xf32>
    %132 = vector.broadcast %130 : vector<1x2x1x1xf32> to vector<2x2x16x16xf32>
    %133 = arith.mulf %132, %131 : vector<2x2x16x16xf32>
    %134 = arith.addf %125, %133 : vector<2x2x16x16xf32>
    %c10 = arith.constant 10 : index
    %135 = memref.load %arg4[%c10] : memref<98xf32, #tpu.memory_space<smem>>
    %c59 = arith.constant 59 : index
    %136 = memref.load %arg4[%c59] : memref<98xf32, #tpu.memory_space<smem>>
    %137 = vector.broadcast %135 : f32 to vector<1x2x1x1xf32>
    %138 = vector.broadcast %136 : f32 to vector<1x2x1x1xf32>
    %139 = arith.select %43, %137, %138 : vector<1x2x1x1xi1>, vector<1x2x1x1xf32>
    %140 = vector.extract_strided_slice %37 {offsets = [0, 0, 1, 0], sizes = [2, 2, 16, 16], strides = [1, 1, 1, 1]} : vector<2x2x22x16xf32> to vector<2x2x16x16xf32>
    %141 = vector.broadcast %139 : vector<1x2x1x1xf32> to vector<2x2x16x16xf32>
    %142 = arith.mulf %141, %140 : vector<2x2x16x16xf32>
    %143 = arith.addf %134, %142 : vector<2x2x16x16xf32>
    %c11 = arith.constant 11 : index
    %144 = memref.load %arg4[%c11] : memref<98xf32, #tpu.memory_space<smem>>
    %c60 = arith.constant 60 : index
    %145 = memref.load %arg4[%c60] : memref<98xf32, #tpu.memory_space<smem>>
    %146 = vector.broadcast %144 : f32 to vector<1x2x1x1xf32>
    %147 = vector.broadcast %145 : f32 to vector<1x2x1x1xf32>
    %148 = arith.select %43, %146, %147 : vector<1x2x1x1xi1>, vector<1x2x1x1xf32>
    %149 = vector.extract_strided_slice %38 {offsets = [0, 0, 1, 0], sizes = [2, 2, 16, 16], strides = [1, 1, 1, 1]} : vector<2x2x22x16xf32> to vector<2x2x16x16xf32>
    %150 = vector.broadcast %148 : vector<1x2x1x1xf32> to vector<2x2x16x16xf32>
    %151 = arith.mulf %150, %149 : vector<2x2x16x16xf32>
    %152 = arith.addf %143, %151 : vector<2x2x16x16xf32>
    %c12 = arith.constant 12 : index
    %153 = memref.load %arg4[%c12] : memref<98xf32, #tpu.memory_space<smem>>
    %c61 = arith.constant 61 : index
    %154 = memref.load %arg4[%c61] : memref<98xf32, #tpu.memory_space<smem>>
    %155 = vector.broadcast %153 : f32 to vector<1x2x1x1xf32>
    %156 = vector.broadcast %154 : f32 to vector<1x2x1x1xf32>
    %157 = arith.select %43, %155, %156 : vector<1x2x1x1xi1>, vector<1x2x1x1xf32>
    %158 = vector.extract_strided_slice %39 {offsets = [0, 0, 1, 0], sizes = [2, 2, 16, 16], strides = [1, 1, 1, 1]} : vector<2x2x22x16xf32> to vector<2x2x16x16xf32>
    %159 = vector.broadcast %157 : vector<1x2x1x1xf32> to vector<2x2x16x16xf32>
    %160 = arith.mulf %159, %158 : vector<2x2x16x16xf32>
    %161 = arith.addf %152, %160 : vector<2x2x16x16xf32>
    %c13 = arith.constant 13 : index
    %162 = memref.load %arg4[%c13] : memref<98xf32, #tpu.memory_space<smem>>
    %c62 = arith.constant 62 : index
    %163 = memref.load %arg4[%c62] : memref<98xf32, #tpu.memory_space<smem>>
    %164 = vector.broadcast %162 : f32 to vector<1x2x1x1xf32>
    %165 = vector.broadcast %163 : f32 to vector<1x2x1x1xf32>
    %166 = arith.select %43, %164, %165 : vector<1x2x1x1xi1>, vector<1x2x1x1xf32>
    %167 = vector.extract_strided_slice %40 {offsets = [0, 0, 1, 0], sizes = [2, 2, 16, 16], strides = [1, 1, 1, 1]} : vector<2x2x22x16xf32> to vector<2x2x16x16xf32>
    %168 = vector.broadcast %166 : vector<1x2x1x1xf32> to vector<2x2x16x16xf32>
    %169 = arith.mulf %168, %167 : vector<2x2x16x16xf32>
    %170 = arith.addf %161, %169 : vector<2x2x16x16xf32>
    %c14 = arith.constant 14 : index
    %171 = memref.load %arg4[%c14] : memref<98xf32, #tpu.memory_space<smem>>
    %c63 = arith.constant 63 : index
    %172 = memref.load %arg4[%c63] : memref<98xf32, #tpu.memory_space<smem>>
    %173 = vector.broadcast %171 : f32 to vector<1x2x1x1xf32>
    %174 = vector.broadcast %172 : f32 to vector<1x2x1x1xf32>
    %175 = arith.select %43, %173, %174 : vector<1x2x1x1xi1>, vector<1x2x1x1xf32>
    %176 = vector.extract_strided_slice %34 {offsets = [0, 0, 2, 0], sizes = [2, 2, 16, 16], strides = [1, 1, 1, 1]} : vector<2x2x22x16xf32> to vector<2x2x16x16xf32>
    %177 = vector.broadcast %175 : vector<1x2x1x1xf32> to vector<2x2x16x16xf32>
    %178 = arith.mulf %177, %176 : vector<2x2x16x16xf32>
    %179 = arith.addf %170, %178 : vector<2x2x16x16xf32>
    %c15 = arith.constant 15 : index
    %180 = memref.load %arg4[%c15] : memref<98xf32, #tpu.memory_space<smem>>
    %c64 = arith.constant 64 : index
    %181 = memref.load %arg4[%c64] : memref<98xf32, #tpu.memory_space<smem>>
    %182 = vector.broadcast %180 : f32 to vector<1x2x1x1xf32>
    %183 = vector.broadcast %181 : f32 to vector<1x2x1x1xf32>
    %184 = arith.select %43, %182, %183 : vector<1x2x1x1xi1>, vector<1x2x1x1xf32>
    %185 = vector.extract_strided_slice %35 {offsets = [0, 0, 2, 0], sizes = [2, 2, 16, 16], strides = [1, 1, 1, 1]} : vector<2x2x22x16xf32> to vector<2x2x16x16xf32>
    %186 = vector.broadcast %184 : vector<1x2x1x1xf32> to vector<2x2x16x16xf32>
    %187 = arith.mulf %186, %185 : vector<2x2x16x16xf32>
    %188 = arith.addf %179, %187 : vector<2x2x16x16xf32>
    %c16 = arith.constant 16 : index
    %189 = memref.load %arg4[%c16] : memref<98xf32, #tpu.memory_space<smem>>
    %c65 = arith.constant 65 : index
    %190 = memref.load %arg4[%c65] : memref<98xf32, #tpu.memory_space<smem>>
    %191 = vector.broadcast %189 : f32 to vector<1x2x1x1xf32>
    %192 = vector.broadcast %190 : f32 to vector<1x2x1x1xf32>
    %193 = arith.select %43, %191, %192 : vector<1x2x1x1xi1>, vector<1x2x1x1xf32>
    %194 = vector.extract_strided_slice %36 {offsets = [0, 0, 2, 0], sizes = [2, 2, 16, 16], strides = [1, 1, 1, 1]} : vector<2x2x22x16xf32> to vector<2x2x16x16xf32>
    %195 = vector.broadcast %193 : vector<1x2x1x1xf32> to vector<2x2x16x16xf32>
    %196 = arith.mulf %195, %194 : vector<2x2x16x16xf32>
    %197 = arith.addf %188, %196 : vector<2x2x16x16xf32>
    %c17 = arith.constant 17 : index
    %198 = memref.load %arg4[%c17] : memref<98xf32, #tpu.memory_space<smem>>
    %c66 = arith.constant 66 : index
    %199 = memref.load %arg4[%c66] : memref<98xf32, #tpu.memory_space<smem>>
    %200 = vector.broadcast %198 : f32 to vector<1x2x1x1xf32>
    %201 = vector.broadcast %199 : f32 to vector<1x2x1x1xf32>
    %202 = arith.select %43, %200, %201 : vector<1x2x1x1xi1>, vector<1x2x1x1xf32>
    %203 = vector.extract_strided_slice %37 {offsets = [0, 0, 2, 0], sizes = [2, 2, 16, 16], strides = [1, 1, 1, 1]} : vector<2x2x22x16xf32> to vector<2x2x16x16xf32>
    %204 = vector.broadcast %202 : vector<1x2x1x1xf32> to vector<2x2x16x16xf32>
    %205 = arith.mulf %204, %203 : vector<2x2x16x16xf32>
    %206 = arith.addf %197, %205 : vector<2x2x16x16xf32>
    %c18 = arith.constant 18 : index
    %207 = memref.load %arg4[%c18] : memref<98xf32, #tpu.memory_space<smem>>
    %c67 = arith.constant 67 : index
    %208 = memref.load %arg4[%c67] : memref<98xf32, #tpu.memory_space<smem>>
    %209 = vector.broadcast %207 : f32 to vector<1x2x1x1xf32>
    %210 = vector.broadcast %208 : f32 to vector<1x2x1x1xf32>
    %211 = arith.select %43, %209, %210 : vector<1x2x1x1xi1>, vector<1x2x1x1xf32>
    %212 = vector.extract_strided_slice %38 {offsets = [0, 0, 2, 0], sizes = [2, 2, 16, 16], strides = [1, 1, 1, 1]} : vector<2x2x22x16xf32> to vector<2x2x16x16xf32>
    %213 = vector.broadcast %211 : vector<1x2x1x1xf32> to vector<2x2x16x16xf32>
    %214 = arith.mulf %213, %212 : vector<2x2x16x16xf32>
    %215 = arith.addf %206, %214 : vector<2x2x16x16xf32>
    %c19 = arith.constant 19 : index
    %216 = memref.load %arg4[%c19] : memref<98xf32, #tpu.memory_space<smem>>
    %c68 = arith.constant 68 : index
    %217 = memref.load %arg4[%c68] : memref<98xf32, #tpu.memory_space<smem>>
    %218 = vector.broadcast %216 : f32 to vector<1x2x1x1xf32>
    %219 = vector.broadcast %217 : f32 to vector<1x2x1x1xf32>
    %220 = arith.select %43, %218, %219 : vector<1x2x1x1xi1>, vector<1x2x1x1xf32>
    %221 = vector.extract_strided_slice %39 {offsets = [0, 0, 2, 0], sizes = [2, 2, 16, 16], strides = [1, 1, 1, 1]} : vector<2x2x22x16xf32> to vector<2x2x16x16xf32>
    %222 = vector.broadcast %220 : vector<1x2x1x1xf32> to vector<2x2x16x16xf32>
    %223 = arith.mulf %222, %221 : vector<2x2x16x16xf32>
    %224 = arith.addf %215, %223 : vector<2x2x16x16xf32>
    %c20 = arith.constant 20 : index
    %225 = memref.load %arg4[%c20] : memref<98xf32, #tpu.memory_space<smem>>
    %c69 = arith.constant 69 : index
    %226 = memref.load %arg4[%c69] : memref<98xf32, #tpu.memory_space<smem>>
    %227 = vector.broadcast %225 : f32 to vector<1x2x1x1xf32>
    %228 = vector.broadcast %226 : f32 to vector<1x2x1x1xf32>
    %229 = arith.select %43, %227, %228 : vector<1x2x1x1xi1>, vector<1x2x1x1xf32>
    %230 = vector.extract_strided_slice %40 {offsets = [0, 0, 2, 0], sizes = [2, 2, 16, 16], strides = [1, 1, 1, 1]} : vector<2x2x22x16xf32> to vector<2x2x16x16xf32>
    %231 = vector.broadcast %229 : vector<1x2x1x1xf32> to vector<2x2x16x16xf32>
    %232 = arith.mulf %231, %230 : vector<2x2x16x16xf32>
    %233 = arith.addf %224, %232 : vector<2x2x16x16xf32>
    %c21 = arith.constant 21 : index
    %234 = memref.load %arg4[%c21] : memref<98xf32, #tpu.memory_space<smem>>
    %c70 = arith.constant 70 : index
    %235 = memref.load %arg4[%c70] : memref<98xf32, #tpu.memory_space<smem>>
    %236 = vector.broadcast %234 : f32 to vector<1x2x1x1xf32>
    %237 = vector.broadcast %235 : f32 to vector<1x2x1x1xf32>
    %238 = arith.select %43, %236, %237 : vector<1x2x1x1xi1>, vector<1x2x1x1xf32>
    %239 = vector.extract_strided_slice %34 {offsets = [0, 0, 3, 0], sizes = [2, 2, 16, 16], strides = [1, 1, 1, 1]} : vector<2x2x22x16xf32> to vector<2x2x16x16xf32>
    %240 = vector.broadcast %238 : vector<1x2x1x1xf32> to vector<2x2x16x16xf32>
    %241 = arith.mulf %240, %239 : vector<2x2x16x16xf32>
    %242 = arith.addf %233, %241 : vector<2x2x16x16xf32>
    %c22 = arith.constant 22 : index
    %243 = memref.load %arg4[%c22] : memref<98xf32, #tpu.memory_space<smem>>
    %c71 = arith.constant 71 : index
    %244 = memref.load %arg4[%c71] : memref<98xf32, #tpu.memory_space<smem>>
    %245 = vector.broadcast %243 : f32 to vector<1x2x1x1xf32>
    %246 = vector.broadcast %244 : f32 to vector<1x2x1x1xf32>
    %247 = arith.select %43, %245, %246 : vector<1x2x1x1xi1>, vector<1x2x1x1xf32>
    %248 = vector.extract_strided_slice %35 {offsets = [0, 0, 3, 0], sizes = [2, 2, 16, 16], strides = [1, 1, 1, 1]} : vector<2x2x22x16xf32> to vector<2x2x16x16xf32>
    %249 = vector.broadcast %247 : vector<1x2x1x1xf32> to vector<2x2x16x16xf32>
    %250 = arith.mulf %249, %248 : vector<2x2x16x16xf32>
    %251 = arith.addf %242, %250 : vector<2x2x16x16xf32>
    %c23 = arith.constant 23 : index
    %252 = memref.load %arg4[%c23] : memref<98xf32, #tpu.memory_space<smem>>
    %c72 = arith.constant 72 : index
    %253 = memref.load %arg4[%c72] : memref<98xf32, #tpu.memory_space<smem>>
    %254 = vector.broadcast %252 : f32 to vector<1x2x1x1xf32>
    %255 = vector.broadcast %253 : f32 to vector<1x2x1x1xf32>
    %256 = arith.select %43, %254, %255 : vector<1x2x1x1xi1>, vector<1x2x1x1xf32>
    %257 = vector.extract_strided_slice %36 {offsets = [0, 0, 3, 0], sizes = [2, 2, 16, 16], strides = [1, 1, 1, 1]} : vector<2x2x22x16xf32> to vector<2x2x16x16xf32>
    %258 = vector.broadcast %256 : vector<1x2x1x1xf32> to vector<2x2x16x16xf32>
    %259 = arith.mulf %258, %257 : vector<2x2x16x16xf32>
    %260 = arith.addf %251, %259 : vector<2x2x16x16xf32>
    %c24 = arith.constant 24 : index
    %261 = memref.load %arg4[%c24] : memref<98xf32, #tpu.memory_space<smem>>
    %c73 = arith.constant 73 : index
    %262 = memref.load %arg4[%c73] : memref<98xf32, #tpu.memory_space<smem>>
    %263 = vector.broadcast %261 : f32 to vector<1x2x1x1xf32>
    %264 = vector.broadcast %262 : f32 to vector<1x2x1x1xf32>
    %265 = arith.select %43, %263, %264 : vector<1x2x1x1xi1>, vector<1x2x1x1xf32>
    %266 = vector.extract_strided_slice %37 {offsets = [0, 0, 3, 0], sizes = [2, 2, 16, 16], strides = [1, 1, 1, 1]} : vector<2x2x22x16xf32> to vector<2x2x16x16xf32>
    %267 = vector.broadcast %265 : vector<1x2x1x1xf32> to vector<2x2x16x16xf32>
    %268 = arith.mulf %267, %266 : vector<2x2x16x16xf32>
    %269 = arith.addf %260, %268 : vector<2x2x16x16xf32>
    %c25 = arith.constant 25 : index
    %270 = memref.load %arg4[%c25] : memref<98xf32, #tpu.memory_space<smem>>
    %c74 = arith.constant 74 : index
    %271 = memref.load %arg4[%c74] : memref<98xf32, #tpu.memory_space<smem>>
    %272 = vector.broadcast %270 : f32 to vector<1x2x1x1xf32>
    %273 = vector.broadcast %271 : f32 to vector<1x2x1x1xf32>
    %274 = arith.select %43, %272, %273 : vector<1x2x1x1xi1>, vector<1x2x1x1xf32>
    %275 = vector.extract_strided_slice %38 {offsets = [0, 0, 3, 0], sizes = [2, 2, 16, 16], strides = [1, 1, 1, 1]} : vector<2x2x22x16xf32> to vector<2x2x16x16xf32>
    %276 = vector.broadcast %274 : vector<1x2x1x1xf32> to vector<2x2x16x16xf32>
    %277 = arith.mulf %276, %275 : vector<2x2x16x16xf32>
    %278 = arith.addf %269, %277 : vector<2x2x16x16xf32>
    %c26 = arith.constant 26 : index
    %279 = memref.load %arg4[%c26] : memref<98xf32, #tpu.memory_space<smem>>
    %c75 = arith.constant 75 : index
    %280 = memref.load %arg4[%c75] : memref<98xf32, #tpu.memory_space<smem>>
    %281 = vector.broadcast %279 : f32 to vector<1x2x1x1xf32>
    %282 = vector.broadcast %280 : f32 to vector<1x2x1x1xf32>
    %283 = arith.select %43, %281, %282 : vector<1x2x1x1xi1>, vector<1x2x1x1xf32>
    %284 = vector.extract_strided_slice %39 {offsets = [0, 0, 3, 0], sizes = [2, 2, 16, 16], strides = [1, 1, 1, 1]} : vector<2x2x22x16xf32> to vector<2x2x16x16xf32>
    %285 = vector.broadcast %283 : vector<1x2x1x1xf32> to vector<2x2x16x16xf32>
    %286 = arith.mulf %285, %284 : vector<2x2x16x16xf32>
    %287 = arith.addf %278, %286 : vector<2x2x16x16xf32>
    %c27 = arith.constant 27 : index
    %288 = memref.load %arg4[%c27] : memref<98xf32, #tpu.memory_space<smem>>
    %c76 = arith.constant 76 : index
    %289 = memref.load %arg4[%c76] : memref<98xf32, #tpu.memory_space<smem>>
    %290 = vector.broadcast %288 : f32 to vector<1x2x1x1xf32>
    %291 = vector.broadcast %289 : f32 to vector<1x2x1x1xf32>
    %292 = arith.select %43, %290, %291 : vector<1x2x1x1xi1>, vector<1x2x1x1xf32>
    %293 = vector.extract_strided_slice %40 {offsets = [0, 0, 3, 0], sizes = [2, 2, 16, 16], strides = [1, 1, 1, 1]} : vector<2x2x22x16xf32> to vector<2x2x16x16xf32>
    %294 = vector.broadcast %292 : vector<1x2x1x1xf32> to vector<2x2x16x16xf32>
    %295 = arith.mulf %294, %293 : vector<2x2x16x16xf32>
    %296 = arith.addf %287, %295 : vector<2x2x16x16xf32>
    %c28 = arith.constant 28 : index
    %297 = memref.load %arg4[%c28] : memref<98xf32, #tpu.memory_space<smem>>
    %c77 = arith.constant 77 : index
    %298 = memref.load %arg4[%c77] : memref<98xf32, #tpu.memory_space<smem>>
    %299 = vector.broadcast %297 : f32 to vector<1x2x1x1xf32>
    %300 = vector.broadcast %298 : f32 to vector<1x2x1x1xf32>
    %301 = arith.select %43, %299, %300 : vector<1x2x1x1xi1>, vector<1x2x1x1xf32>
    %302 = vector.extract_strided_slice %34 {offsets = [0, 0, 4, 0], sizes = [2, 2, 16, 16], strides = [1, 1, 1, 1]} : vector<2x2x22x16xf32> to vector<2x2x16x16xf32>
    %303 = vector.broadcast %301 : vector<1x2x1x1xf32> to vector<2x2x16x16xf32>
    %304 = arith.mulf %303, %302 : vector<2x2x16x16xf32>
    %305 = arith.addf %296, %304 : vector<2x2x16x16xf32>
    %c29 = arith.constant 29 : index
    %306 = memref.load %arg4[%c29] : memref<98xf32, #tpu.memory_space<smem>>
    %c78 = arith.constant 78 : index
    %307 = memref.load %arg4[%c78] : memref<98xf32, #tpu.memory_space<smem>>
    %308 = vector.broadcast %306 : f32 to vector<1x2x1x1xf32>
    %309 = vector.broadcast %307 : f32 to vector<1x2x1x1xf32>
    %310 = arith.select %43, %308, %309 : vector<1x2x1x1xi1>, vector<1x2x1x1xf32>
    %311 = vector.extract_strided_slice %35 {offsets = [0, 0, 4, 0], sizes = [2, 2, 16, 16], strides = [1, 1, 1, 1]} : vector<2x2x22x16xf32> to vector<2x2x16x16xf32>
    %312 = vector.broadcast %310 : vector<1x2x1x1xf32> to vector<2x2x16x16xf32>
    %313 = arith.mulf %312, %311 : vector<2x2x16x16xf32>
    %314 = arith.addf %305, %313 : vector<2x2x16x16xf32>
    %c30 = arith.constant 30 : index
    %315 = memref.load %arg4[%c30] : memref<98xf32, #tpu.memory_space<smem>>
    %c79 = arith.constant 79 : index
    %316 = memref.load %arg4[%c79] : memref<98xf32, #tpu.memory_space<smem>>
    %317 = vector.broadcast %315 : f32 to vector<1x2x1x1xf32>
    %318 = vector.broadcast %316 : f32 to vector<1x2x1x1xf32>
    %319 = arith.select %43, %317, %318 : vector<1x2x1x1xi1>, vector<1x2x1x1xf32>
    %320 = vector.extract_strided_slice %36 {offsets = [0, 0, 4, 0], sizes = [2, 2, 16, 16], strides = [1, 1, 1, 1]} : vector<2x2x22x16xf32> to vector<2x2x16x16xf32>
    %321 = vector.broadcast %319 : vector<1x2x1x1xf32> to vector<2x2x16x16xf32>
    %322 = arith.mulf %321, %320 : vector<2x2x16x16xf32>
    %323 = arith.addf %314, %322 : vector<2x2x16x16xf32>
    %c31 = arith.constant 31 : index
    %324 = memref.load %arg4[%c31] : memref<98xf32, #tpu.memory_space<smem>>
    %c80 = arith.constant 80 : index
    %325 = memref.load %arg4[%c80] : memref<98xf32, #tpu.memory_space<smem>>
    %326 = vector.broadcast %324 : f32 to vector<1x2x1x1xf32>
    %327 = vector.broadcast %325 : f32 to vector<1x2x1x1xf32>
    %328 = arith.select %43, %326, %327 : vector<1x2x1x1xi1>, vector<1x2x1x1xf32>
    %329 = vector.extract_strided_slice %37 {offsets = [0, 0, 4, 0], sizes = [2, 2, 16, 16], strides = [1, 1, 1, 1]} : vector<2x2x22x16xf32> to vector<2x2x16x16xf32>
    %330 = vector.broadcast %328 : vector<1x2x1x1xf32> to vector<2x2x16x16xf32>
    %331 = arith.mulf %330, %329 : vector<2x2x16x16xf32>
    %332 = arith.addf %323, %331 : vector<2x2x16x16xf32>
    %c32 = arith.constant 32 : index
    %333 = memref.load %arg4[%c32] : memref<98xf32, #tpu.memory_space<smem>>
    %c81 = arith.constant 81 : index
    %334 = memref.load %arg4[%c81] : memref<98xf32, #tpu.memory_space<smem>>
    %335 = vector.broadcast %333 : f32 to vector<1x2x1x1xf32>
    %336 = vector.broadcast %334 : f32 to vector<1x2x1x1xf32>
    %337 = arith.select %43, %335, %336 : vector<1x2x1x1xi1>, vector<1x2x1x1xf32>
    %338 = vector.extract_strided_slice %38 {offsets = [0, 0, 4, 0], sizes = [2, 2, 16, 16], strides = [1, 1, 1, 1]} : vector<2x2x22x16xf32> to vector<2x2x16x16xf32>
    %339 = vector.broadcast %337 : vector<1x2x1x1xf32> to vector<2x2x16x16xf32>
    %340 = arith.mulf %339, %338 : vector<2x2x16x16xf32>
    %341 = arith.addf %332, %340 : vector<2x2x16x16xf32>
    %c33 = arith.constant 33 : index
    %342 = memref.load %arg4[%c33] : memref<98xf32, #tpu.memory_space<smem>>
    %c82 = arith.constant 82 : index
    %343 = memref.load %arg4[%c82] : memref<98xf32, #tpu.memory_space<smem>>
    %344 = vector.broadcast %342 : f32 to vector<1x2x1x1xf32>
    %345 = vector.broadcast %343 : f32 to vector<1x2x1x1xf32>
    %346 = arith.select %43, %344, %345 : vector<1x2x1x1xi1>, vector<1x2x1x1xf32>
    %347 = vector.extract_strided_slice %39 {offsets = [0, 0, 4, 0], sizes = [2, 2, 16, 16], strides = [1, 1, 1, 1]} : vector<2x2x22x16xf32> to vector<2x2x16x16xf32>
    %348 = vector.broadcast %346 : vector<1x2x1x1xf32> to vector<2x2x16x16xf32>
    %349 = arith.mulf %348, %347 : vector<2x2x16x16xf32>
    %350 = arith.addf %341, %349 : vector<2x2x16x16xf32>
    %c34 = arith.constant 34 : index
    %351 = memref.load %arg4[%c34] : memref<98xf32, #tpu.memory_space<smem>>
    %c83 = arith.constant 83 : index
    %352 = memref.load %arg4[%c83] : memref<98xf32, #tpu.memory_space<smem>>
    %353 = vector.broadcast %351 : f32 to vector<1x2x1x1xf32>
    %354 = vector.broadcast %352 : f32 to vector<1x2x1x1xf32>
    %355 = arith.select %43, %353, %354 : vector<1x2x1x1xi1>, vector<1x2x1x1xf32>
    %356 = vector.extract_strided_slice %40 {offsets = [0, 0, 4, 0], sizes = [2, 2, 16, 16], strides = [1, 1, 1, 1]} : vector<2x2x22x16xf32> to vector<2x2x16x16xf32>
    %357 = vector.broadcast %355 : vector<1x2x1x1xf32> to vector<2x2x16x16xf32>
    %358 = arith.mulf %357, %356 : vector<2x2x16x16xf32>
    %359 = arith.addf %350, %358 : vector<2x2x16x16xf32>
    %c35 = arith.constant 35 : index
    %360 = memref.load %arg4[%c35] : memref<98xf32, #tpu.memory_space<smem>>
    %c84 = arith.constant 84 : index
    %361 = memref.load %arg4[%c84] : memref<98xf32, #tpu.memory_space<smem>>
    %362 = vector.broadcast %360 : f32 to vector<1x2x1x1xf32>
    %363 = vector.broadcast %361 : f32 to vector<1x2x1x1xf32>
    %364 = arith.select %43, %362, %363 : vector<1x2x1x1xi1>, vector<1x2x1x1xf32>
    %365 = vector.extract_strided_slice %34 {offsets = [0, 0, 5, 0], sizes = [2, 2, 16, 16], strides = [1, 1, 1, 1]} : vector<2x2x22x16xf32> to vector<2x2x16x16xf32>
    %366 = vector.broadcast %364 : vector<1x2x1x1xf32> to vector<2x2x16x16xf32>
    %367 = arith.mulf %366, %365 : vector<2x2x16x16xf32>
    %368 = arith.addf %359, %367 : vector<2x2x16x16xf32>
    %c36 = arith.constant 36 : index
    %369 = memref.load %arg4[%c36] : memref<98xf32, #tpu.memory_space<smem>>
    %c85 = arith.constant 85 : index
    %370 = memref.load %arg4[%c85] : memref<98xf32, #tpu.memory_space<smem>>
    %371 = vector.broadcast %369 : f32 to vector<1x2x1x1xf32>
    %372 = vector.broadcast %370 : f32 to vector<1x2x1x1xf32>
    %373 = arith.select %43, %371, %372 : vector<1x2x1x1xi1>, vector<1x2x1x1xf32>
    %374 = vector.extract_strided_slice %35 {offsets = [0, 0, 5, 0], sizes = [2, 2, 16, 16], strides = [1, 1, 1, 1]} : vector<2x2x22x16xf32> to vector<2x2x16x16xf32>
    %375 = vector.broadcast %373 : vector<1x2x1x1xf32> to vector<2x2x16x16xf32>
    %376 = arith.mulf %375, %374 : vector<2x2x16x16xf32>
    %377 = arith.addf %368, %376 : vector<2x2x16x16xf32>
    %c37 = arith.constant 37 : index
    %378 = memref.load %arg4[%c37] : memref<98xf32, #tpu.memory_space<smem>>
    %c86 = arith.constant 86 : index
    %379 = memref.load %arg4[%c86] : memref<98xf32, #tpu.memory_space<smem>>
    %380 = vector.broadcast %378 : f32 to vector<1x2x1x1xf32>
    %381 = vector.broadcast %379 : f32 to vector<1x2x1x1xf32>
    %382 = arith.select %43, %380, %381 : vector<1x2x1x1xi1>, vector<1x2x1x1xf32>
    %383 = vector.extract_strided_slice %36 {offsets = [0, 0, 5, 0], sizes = [2, 2, 16, 16], strides = [1, 1, 1, 1]} : vector<2x2x22x16xf32> to vector<2x2x16x16xf32>
    %384 = vector.broadcast %382 : vector<1x2x1x1xf32> to vector<2x2x16x16xf32>
    %385 = arith.mulf %384, %383 : vector<2x2x16x16xf32>
    %386 = arith.addf %377, %385 : vector<2x2x16x16xf32>
    %c38 = arith.constant 38 : index
    %387 = memref.load %arg4[%c38] : memref<98xf32, #tpu.memory_space<smem>>
    %c87 = arith.constant 87 : index
    %388 = memref.load %arg4[%c87] : memref<98xf32, #tpu.memory_space<smem>>
    %389 = vector.broadcast %387 : f32 to vector<1x2x1x1xf32>
    %390 = vector.broadcast %388 : f32 to vector<1x2x1x1xf32>
    %391 = arith.select %43, %389, %390 : vector<1x2x1x1xi1>, vector<1x2x1x1xf32>
    %392 = vector.extract_strided_slice %37 {offsets = [0, 0, 5, 0], sizes = [2, 2, 16, 16], strides = [1, 1, 1, 1]} : vector<2x2x22x16xf32> to vector<2x2x16x16xf32>
    %393 = vector.broadcast %391 : vector<1x2x1x1xf32> to vector<2x2x16x16xf32>
    %394 = arith.mulf %393, %392 : vector<2x2x16x16xf32>
    %395 = arith.addf %386, %394 : vector<2x2x16x16xf32>
    %c39 = arith.constant 39 : index
    %396 = memref.load %arg4[%c39] : memref<98xf32, #tpu.memory_space<smem>>
    %c88 = arith.constant 88 : index
    %397 = memref.load %arg4[%c88] : memref<98xf32, #tpu.memory_space<smem>>
    %398 = vector.broadcast %396 : f32 to vector<1x2x1x1xf32>
    %399 = vector.broadcast %397 : f32 to vector<1x2x1x1xf32>
    %400 = arith.select %43, %398, %399 : vector<1x2x1x1xi1>, vector<1x2x1x1xf32>
    %401 = vector.extract_strided_slice %38 {offsets = [0, 0, 5, 0], sizes = [2, 2, 16, 16], strides = [1, 1, 1, 1]} : vector<2x2x22x16xf32> to vector<2x2x16x16xf32>
    %402 = vector.broadcast %400 : vector<1x2x1x1xf32> to vector<2x2x16x16xf32>
    %403 = arith.mulf %402, %401 : vector<2x2x16x16xf32>
    %404 = arith.addf %395, %403 : vector<2x2x16x16xf32>
    %c40 = arith.constant 40 : index
    %405 = memref.load %arg4[%c40] : memref<98xf32, #tpu.memory_space<smem>>
    %c89 = arith.constant 89 : index
    %406 = memref.load %arg4[%c89] : memref<98xf32, #tpu.memory_space<smem>>
    %407 = vector.broadcast %405 : f32 to vector<1x2x1x1xf32>
    %408 = vector.broadcast %406 : f32 to vector<1x2x1x1xf32>
    %409 = arith.select %43, %407, %408 : vector<1x2x1x1xi1>, vector<1x2x1x1xf32>
    %410 = vector.extract_strided_slice %39 {offsets = [0, 0, 5, 0], sizes = [2, 2, 16, 16], strides = [1, 1, 1, 1]} : vector<2x2x22x16xf32> to vector<2x2x16x16xf32>
    %411 = vector.broadcast %409 : vector<1x2x1x1xf32> to vector<2x2x16x16xf32>
    %412 = arith.mulf %411, %410 : vector<2x2x16x16xf32>
    %413 = arith.addf %404, %412 : vector<2x2x16x16xf32>
    %c41 = arith.constant 41 : index
    %414 = memref.load %arg4[%c41] : memref<98xf32, #tpu.memory_space<smem>>
    %c90 = arith.constant 90 : index
    %415 = memref.load %arg4[%c90] : memref<98xf32, #tpu.memory_space<smem>>
    %416 = vector.broadcast %414 : f32 to vector<1x2x1x1xf32>
    %417 = vector.broadcast %415 : f32 to vector<1x2x1x1xf32>
    %418 = arith.select %43, %416, %417 : vector<1x2x1x1xi1>, vector<1x2x1x1xf32>
    %419 = vector.extract_strided_slice %40 {offsets = [0, 0, 5, 0], sizes = [2, 2, 16, 16], strides = [1, 1, 1, 1]} : vector<2x2x22x16xf32> to vector<2x2x16x16xf32>
    %420 = vector.broadcast %418 : vector<1x2x1x1xf32> to vector<2x2x16x16xf32>
    %421 = arith.mulf %420, %419 : vector<2x2x16x16xf32>
    %422 = arith.addf %413, %421 : vector<2x2x16x16xf32>
    %c42 = arith.constant 42 : index
    %423 = memref.load %arg4[%c42] : memref<98xf32, #tpu.memory_space<smem>>
    %c91 = arith.constant 91 : index
    %424 = memref.load %arg4[%c91] : memref<98xf32, #tpu.memory_space<smem>>
    %425 = vector.broadcast %423 : f32 to vector<1x2x1x1xf32>
    %426 = vector.broadcast %424 : f32 to vector<1x2x1x1xf32>
    %427 = arith.select %43, %425, %426 : vector<1x2x1x1xi1>, vector<1x2x1x1xf32>
    %428 = vector.extract_strided_slice %34 {offsets = [0, 0, 6, 0], sizes = [2, 2, 16, 16], strides = [1, 1, 1, 1]} : vector<2x2x22x16xf32> to vector<2x2x16x16xf32>
    %429 = vector.broadcast %427 : vector<1x2x1x1xf32> to vector<2x2x16x16xf32>
    %430 = arith.mulf %429, %428 : vector<2x2x16x16xf32>
    %431 = arith.addf %422, %430 : vector<2x2x16x16xf32>
    %c43 = arith.constant 43 : index
    %432 = memref.load %arg4[%c43] : memref<98xf32, #tpu.memory_space<smem>>
    %c92 = arith.constant 92 : index
    %433 = memref.load %arg4[%c92] : memref<98xf32, #tpu.memory_space<smem>>
    %434 = vector.broadcast %432 : f32 to vector<1x2x1x1xf32>
    %435 = vector.broadcast %433 : f32 to vector<1x2x1x1xf32>
    %436 = arith.select %43, %434, %435 : vector<1x2x1x1xi1>, vector<1x2x1x1xf32>
    %437 = vector.extract_strided_slice %35 {offsets = [0, 0, 6, 0], sizes = [2, 2, 16, 16], strides = [1, 1, 1, 1]} : vector<2x2x22x16xf32> to vector<2x2x16x16xf32>
    %438 = vector.broadcast %436 : vector<1x2x1x1xf32> to vector<2x2x16x16xf32>
    %439 = arith.mulf %438, %437 : vector<2x2x16x16xf32>
    %440 = arith.addf %431, %439 : vector<2x2x16x16xf32>
    %c44 = arith.constant 44 : index
    %441 = memref.load %arg4[%c44] : memref<98xf32, #tpu.memory_space<smem>>
    %c93 = arith.constant 93 : index
    %442 = memref.load %arg4[%c93] : memref<98xf32, #tpu.memory_space<smem>>
    %443 = vector.broadcast %441 : f32 to vector<1x2x1x1xf32>
    %444 = vector.broadcast %442 : f32 to vector<1x2x1x1xf32>
    %445 = arith.select %43, %443, %444 : vector<1x2x1x1xi1>, vector<1x2x1x1xf32>
    %446 = vector.extract_strided_slice %36 {offsets = [0, 0, 6, 0], sizes = [2, 2, 16, 16], strides = [1, 1, 1, 1]} : vector<2x2x22x16xf32> to vector<2x2x16x16xf32>
    %447 = vector.broadcast %445 : vector<1x2x1x1xf32> to vector<2x2x16x16xf32>
    %448 = arith.mulf %447, %446 : vector<2x2x16x16xf32>
    %449 = arith.addf %440, %448 : vector<2x2x16x16xf32>
    %c45 = arith.constant 45 : index
    %450 = memref.load %arg4[%c45] : memref<98xf32, #tpu.memory_space<smem>>
    %c94 = arith.constant 94 : index
    %451 = memref.load %arg4[%c94] : memref<98xf32, #tpu.memory_space<smem>>
    %452 = vector.broadcast %450 : f32 to vector<1x2x1x1xf32>
    %453 = vector.broadcast %451 : f32 to vector<1x2x1x1xf32>
    %454 = arith.select %43, %452, %453 : vector<1x2x1x1xi1>, vector<1x2x1x1xf32>
    %455 = vector.extract_strided_slice %37 {offsets = [0, 0, 6, 0], sizes = [2, 2, 16, 16], strides = [1, 1, 1, 1]} : vector<2x2x22x16xf32> to vector<2x2x16x16xf32>
    %456 = vector.broadcast %454 : vector<1x2x1x1xf32> to vector<2x2x16x16xf32>
    %457 = arith.mulf %456, %455 : vector<2x2x16x16xf32>
    %458 = arith.addf %449, %457 : vector<2x2x16x16xf32>
    %c46 = arith.constant 46 : index
    %459 = memref.load %arg4[%c46] : memref<98xf32, #tpu.memory_space<smem>>
    %c95 = arith.constant 95 : index
    %460 = memref.load %arg4[%c95] : memref<98xf32, #tpu.memory_space<smem>>
    %461 = vector.broadcast %459 : f32 to vector<1x2x1x1xf32>
    %462 = vector.broadcast %460 : f32 to vector<1x2x1x1xf32>
    %463 = arith.select %43, %461, %462 : vector<1x2x1x1xi1>, vector<1x2x1x1xf32>
    %464 = vector.extract_strided_slice %38 {offsets = [0, 0, 6, 0], sizes = [2, 2, 16, 16], strides = [1, 1, 1, 1]} : vector<2x2x22x16xf32> to vector<2x2x16x16xf32>
    %465 = vector.broadcast %463 : vector<1x2x1x1xf32> to vector<2x2x16x16xf32>
    %466 = arith.mulf %465, %464 : vector<2x2x16x16xf32>
    %467 = arith.addf %458, %466 : vector<2x2x16x16xf32>
    %c47 = arith.constant 47 : index
    %468 = memref.load %arg4[%c47] : memref<98xf32, #tpu.memory_space<smem>>
    %c96 = arith.constant 96 : index
    %469 = memref.load %arg4[%c96] : memref<98xf32, #tpu.memory_space<smem>>
    %470 = vector.broadcast %468 : f32 to vector<1x2x1x1xf32>
    %471 = vector.broadcast %469 : f32 to vector<1x2x1x1xf32>
    %472 = arith.select %43, %470, %471 : vector<1x2x1x1xi1>, vector<1x2x1x1xf32>
    %473 = vector.extract_strided_slice %39 {offsets = [0, 0, 6, 0], sizes = [2, 2, 16, 16], strides = [1, 1, 1, 1]} : vector<2x2x22x16xf32> to vector<2x2x16x16xf32>
    %474 = vector.broadcast %472 : vector<1x2x1x1xf32> to vector<2x2x16x16xf32>
    %475 = arith.mulf %474, %473 : vector<2x2x16x16xf32>
    %476 = arith.addf %467, %475 : vector<2x2x16x16xf32>
    %c48 = arith.constant 48 : index
    %477 = memref.load %arg4[%c48] : memref<98xf32, #tpu.memory_space<smem>>
    %c97 = arith.constant 97 : index
    %478 = memref.load %arg4[%c97] : memref<98xf32, #tpu.memory_space<smem>>
    %479 = vector.broadcast %477 : f32 to vector<1x2x1x1xf32>
    %480 = vector.broadcast %478 : f32 to vector<1x2x1x1xf32>
    %481 = arith.select %43, %479, %480 : vector<1x2x1x1xi1>, vector<1x2x1x1xf32>
    %482 = vector.extract_strided_slice %40 {offsets = [0, 0, 6, 0], sizes = [2, 2, 16, 16], strides = [1, 1, 1, 1]} : vector<2x2x22x16xf32> to vector<2x2x16x16xf32>
    %483 = vector.broadcast %481 : vector<1x2x1x1xf32> to vector<2x2x16x16xf32>
    %484 = arith.mulf %483, %482 : vector<2x2x16x16xf32>
    %485 = arith.addf %476, %484 : vector<2x2x16x16xf32>
    %486 = vector.extract_strided_slice %485 {offsets = [0, 0, 0, 0], sizes = [2, 1, 16, 16], strides = [1, 1, 1, 1]} : vector<2x2x16x16xf32> to vector<2x1x16x16xf32>
    %487 = vector.shape_cast %486 : vector<2x1x16x16xf32> to vector<2x16x16xf32>
    %488 = vector.extract_strided_slice %485 {offsets = [0, 1, 0, 0], sizes = [2, 1, 16, 16], strides = [1, 1, 1, 1]} : vector<2x2x16x16xf32> to vector<2x1x16x16xf32>
    %489 = vector.shape_cast %488 : vector<2x1x16x16xf32> to vector<2x16x16xf32>
    %490 = arith.addf %487, %489 : vector<2x16x16xf32>
    %491 = arith.negf %490 : vector<2x16x16xf32>
    %492 = math.exp %491 : vector<2x16x16xf32>
    %cst_34 = arith.constant 1.000000e+00 : f32
    %493 = vector.broadcast %cst_34 : f32 to vector<2x16x16xf32>
    %494 = arith.addf %493, %492 : vector<2x16x16xf32>
    %495 = arith.divf %493, %494 : vector<2x16x16xf32>
    %496 = vector.shape_cast %495 : vector<2x16x16xf32> to vector<2x1x256xf32>
    %497 = vector.broadcast %496 : vector<2x1x256xf32> to vector<2x32x256xf32>
    %498 = arith.mulf %22, %497 : vector<2x32x256xf32>
    %c0_35 = arith.constant 0 : index
    %c0_36 = arith.constant 0 : index
    %c0_37 = arith.constant 0 : index
    %499 = vector.load %arg5[%c0_35, %c0_36, %c0_37] : memref<2x32x256xf32, #tpu.memory_space<vmem>>, vector<2x32x256xf32>
    tpu.vector_store %arg5[%c0_35, %c0_36, %c0_37], %498 {strides = array<i32>} : memref<2x32x256xf32, #tpu.memory_space<vmem>>, vector<2x32x256xf32>,
    return
  }
  func.func @transform_0(%arg0: i32) -> (i32, i32, i32) {
    %c0_i32 = arith.constant 0 : i32
    %c0_i32_0 = arith.constant 0 : i32
    %c0_i32_1 = arith.constant 0 : i32
    return %arg0, %c0_i32, %c0_i32_0 : i32, i32, i32
  }
  func.func @transform_1(%arg0: i32) -> (i32, i32) {
    %c0_i32 = arith.constant 0 : i32
    %c0_i32_0 = arith.constant 0 : i32
    %c0_i32_1 = arith.constant 0 : i32
    return %c0_i32, %c0_i32_0 : i32, i32
  }
  func.func @transform_2(%arg0: i32) -> (i32, i32) {
    %c0_i32 = arith.constant 0 : i32
    %c0_i32_0 = arith.constant 0 : i32
    %c0_i32_1 = arith.constant 0 : i32
    return %c0_i32, %c0_i32_0 : i32, i32
  }
  func.func @transform_3(%arg0: i32) -> i32 {
    %c0_i32 = arith.constant 0 : i32
    %c0_i32_0 = arith.constant 0 : i32
    return %c0_i32 : i32
  }
  func.func @transform_4(%arg0: i32) -> (i32, i32, i32) {
    %c0_i32 = arith.constant 0 : i32
    %c0_i32_0 = arith.constant 0 : i32
    %c0_i32_1 = arith.constant 0 : i32
    return %arg0, %c0_i32, %c0_i32_0 : i32, i32, i32
  }
}

</mosaic_0001>

<llo_original>
// kernel: tpu_custom_call.1
$region0: #{tpu_custom_call.1}
  #allocation0 [shape = 'u32[]', space=smem, size = 0x4, offset = 0x4, fixed_abs, tag = 'smem constant byte address 0x4 - core index']
  #allocation1 [shape = 'u32[144,128]{1,0:T(1,128)}', space=vmem, size = 0x12000, scoped, tag = 'internal scratch']
  #allocation2 [shape = 'f32[2,2,22,22]{3,2,1,0:T(8,128)}', space=vmem, size = 0xc000, scoped, tag = 'scratch operand']
  %s0 = inlined_call_operand.hbm [shape: f32[2,32,256], index: 0, kind: input, shape index: {}]
  %s1 = inlined_call_operand.vmem [shape: f32[32,2], index: 1, kind: input, shape index: {}]
  %s2 = inlined_call_operand.vmem [shape: f32[2,32], index: 2, kind: input, shape index: {}]
  %s3 = inlined_call_operand.vmem [shape: f32[98], index: 3, kind: input, shape index: {}]
  %s4 = inlined_call_operand.hbm [shape: f32[2,32,256], index: 4, kind: output, shape index: {}]
  %s5 = sld [smem:[#allocation0]]
  $region34: #{tpu_custom_call.1} parent=0
    _
  %s7 = ssub.s32 1, %s5
  %s8 = scalar_select 0, %s7, %s5
  $region1: #{tpu_custom_call.1} parent=0
    #allocation3 [shape = 'u8[65536]{0}', space=vmem, size = 0x10000, scoped, tag = 'input window, operand 0, single buffered']
    #allocation4 [shape = 's32[1]{0}', space=sflag, size = 0x4, scoped, tag = 'scoped memory for tpu_custom_call.1']
    #allocation5 [shape = 's32[1]{0}', space=sflag, size = 0x4, scoped, tag = 'scoped memory for tpu_custom_call.1']
    #allocation6 [shape = 's32[1]{0}', space=sflag, size = 0x4, scoped, tag = 'scoped memory for tpu_custom_call.1']
    #allocation7 [shape = 'u8[512]{0}', space=smem, size = 0x200, scoped, tag = 'input window, operand 3, single buffered']
    #allocation8 [shape = 'u8[65536]{0}', space=vmem, size = 0x10000, scoped, tag = 'output window, operand 0, single buffered']
    %9 = vsyncpa [#allocation4], 0
    %10 = vsyncpa [#allocation6], 0
    %11 = vsyncpa [#allocation5], 0
    // Predicated region
    $region2: #{tpu_custom_call.1} parent=1 // pred_check
      _
    $region3: #{tpu_custom_call.1} parent=1 // pred_check_branch
      %13 = sbr.rel (0) target = $region5
    $region4: #{tpu_custom_call.1} parent=1 // pred_region
      %s15 = ssub.s32 2048, 2048
      %16 = vsyncadd [#allocation4], %s15
      %s17 = sshll.u32 [#allocation3], 4
      %s18 = int_to_ptr.vmem [resolvable:$true] %s17
      %23 = dma.hbm_to_vmem [thread:$0]  %s0, 2048, %s18, [#allocation4], 256, 256, 16
    $region5: #{tpu_custom_call.1} parent=1 // pred_fallthru
      _
    // Predicated region
    $region6: #{tpu_custom_call.1} parent=1 // pred_check
      _
    $region7: #{tpu_custom_call.1} parent=1 // pred_check_branch
      %25 = sbr.rel (0) target = $region9
    $region8: #{tpu_custom_call.1} parent=1 // pred_region
      _
    $region9: #{tpu_custom_call.1} parent=1 // pred_fallthru
      _
    // Predicated region
    $region10: #{tpu_custom_call.1} parent=1 // pred_check
      _
    $region11: #{tpu_custom_call.1} parent=1 // pred_check_branch
      %27 = sbr.rel (0) target = $region13
    $region12: #{tpu_custom_call.1} parent=1 // pred_region
      _
    $region13: #{tpu_custom_call.1} parent=1 // pred_fallthru
      _
    // Predicated region
    $region14: #{tpu_custom_call.1} parent=1 // pred_check
      _
    $region15: #{tpu_custom_call.1} parent=1 // pred_check_branch
      %29 = sbr.rel (0) target = $region17
    $region16: #{tpu_custom_call.1} parent=1 // pred_region
      %s31 = ssub.s32 16, 16
      %32 = vsyncadd [#allocation6], %s31
      %s34 = sshll.u32 %s3, 4
      %s35 = int_to_ptr.vmem [resolvable:$true] %s34
      %37 = dma.vmem_to_smem %s35, 16, [#allocation7], [#allocation6]
    $region17: #{tpu_custom_call.1} parent=1 // pred_fallthru
      _
    // Predicated region
    $region18: #{tpu_custom_call.1} parent=1 // pred_check
      _
    $region19: #{tpu_custom_call.1} parent=1 // pred_check_branch
      %39 = sbr.rel (0) target = $region21
    $region20: #{tpu_custom_call.1} parent=1 // pred_region
      %40 = dma.done [#allocation4], 2048
    $region21: #{tpu_custom_call.1} parent=1 // pred_fallthru
      _
    // Predicated region
    $region22: #{tpu_custom_call.1} parent=1 // pred_check
      _
    $region23: #{tpu_custom_call.1} parent=1 // pred_check_branch
      %42 = sbr.rel (0) target = $region25
    $region24: #{tpu_custom_call.1} parent=1 // pred_region
      %43 = dma.done [#allocation6], 16
    $region25: #{tpu_custom_call.1} parent=1 // pred_fallthru
      _
    %44 = sfence
    %v45 = vld [vmem:[#allocation3] sm:$0xff]
    %v46 = vld [vmem:[#allocation3 + $0x8] sm:$0xff]
    %v47 = vld [vmem:[#allocation3 + $0x10] sm:$0xff]
    %v48 = vld [vmem:[#allocation3 + $0x18] sm:$0xff]
    %v49 = vld [vmem:[#allocation3 + $0x20] sm:$0xff]
    %v50 = vld [vmem:[#allocation3 + $0x28] sm:$0xff]
    %v51 = vld [vmem:[#allocation3 + $0x30] sm:$0xff]
    %v52 = vld [vmem:[#allocation3 + $0x38] sm:$0xff]
    %v53 = vld [vmem:[#allocation3 + $0x40] sm:$0xff]
    %v54 = vld [vmem:[#allocation3 + $0x48] sm:$0xff]
    %v55 = vld [vmem:[#allocation3 + $0x50] sm:$0xff]
    %v56 = vld [vmem:[#allocation3 + $0x58] sm:$0xff]
    %v57 = vld [vmem:[#allocation3 + $0x60] sm:$0xff]
    %v58 = vld [vmem:[#allocation3 + $0x68] sm:$0xff]
    %v59 = vld [vmem:[#allocation3 + $0x70] sm:$0xff]
    %v60 = vld [vmem:[#allocation3 + $0x78] sm:$0xff]
    %v61 = vadd.f32 %v45, %v46
    %62 = vadd.xlane.f32.xlu0 %v61
    %v63 = vpop.xlane.xlu0 %62
    %v64 = vadd.f32 %v47, %v48
    %65 = vadd.xlane.f32.xlu0 %v64
    %v66 = vpop.xlane.xlu0 %65
    %v67 = vadd.f32 %v49, %v50
    %68 = vadd.xlane.f32.xlu0 %v67
    %v69 = vpop.xlane.xlu0 %68
    %v70 = vadd.f32 %v51, %v52
    %71 = vadd.xlane.f32.xlu0 %v70
    %v72 = vpop.xlane.xlu0 %71
    %v73 = vadd.f32 %v53, %v54
    %74 = vadd.xlane.f32.xlu0 %v73
    %v75 = vpop.xlane.xlu0 %74
    %v76 = vadd.f32 %v55, %v56
    %77 = vadd.xlane.f32.xlu0 %v76
    %v78 = vpop.xlane.xlu0 %77
    %v79 = vadd.f32 %v57, %v58
    %80 = vadd.xlane.f32.xlu0 %v79
    %v81 = vpop.xlane.xlu0 %80
    %v82 = vadd.f32 %v59, %v60
    %83 = vadd.xlane.f32.xlu0 %v82
    %v84 = vpop.xlane.xlu0 %83
    %v85 = vrcp.pop 256.0
    %v86 = vmul.f32 %v63, %v85
    %v87 = vmul.f32 %v66, %v85
    %v88 = vmul.f32 %v69, %v85
    %v89 = vmul.f32 %v72, %v85
    %v90 = vmul.f32 %v75, %v85
    %v91 = vmul.f32 %v78, %v85
    %v92 = vmul.f32 %v81, %v85
    %v93 = vmul.f32 %v84, %v85
    %v94 = vmax.f32 %v45, %v46
    %95 = vmax.xlane.f32.xlu0 %v94
    %v96 = vpop.xlane.xlu0 %95
    %v97 = vmax.f32 %v47, %v48
    %98 = vmax.xlane.f32.xlu0 %v97
    %v99 = vpop.xlane.xlu0 %98
    %v100 = vmax.f32 %v49, %v50
    %101 = vmax.xlane.f32.xlu0 %v100
    %v102 = vpop.xlane.xlu0 %101
    %v103 = vmax.f32 %v51, %v52
    %104 = vmax.xlane.f32.xlu0 %v103
    %v105 = vpop.xlane.xlu0 %104
    %v106 = vmax.f32 %v53, %v54
    %107 = vmax.xlane.f32.xlu0 %v106
    %v108 = vpop.xlane.xlu0 %107
    %v109 = vmax.f32 %v55, %v56
    %110 = vmax.xlane.f32.xlu0 %v109
    %v111 = vpop.xlane.xlu0 %110
    %v112 = vmax.f32 %v57, %v58
    %113 = vmax.xlane.f32.xlu0 %v112
    %v114 = vpop.xlane.xlu0 %113
    %v115 = vmax.f32 %v59, %v60
    %116 = vmax.xlane.f32.xlu0 %v115
    %v117 = vpop.xlane.xlu0 %116
    %v126 = vlaneseq
    %v127 = vand.u32 %v126, 127
    %v128 = vlaneseq
    %v129 = vshrl.u32 %v128, 7
    %v130 = vsub.s32 %v127, %v129
    %v131 = vrot.slane %v86, %v130
    %v132 = vadd.s32 %v127, 4294967288
    %v133 = vlaneseq
    %v134 = vshrl.u32 %v133, 7
    %v135 = vsub.s32 %v132, %v134
    %v136 = vrot.slane %v87, %v135
    %vm137 = vcmask 130112
    %v138 = vsel %vm137, %v136, %v131
    %v139 = vadd.s32 %v127, 4294967280
    %v140 = vlaneseq
    %v141 = vshrl.u32 %v140, 7
    %v142 = vsub.s32 %v139, %v141
    %v143 = vrot.slane %v88, %v142
    %vm144 = vcmask 195712
    %v145 = vsel %vm144, %v143, %v138
    %v146 = vadd.s32 %v127, 4294967272
    %v147 = vlaneseq
    %v148 = vshrl.u32 %v147, 7
    %v149 = vsub.s32 %v146, %v148
    %v150 = vrot.slane %v89, %v149
    %vm151 = vcmask 261312
    %v152 = vsel %vm151, %v150, %v145
    %v153 = vlaneseq
    %v154 = vshrl.u32 %v153, 7
    %v155 = vsub.s32 %v127, %v154
    %v156 = vrot.slane %v90, %v155
    %v157 = vlaneseq
    %v158 = vshrl.u32 %v157, 7
    %v159 = vsub.s32 %v132, %v158
    %v160 = vrot.slane %v91, %v159
    %v161 = vsel %vm137, %v160, %v156
    %v162 = vlaneseq
    %v163 = vshrl.u32 %v162, 7
    %v164 = vsub.s32 %v139, %v163
    %v165 = vrot.slane %v92, %v164
    %v166 = vsel %vm144, %v165, %v161
    %v167 = vlaneseq
    %v168 = vshrl.u32 %v167, 7
    %v169 = vsub.s32 %v146, %v168
    %v170 = vrot.slane %v93, %v169
    %v171 = vsel %vm151, %v170, %v166
    %vm172 = vcmask 1041409
    %v173 = vsel %vm172, %v171, %v152
    %v183 = vlaneseq
    %v184 = vshrl.u32 %v183, 7
    %v185 = vsub.s32 %v127, %v184
    %v186 = vrot.slane %v96, %v185
    %v187 = vlaneseq
    %v188 = vshrl.u32 %v187, 7
    %v189 = vsub.s32 %v132, %v188
    %v190 = vrot.slane %v99, %v189
    %v191 = vsel %vm137, %v190, %v186
    %v192 = vlaneseq
    %v193 = vshrl.u32 %v192, 7
    %v194 = vsub.s32 %v139, %v193
    %v195 = vrot.slane %v102, %v194
    %v196 = vsel %vm144, %v195, %v191
    %v197 = vlaneseq
    %v198 = vshrl.u32 %v197, 7
    %v199 = vsub.s32 %v146, %v198
    %v200 = vrot.slane %v105, %v199
    %v201 = vsel %vm151, %v200, %v196
    %v202 = vlaneseq
    %v203 = vshrl.u32 %v202, 7
    %v204 = vsub.s32 %v127, %v203
    %v205 = vrot.slane %v108, %v204
    %v206 = vlaneseq
    %v207 = vshrl.u32 %v206, 7
    %v208 = vsub.s32 %v132, %v207
    %v209 = vrot.slane %v111, %v208
    %v210 = vsel %vm137, %v209, %v205
    %v211 = vlaneseq
    %v212 = vshrl.u32 %v211, 7
    %v213 = vsub.s32 %v139, %v212
    %v214 = vrot.slane %v114, %v213
    %v215 = vsel %vm144, %v214, %v210
    %v216 = vlaneseq
    %v217 = vshrl.u32 %v216, 7
    %v218 = vsub.s32 %v146, %v217
    %v219 = vrot.slane %v117, %v218
    %v220 = vsel %vm151, %v219, %v215
    %vm221 = vcmask 1043459
    %v222 = vsel %vm221, %v220, %v201
    %vm224 = vcmask 1041408
    %v225 = vsel %vm224, %v173, %v222
    %v226 = vld [vmem:[%s1] sm:$0xff]
    %v227 = vld [vmem:[%s1 + $0x8] sm:$0xff]
    %v228 = vld [vmem:[%s1 + $0x10] sm:$0xff]
    %v229 = vld [vmem:[%s1 + $0x18] sm:$0xff]
    %vm230 = vcmask 261120
    %v232 = vsel %vm230, %v225, 0
    %234 = vmatprep.subr.mxu0 0.0
    %235 = vmatpush1.msra.mxu0 %v226
    %236 = vmatprep.subr.mxu0 0.0
    %237 = vmatpush1.msra.mxu0 %v227
    %238 = vmatprep.subr.mxu0 0.0
    %239 = vmatpush1.msra.mxu0 %v228
    %240 = vmatprep.subr.mxu0 0.0
    %241 = vmatpush1.msra.mxu0 %v229
    %242 = vmatprep.subr.mxu0 0.0
    %243 = vmatpush1.msra.mxu0 0.0
    %244 = vmatprep.subr.mxu0 0.0
    %245 = vmatpush1.msra.mxu0 0.0
    %246 = vmatprep.subr.mxu0 0.0
    %247 = vmatpush1.msra.mxu0 0.0
    %248 = vmatprep.subr.mxu0 0.0
    %249 = vmatpush1.msra.mxu0 0.0
    %250 = vmatprep.subr.mxu0 0.0
    %251 = vmatpush1.msra.mxu0 0.0
    %252 = vmatprep.subr.mxu0 0.0
    %253 = vmatpush1.msra.mxu0 0.0
    %254 = vmatprep.subr.mxu0 0.0
    %255 = vmatpush1.msra.mxu0 0.0
    %256 = vmatprep.subr.mxu0 0.0
    %257 = vmatpush1.msra.mxu0 0.0
    %258 = vmatprep.subr.mxu0 0.0
    %259 = vmatpush1.msra.mxu0 0.0
    %260 = vmatprep.subr.mxu0 0.0
    %261 = vmatpush1.msra.mxu0 0.0
    %262 = vmatprep.subr.mxu0 0.0
    %263 = vmatpush1.msra.mxu0 0.0
    %264 = vmatprep.subr.mxu0 0.0
    %265 = vmatpush1.msra.mxu0 0.0
    %266 = vmatprep.subr.mxu0 0.0
    %267 = vmatpush1.msra.mxu0 0.0
    %268 = vmatprep.subr.mxu0 0.0
    %269 = vmatpush1.msra.mxu0 0.0
    %270 = vmatprep.subr.mxu0 0.0
    %271 = vmatpush1.msra.mxu0 0.0
    %272 = vmatprep.subr.mxu0 0.0
    %273 = vmatpush1.msra.mxu0 0.0
    %274 = vmatprep.subr.mxu0 0.0
    %275 = vmatpush1.msra.mxu0 0.0
    %276 = vmatprep.subr.mxu0 0.0
    %277 = vmatpush1.msra.mxu0 0.0
    %278 = vmatprep.subr.mxu0 0.0
    %279 = vmatpush1.msra.mxu0 0.0
    %280 = vmatprep.subr.mxu0 0.0
    %281 = vmatpush1.msra.mxu0 0.0
    %282 = vmatprep.subr.mxu0 0.0
    %283 = vmatpush1.msra.mxu0 0.0
    %284 = vmatprep.subr.mxu0 0.0
    %285 = vmatpush1.msra.mxu0 0.0
    %286 = vmatprep.subr.mxu0 0.0
    %287 = vmatpush1.msra.mxu0 0.0
    %288 = vmatprep.subr.mxu0 0.0
    %289 = vmatpush1.msra.mxu0 0.0
    %290 = vmatprep.subr.mxu0 0.0
    %291 = vmatpush1.msra.mxu0 0.0
    %292 = vmatprep.subr.mxu0 0.0
    %293 = vmatpush1.msra.mxu0 0.0
    %294 = vmatprep.subr.mxu0 0.0
    %295 = vmatpush1.msra.mxu0 0.0
    %296 = vmatprep.subr.mxu0 0.0
    %297 = vmatpush1.msra.mxu0 0.0
    %298 = vmatprep.mubr.f32.mxu0 0.0
    %299 = vmatmul.mubr.f32.gmra.mrb[0].mxu0 %v232
    %v300 = vpop.f32.mrb[0].mxu0
    %v301 = vadd.f32 0.0, %v300
    %v302 = vpop.f32.mrb[0].mxu0
    %303 = vdwg.mxu0
    %v304 = vmax.f32 %v301, 0.0
    %v305 = vld [vmem:[%s2] sm:$0x3]
    %vm306 = vcmask 15360
    %v308 = vsel %vm306, %v304, 0
    %v311 = vsel %vm224, %v305, 0
    %313 = vmatprep.subr.mxu0 0.0
    %314 = vmatpush1.msra.mxu0 %v311
    %315 = vmatprep.subr.mxu0 0.0
    %316 = vmatpush1.msra.mxu0 0.0
    %317 = vmatprep.subr.mxu0 0.0
    %318 = vmatpush1.msra.mxu0 0.0
    %319 = vmatprep.subr.mxu0 0.0
    %320 = vmatpush1.msra.mxu0 0.0
    %321 = vmatprep.subr.mxu0 0.0
    %322 = vmatpush1.msra.mxu0 0.0
    %323 = vmatprep.subr.mxu0 0.0
    %324 = vmatpush1.msra.mxu0 0.0
    %325 = vmatprep.subr.mxu0 0.0
    %326 = vmatpush1.msra.mxu0 0.0
    %327 = vmatprep.subr.mxu0 0.0
    %328 = vmatpush1.msra.mxu0 0.0
    %329 = vmatprep.subr.mxu0 0.0
    %330 = vmatpush1.msra.mxu0 0.0
    %331 = vmatprep.subr.mxu0 0.0
    %332 = vmatpush1.msra.mxu0 0.0
    %333 = vmatprep.subr.mxu0 0.0
    %334 = vmatpush1.msra.mxu0 0.0
    %335 = vmatprep.subr.mxu0 0.0
    %336 = vmatpush1.msra.mxu0 0.0
    %337 = vmatprep.subr.mxu0 0.0
    %338 = vmatpush1.msra.mxu0 0.0
    %339 = vmatprep.subr.mxu0 0.0
    %340 = vmatpush1.msra.mxu0 0.0
    %341 = vmatprep.subr.mxu0 0.0
    %342 = vmatpush1.msra.mxu0 0.0
    %343 = vmatprep.subr.mxu0 0.0
    %344 = vmatpush1.msra.mxu0 0.0
    %345 = vmatprep.subr.mxu0 0.0
    %346 = vmatpush1.msra.mxu0 0.0
    %347 = vmatprep.subr.mxu0 0.0
    %348 = vmatpush1.msra.mxu0 0.0
    %349 = vmatprep.subr.mxu0 0.0
    %350 = vmatpush1.msra.mxu0 0.0
    %351 = vmatprep.subr.mxu0 0.0
    %352 = vmatpush1.msra.mxu0 0.0
    %353 = vmatprep.subr.mxu0 0.0
    %354 = vmatpush1.msra.mxu0 0.0
    %355 = vmatprep.subr.mxu0 0.0
    %356 = vmatpush1.msra.mxu0 0.0
    %357 = vmatprep.subr.mxu0 0.0
    %358 = vmatpush1.msra.mxu0 0.0
    %359 = vmatprep.subr.mxu0 0.0
    %360 = vmatpush1.msra.mxu0 0.0
    %361 = vmatprep.subr.mxu0 0.0
    %362 = vmatpush1.msra.mxu0 0.0
    %363 = vmatprep.subr.mxu0 0.0
    %364 = vmatpush1.msra.mxu0 0.0
    %365 = vmatprep.subr.mxu0 0.0
    %366 = vmatpush1.msra.mxu0 0.0
    %367 = vmatprep.subr.mxu0 0.0
    %368 = vmatpush1.msra.mxu0 0.0
    %369 = vmatprep.subr.mxu0 0.0
    %370 = vmatpush1.msra.mxu0 0.0
    %371 = vmatprep.subr.mxu0 0.0
    %372 = vmatpush1.msra.mxu0 0.0
    %373 = vmatprep.subr.mxu0 0.0
    %374 = vmatpush1.msra.mxu0 0.0
    %375 = vmatprep.subr.mxu0 0.0
    %376 = vmatpush1.msra.mxu0 0.0
    %377 = vmatprep.mubr.f32.mxu0 0.0
    %378 = vmatmul.mubr.f32.gmra.mrb[0].mxu0 %v308
    %v379 = vpop.f32.mrb[0].mxu0
    %v380 = vadd.f32 0.0, %v379
    %v381 = vpop.f32.mrb[0].mxu0
    %382 = vdwg.mxu0
    %v384 = vrot.slane %v380, 2
    %v386 = vadd.f32 %v380, %v384
    %v387 = vxor.u32 %v386, 2147483648
    %v388 = vmul.f32 %v387, 1.442695
    %v389 = vpow.pop %v388
    %v390 = vadd.f32 %v389, 1.0
    %v391 = vrcp.pop %v390
    %v392 = vmul.f32 1.0, %v391
    %v393 = vlaneseq
    %v394 = vshrl.u32 %v393, 7
    %v395 = vsub.s32 0, %v394
    %v396 = vrot.slane %v392, %v395
    %398 = vbcast.lane.b32.xlu0 %v396, 256
    %v399 = vpop.permute.xlu0 %398
    %s401 = sor.u32 256, 8
    %402 = vbcast.lane.b32.xlu0 %v396, %s401
    %v403 = vpop.permute.xlu0 %402
    %s405 = sor.u32 256, 16
    %406 = vbcast.lane.b32.xlu0 %v396, %s405
    %v407 = vpop.permute.xlu0 %406
    %s409 = sor.u32 256, 24
    %410 = vbcast.lane.b32.xlu0 %v396, %s409
    %v411 = vpop.permute.xlu0 %410
    %v412 = vlaneseq
    %v413 = vshrl.u32 %v412, 7
    %v414 = vsub.s32 1, %v413
    %v415 = vrot.slane %v392, %v414
    %417 = vbcast.lane.b32.xlu0 %v415, 256
    %v418 = vpop.permute.xlu0 %417
    %s420 = sor.u32 256, 8
    %421 = vbcast.lane.b32.xlu0 %v415, %s420
    %v422 = vpop.permute.xlu0 %421
    %s424 = sor.u32 256, 16
    %425 = vbcast.lane.b32.xlu0 %v415, %s424
    %v426 = vpop.permute.xlu0 %425
    %s428 = sor.u32 256, 24
    %429 = vbcast.lane.b32.xlu0 %v415, %s428
    %v430 = vpop.permute.xlu0 %429
    %v431 = vmul.f32 %v45, %v399
    %v432 = vmul.f32 %v46, %v399
    %v433 = vmul.f32 %v47, %v403
    %v434 = vmul.f32 %v48, %v403
    %v435 = vmul.f32 %v49, %v407
    %v436 = vmul.f32 %v50, %v407
    %v437 = vmul.f32 %v51, %v411
    %v438 = vmul.f32 %v52, %v411
    %v439 = vmul.f32 %v53, %v418
    %v440 = vmul.f32 %v54, %v418
    %v441 = vmul.f32 %v55, %v422
    %v442 = vmul.f32 %v56, %v422
    %v443 = vmul.f32 %v57, %v426
    %v444 = vmul.f32 %v58, %v426
    %v445 = vmul.f32 %v59, %v430
    %v446 = vmul.f32 %v60, %v430
    %v447 = vadd.f32 %v431, %v433
    %v448 = vadd.f32 %v447, %v435
    %v449 = vadd.f32 %v448, %v437
    %v450 = vrot.slane %v449, 4
    %v451 = vadd.f32 %v449, %v450
    %v452 = vrot.slane %v451, 2
    %v453 = vadd.f32 %v451, %v452
    %v454 = vrot.slane %v453, 1
    %v455 = vadd.f32 %v453, %v454
    %v456 = vadd.f32 %v432, %v434
    %v457 = vadd.f32 %v456, %v436
    %v458 = vadd.f32 %v457, %v438
    %v459 = vrot.slane %v458, 4
    %v460 = vadd.f32 %v458, %v459
    %v461 = vrot.slane %v460, 2
    %v462 = vadd.f32 %v460, %v461
    %v463 = vrot.slane %v462, 1
    %v464 = vadd.f32 %v462, %v463
    %v465 = vadd.f32 %v439, %v441
    %v466 = vadd.f32 %v465, %v443
    %v467 = vadd.f32 %v466, %v445
    %v468 = vrot.slane %v467, 4
    %v469 = vadd.f32 %v467, %v468
    %v470 = vrot.slane %v469, 2
    %v471 = vadd.f32 %v469, %v470
    %v472 = vrot.slane %v471, 1
    %v473 = vadd.f32 %v471, %v472
    %v474 = vadd.f32 %v440, %v442
    %v475 = vadd.f32 %v474, %v444
    %v476 = vadd.f32 %v475, %v446
    %v477 = vrot.slane %v476, 4
    %v478 = vadd.f32 %v476, %v477
    %v479 = vrot.slane %v478, 2
    %v480 = vadd.f32 %v478, %v479
    %v481 = vrot.slane %v480, 1
    %v482 = vadd.f32 %v480, %v481
    %v483 = vrcp.pop 32.0
    %v484 = vmul.f32 %v455, %v483
    %v485 = vmul.f32 %v464, %v483
    %v486 = vmul.f32 %v473, %v483
    %v487 = vmul.f32 %v482, %v483
    %v488 = vmax.f32 %v431, %v433
    %v489 = vmax.f32 %v488, %v435
    %v490 = vmax.f32 %v489, %v437
    %v491 = vrot.slane %v490, 4
    %v492 = vmax.f32 %v490, %v491
    %v493 = vrot.slane %v492, 2
    %v494 = vmax.f32 %v492, %v493
    %v495 = vrot.slane %v494, 1
    %v496 = vmax.f32 %v494, %v495
    %v497 = vmax.f32 %v432, %v434
    %v498 = vmax.f32 %v497, %v436
    %v499 = vmax.f32 %v498, %v438
    %v500 = vrot.slane %v499, 4
    %v501 = vmax.f32 %v499, %v500
    %v502 = vrot.slane %v501, 2
    %v503 = vmax.f32 %v501, %v502
    %v504 = vrot.slane %v503, 1
    %v505 = vmax.f32 %v503, %v504
    %v506 = vmax.f32 %v439, %v441
    %v507 = vmax.f32 %v506, %v443
    %v508 = vmax.f32 %v507, %v445
    %v509 = vrot.slane %v508, 4
    %v510 = vmax.f32 %v508, %v509
    %v511 = vrot.slane %v510, 2
    %v512 = vmax.f32 %v510, %v511
    %v513 = vrot.slane %v512, 1
    %v514 = vmax.f32 %v512, %v513
    %v515 = vmax.f32 %v440, %v442
    %v516 = vmax.f32 %v515, %v444
    %v517 = vmax.f32 %v516, %v446
    %v518 = vrot.slane %v517, 4
    %v519 = vmax.f32 %v517, %v518
    %v520 = vrot.slane %v519, 2
    %v521 = vmax.f32 %v519, %v520
    %v522 = vrot.slane %v521, 1
    %v523 = vmax.f32 %v521, %v522
    %vm524 = vcmask 179200
    %525 = vst.msk [vmem:[#allocation2] sm:$0xff] %vm524, 0.0
    %526 = vst.msk [vmem:[#allocation2 + $0x8] sm:$0xff] %vm524, 0.0
    %vm527 = vcmask 177152
    %528 = vst.msk [vmem:[#allocation2 + $0x10] sm:$0x3f] %vm527, 0.0
    %529 = vst.msk [vmem:[#allocation2 + $0x18] sm:$0xff] %vm524, 0.0
    %530 = vst.msk [vmem:[#allocation2 + $0x20] sm:$0xff] %vm524, 0.0
    %531 = vst.msk [vmem:[#allocation2 + $0x28] sm:$0x3f] %vm527, 0.0
    %532 = vst.msk [vmem:[#allocation2 + $0x30] sm:$0xff] %vm524, 0.0
    %533 = vst.msk [vmem:[#allocation2 + $0x38] sm:$0xff] %vm524, 0.0
    %534 = vst.msk [vmem:[#allocation2 + $0x40] sm:$0x3f] %vm527, 0.0
    %535 = vst.msk [vmem:[#allocation2 + $0x48] sm:$0xff] %vm524, 0.0
    %536 = vst.msk [vmem:[#allocation2 + $0x50] sm:$0xff] %vm524, 0.0
    %537 = vst.msk [vmem:[#allocation2 + $0x58] sm:$0x3f] %vm527, 0.0
    %540 = vrot.lane.b32.xlu0 %v484, 112
    %v541 = vpop.permute.xlu0 %540
    %542 = vrot.lane.b32.xlu0 %v486, 112
    %v543 = vpop.permute.xlu0 %542
    %544 = vrot.lane.b32.xlu0 %v484, 96
    %v545 = vpop.permute.xlu0 %544
    %546 = vrot.lane.b32.xlu0 %v486, 96
    %v547 = vpop.permute.xlu0 %546
    %548 = vrot.lane.b32.xlu0 %v484, 80
    %v549 = vpop.permute.xlu0 %548
    %550 = vrot.lane.b32.xlu0 %v486, 80
    %v551 = vpop.permute.xlu0 %550
    %552 = vrot.lane.b32.xlu0 %v484, 64
    %v553 = vpop.permute.xlu0 %552
    %554 = vrot.lane.b32.xlu0 %v486, 64
    %v555 = vpop.permute.xlu0 %554
    %556 = vrot.lane.b32.xlu0 %v484, 48
    %v557 = vpop.permute.xlu0 %556
    %558 = vrot.lane.b32.xlu0 %v486, 48
    %v559 = vpop.permute.xlu0 %558
    %560 = vrot.lane.b32.xlu0 %v484, 32
    %v561 = vpop.permute.xlu0 %560
    %562 = vrot.lane.b32.xlu0 %v486, 32
    %v563 = vpop.permute.xlu0 %562
    %564 = vrot.lane.b32.xlu0 %v484, 16
    %v565 = vpop.permute.xlu0 %564
    %566 = vrot.lane.b32.xlu0 %v486, 16
    %v567 = vpop.permute.xlu0 %566
    %570 = vrot.lane.b32.xlu0 %v485, 112
    %v571 = vpop.permute.xlu0 %570
    %572 = vrot.lane.b32.xlu0 %v487, 112
    %v573 = vpop.permute.xlu0 %572
    %574 = vrot.lane.b32.xlu0 %v485, 96
    %v575 = vpop.permute.xlu0 %574
    %576 = vrot.lane.b32.xlu0 %v487, 96
    %v577 = vpop.permute.xlu0 %576
    %578 = vrot.lane.b32.xlu0 %v485, 80
    %v579 = vpop.permute.xlu0 %578
    %580 = vrot.lane.b32.xlu0 %v487, 80
    %v581 = vpop.permute.xlu0 %580
    %582 = vrot.lane.b32.xlu0 %v485, 64
    %v583 = vpop.permute.xlu0 %582
    %584 = vrot.lane.b32.xlu0 %v487, 64
    %v585 = vpop.permute.xlu0 %584
    %586 = vrot.lane.b32.xlu0 %v485, 48
    %v587 = vpop.permute.xlu0 %586
    %588 = vrot.lane.b32.xlu0 %v487, 48
    %v589 = vpop.permute.xlu0 %588
    %590 = vrot.lane.b32.xlu0 %v485, 32
    %v591 = vpop.permute.xlu0 %590
    %592 = vrot.lane.b32.xlu0 %v487, 32
    %v593 = vpop.permute.xlu0 %592
    %594 = vrot.lane.b32.xlu0 %v485, 16
    %v595 = vpop.permute.xlu0 %594
    %596 = vrot.lane.b32.xlu0 %v487, 16
    %v597 = vpop.permute.xlu0 %596
    %v598 = vrot.slane %v486, 7
    %v599 = vsel %vm172, %v598, %v484
    %v600 = vrot.slane %v543, 7
    %v601 = vsel %vm172, %v600, %v541
    %v602 = vrot.slane %v547, 7
    %v603 = vsel %vm172, %v602, %v545
    %v604 = vrot.slane %v551, 7
    %v605 = vsel %vm172, %v604, %v549
    %v606 = vrot.slane %v555, 7
    %v607 = vsel %vm172, %v606, %v553
    %v608 = vrot.slane %v559, 7
    %v609 = vsel %vm172, %v608, %v557
    %v610 = vrot.slane %v563, 7
    %v611 = vsel %vm172, %v610, %v561
    %v612 = vrot.slane %v567, 7
    %v613 = vsel %vm172, %v612, %v565
    %v614 = vrot.slane %v487, 7
    %v615 = vsel %vm172, %v614, %v485
    %v616 = vrot.slane %v573, 7
    %v617 = vsel %vm172, %v616, %v571
    %v618 = vrot.slane %v577, 7
    %v619 = vsel %vm172, %v618, %v575
    %v620 = vrot.slane %v581, 7
    %v621 = vsel %vm172, %v620, %v579
    %v622 = vrot.slane %v585, 7
    %v623 = vsel %vm172, %v622, %v583
    %v624 = vrot.slane %v589, 7
    %v625 = vsel %vm172, %v624, %v587
    %v626 = vrot.slane %v593, 7
    %v627 = vsel %vm172, %v626, %v591
    %v628 = vrot.slane %v597, 7
    %v629 = vsel %vm172, %v628, %v595
    %v646 = vcombine.low %v599, %v603
    %v648 = vunpack.c.l.s4 1983009808
    %v649 = vunpack.c.0.s8 %v648
    %v650 = vlaneseq
    %v651 = vshrl.u32 %v650, 7
    %v652 = vsub.s32 %v649, %v651
    %v653 = vrot.slane %v646, %v652
    %v654 = vcombine.low %v601, %v605
    %v656 = vunpack.c.l.s4 1983009808
    %v657 = vunpack.c.0.s8 %v656
    %v658 = vlaneseq
    %v659 = vshrl.u32 %v658, 7
    %v660 = vsub.s32 %v657, %v659
    %v661 = vrot.slane %v654, %v660
    %v662 = vcombine.low %v607, %v611
    %v664 = vunpack.c.l.s4 1983009808
    %v665 = vunpack.c.0.s8 %v664
    %v666 = vlaneseq
    %v667 = vshrl.u32 %v666, 7
    %v668 = vsub.s32 %v665, %v667
    %v669 = vrot.slane %v662, %v668
    %v670 = vcombine.low %v609, %v613
    %v672 = vunpack.c.l.s4 1983009808
    %v673 = vunpack.c.0.s8 %v672
    %v674 = vlaneseq
    %v675 = vshrl.u32 %v674, 7
    %v676 = vsub.s32 %v673, %v675
    %v677 = vrot.slane %v670, %v676
    %v678 = vcombine.low %v653, %v661
    %v680 = vunpack.c.l.s4 1934713408
    %v681 = vunpack.c.0.s8 %v680
    %v682 = vlaneseq
    %v683 = vshrl.u32 %v682, 7
    %v684 = vsub.s32 %v681, %v683
    %v685 = vrot.slane %v678, %v684
    %v686 = vcombine.low %v669, %v677
    %v688 = vunpack.c.l.s4 1934713408
    %v689 = vunpack.c.0.s8 %v688
    %v690 = vlaneseq
    %v691 = vshrl.u32 %v690, 7
    %v692 = vsub.s32 %v689, %v691
    %v693 = vrot.slane %v686, %v692
    %v694 = vcombine.low %v685, %v693
    %v695 = vcombine.high %v685, %v693
    %v696 = vcombine.low %v615, %v619
    %v698 = vunpack.c.l.s4 1983009808
    %v699 = vunpack.c.0.s8 %v698
    %v700 = vlaneseq
    %v701 = vshrl.u32 %v700, 7
    %v702 = vsub.s32 %v699, %v701
    %v703 = vrot.slane %v696, %v702
    %v704 = vcombine.low %v617, %v621
    %v706 = vunpack.c.l.s4 1983009808
    %v707 = vunpack.c.0.s8 %v706
    %v708 = vlaneseq
    %v709 = vshrl.u32 %v708, 7
    %v710 = vsub.s32 %v707, %v709
    %v711 = vrot.slane %v704, %v710
    %v712 = vcombine.low %v623, %v627
    %v714 = vunpack.c.l.s4 1983009808
    %v715 = vunpack.c.0.s8 %v714
    %v716 = vlaneseq
    %v717 = vshrl.u32 %v716, 7
    %v718 = vsub.s32 %v715, %v717
    %v719 = vrot.slane %v712, %v718
    %v720 = vcombine.low %v625, %v629
    %v722 = vunpack.c.l.s4 1983009808
    %v723 = vunpack.c.0.s8 %v722
    %v724 = vlaneseq
    %v725 = vshrl.u32 %v724, 7
    %v726 = vsub.s32 %v723, %v725
    %v727 = vrot.slane %v720, %v726
    %v728 = vcombine.low %v703, %v711
    %v730 = vunpack.c.l.s4 1934713408
    %v731 = vunpack.c.0.s8 %v730
    %v732 = vlaneseq
    %v733 = vshrl.u32 %v732, 7
    %v734 = vsub.s32 %v731, %v733
    %v735 = vrot.slane %v728, %v734
    %v736 = vcombine.low %v719, %v727
    %v738 = vunpack.c.l.s4 1934713408
    %v739 = vunpack.c.0.s8 %v738
    %v740 = vlaneseq
    %v741 = vshrl.u32 %v740, 7
    %v742 = vsub.s32 %v739, %v741
    %v743 = vrot.slane %v736, %v742
    %v744 = vcombine.low %v735, %v743
    %v745 = vcombine.high %v735, %v743
    %750 = vrot.lane.b32.xlu0 %v694, 3
    %v751 = vpop.permute.xlu0 %750
    %752 = vrot.lane.b32.xlu0 %v744, 3
    %v753 = vpop.permute.xlu0 %752
    %754 = vrot.lane.b32.xlu0 %v695, 3
    %v755 = vpop.permute.xlu0 %754
    %756 = vrot.lane.b32.xlu0 %v745, 3
    %v757 = vpop.permute.xlu0 %756
    %vm762 = vcmask 154648
    %763 = vst.msk [vmem:[#allocation2 + $0x3] sm:$0xff] %vm762, %v751
    %764 = vst.msk [vmem:[#allocation2 + $0xb] sm:$0xff] %vm762, %v753
    %765 = vst.msk [vmem:[#allocation2 + $0x33] sm:$0xff] %vm762, %v755
    %766 = vst.msk [vmem:[#allocation2 + $0x3b] sm:$0xff] %vm762, %v757
    %769 = vrot.lane.b32.xlu0 %v496, 112
    %v770 = vpop.permute.xlu0 %769
    %771 = vrot.lane.b32.xlu0 %v514, 112
    %v772 = vpop.permute.xlu0 %771
    %773 = vrot.lane.b32.xlu0 %v496, 96
    %v774 = vpop.permute.xlu0 %773
    %775 = vrot.lane.b32.xlu0 %v514, 96
    %v776 = vpop.permute.xlu0 %775
    %777 = vrot.lane.b32.xlu0 %v496, 80
    %v778 = vpop.permute.xlu0 %777
    %779 = vrot.lane.b32.xlu0 %v514, 80
    %v780 = vpop.permute.xlu0 %779
    %781 = vrot.lane.b32.xlu0 %v496, 64
    %v782 = vpop.permute.xlu0 %781
    %783 = vrot.lane.b32.xlu0 %v514, 64
    %v784 = vpop.permute.xlu0 %783
    %785 = vrot.lane.b32.xlu0 %v496, 48
    %v786 = vpop.permute.xlu0 %785
    %787 = vrot.lane.b32.xlu0 %v514, 48
    %v788 = vpop.permute.xlu0 %787
    %789 = vrot.lane.b32.xlu0 %v496, 32
    %v790 = vpop.permute.xlu0 %789
    %791 = vrot.lane.b32.xlu0 %v514, 32
    %v792 = vpop.permute.xlu0 %791
    %793 = vrot.lane.b32.xlu0 %v496, 16
    %v794 = vpop.permute.xlu0 %793
    %795 = vrot.lane.b32.xlu0 %v514, 16
    %v796 = vpop.permute.xlu0 %795
    %799 = vrot.lane.b32.xlu0 %v505, 112
    %v800 = vpop.permute.xlu0 %799
    %801 = vrot.lane.b32.xlu0 %v523, 112
    %v802 = vpop.permute.xlu0 %801
    %803 = vrot.lane.b32.xlu0 %v505, 96
    %v804 = vpop.permute.xlu0 %803
    %805 = vrot.lane.b32.xlu0 %v523, 96
    %v806 = vpop.permute.xlu0 %805
    %807 = vrot.lane.b32.xlu0 %v505, 80
    %v808 = vpop.permute.xlu0 %807
    %809 = vrot.lane.b32.xlu0 %v523, 80
    %v810 = vpop.permute.xlu0 %809
    %811 = vrot.lane.b32.xlu0 %v505, 64
    %v812 = vpop.permute.xlu0 %811
    %813 = vrot.lane.b32.xlu0 %v523, 64
    %v814 = vpop.permute.xlu0 %813
    %815 = vrot.lane.b32.xlu0 %v505, 48
    %v816 = vpop.permute.xlu0 %815
    %817 = vrot.lane.b32.xlu0 %v523, 48
    %v818 = vpop.permute.xlu0 %817
    %819 = vrot.lane.b32.xlu0 %v505, 32
    %v820 = vpop.permute.xlu0 %819
    %821 = vrot.lane.b32.xlu0 %v523, 32
    %v822 = vpop.permute.xlu0 %821
    %823 = vrot.lane.b32.xlu0 %v505, 16
    %v824 = vpop.permute.xlu0 %823
    %825 = vrot.lane.b32.xlu0 %v523, 16
    %v826 = vpop.permute.xlu0 %825
    %v827 = vrot.slane %v514, 7
    %v828 = vsel %vm172, %v827, %v496
    %v829 = vrot.slane %v772, 7
    %v830 = vsel %vm172, %v829, %v770
    %v831 = vrot.slane %v776, 7
    %v832 = vsel %vm172, %v831, %v774
    %v833 = vrot.slane %v780, 7
    %v834 = vsel %vm172, %v833, %v778
    %v835 = vrot.slane %v784, 7
    %v836 = vsel %vm172, %v835, %v782
    %v837 = vrot.slane %v788, 7
    %v838 = vsel %vm172, %v837, %v786
    %v839 = vrot.slane %v792, 7
    %v840 = vsel %vm172, %v839, %v790
    %v841 = vrot.slane %v796, 7
    %v842 = vsel %vm172, %v841, %v794
    %v843 = vrot.slane %v523, 7
    %v844 = vsel %vm172, %v843, %v505
    %v845 = vrot.slane %v802, 7
    %v846 = vsel %vm172, %v845, %v800
    %v847 = vrot.slane %v806, 7
    %v848 = vsel %vm172, %v847, %v804
    %v849 = vrot.slane %v810, 7
    %v850 = vsel %vm172, %v849, %v808
    %v851 = vrot.slane %v814, 7
    %v852 = vsel %vm172, %v851, %v812
    %v853 = vrot.slane %v818, 7
    %v854 = vsel %vm172, %v853, %v816
    %v855 = vrot.slane %v822, 7
    %v856 = vsel %vm172, %v855, %v820
    %v857 = vrot.slane %v826, 7
    %v858 = vsel %vm172, %v857, %v824
    %v875 = vcombine.low %v828, %v832
    %v877 = vunpack.c.l.s4 1983009808
    %v878 = vunpack.c.0.s8 %v877
    %v879 = vlaneseq
    %v880 = vshrl.u32 %v879, 7
    %v881 = vsub.s32 %v878, %v880
    %v882 = vrot.slane %v875, %v881
    %v883 = vcombine.low %v830, %v834
    %v885 = vunpack.c.l.s4 1983009808
    %v886 = vunpack.c.0.s8 %v885
    %v887 = vlaneseq
    %v888 = vshrl.u32 %v887, 7
    %v889 = vsub.s32 %v886, %v888
    %v890 = vrot.slane %v883, %v889
    %v891 = vcombine.low %v836, %v840
    %v893 = vunpack.c.l.s4 1983009808
    %v894 = vunpack.c.0.s8 %v893
    %v895 = vlaneseq
    %v896 = vshrl.u32 %v895, 7
    %v897 = vsub.s32 %v894, %v896
    %v898 = vrot.slane %v891, %v897
    %v899 = vcombine.low %v838, %v842
    %v901 = vunpack.c.l.s4 1983009808
    %v902 = vunpack.c.0.s8 %v901
    %v903 = vlaneseq
    %v904 = vshrl.u32 %v903, 7
    %v905 = vsub.s32 %v902, %v904
    %v906 = vrot.slane %v899, %v905
    %v907 = vcombine.low %v882, %v890
    %v909 = vunpack.c.l.s4 1934713408
    %v910 = vunpack.c.0.s8 %v909
    %v911 = vlaneseq
    %v912 = vshrl.u32 %v911, 7
    %v913 = vsub.s32 %v910, %v912
    %v914 = vrot.slane %v907, %v913
    %v915 = vcombine.low %v898, %v906
    %v917 = vunpack.c.l.s4 1934713408
    %v918 = vunpack.c.0.s8 %v917
    %v919 = vlaneseq
    %v920 = vshrl.u32 %v919, 7
    %v921 = vsub.s32 %v918, %v920
    %v922 = vrot.slane %v915, %v921
    %v923 = vcombine.low %v914, %v922
    %v924 = vcombine.high %v914, %v922
    %v925 = vcombine.low %v844, %v848
    %v927 = vunpack.c.l.s4 1983009808
    %v928 = vunpack.c.0.s8 %v927
    %v929 = vlaneseq
    %v930 = vshrl.u32 %v929, 7
    %v931 = vsub.s32 %v928, %v930
    %v932 = vrot.slane %v925, %v931
    %v933 = vcombine.low %v846, %v850
    %v935 = vunpack.c.l.s4 1983009808
    %v936 = vunpack.c.0.s8 %v935
    %v937 = vlaneseq
    %v938 = vshrl.u32 %v937, 7
    %v939 = vsub.s32 %v936, %v938
    %v940 = vrot.slane %v933, %v939
    %v941 = vcombine.low %v852, %v856
    %v943 = vunpack.c.l.s4 1983009808
    %v944 = vunpack.c.0.s8 %v943
    %v945 = vlaneseq
    %v946 = vshrl.u32 %v945, 7
    %v947 = vsub.s32 %v944, %v946
    %v948 = vrot.slane %v941, %v947
    %v949 = vcombine.low %v854, %v858
    %v951 = vunpack.c.l.s4 1983009808
    %v952 = vunpack.c.0.s8 %v951
    %v953 = vlaneseq
    %v954 = vshrl.u32 %v953, 7
    %v955 = vsub.s32 %v952, %v954
    %v956 = vrot.slane %v949, %v955
    %v957 = vcombine.low %v932, %v940
    %v959 = vunpack.c.l.s4 1934713408
    %v960 = vunpack.c.0.s8 %v959
    %v961 = vlaneseq
    %v962 = vshrl.u32 %v961, 7
    %v963 = vsub.s32 %v960, %v962
    %v964 = vrot.slane %v957, %v963
    %v965 = vcombine.low %v948, %v956
    %v967 = vunpack.c.l.s4 1934713408
    %v968 = vunpack.c.0.s8 %v967
    %v969 = vlaneseq
    %v970 = vshrl.u32 %v969, 7
    %v971 = vsub.s32 %v968, %v970
    %v972 = vrot.slane %v965, %v971
    %v973 = vcombine.low %v964, %v972
    %v974 = vcombine.high %v964, %v972
    %979 = vrot.lane.b32.xlu0 %v923, 3
    %v980 = vpop.permute.xlu0 %979
    %981 = vrot.lane.b32.xlu0 %v973, 3
    %v982 = vpop.permute.xlu0 %981
    %983 = vrot.lane.b32.xlu0 %v924, 3
    %v984 = vpop.permute.xlu0 %983
    %985 = vrot.lane.b32.xlu0 %v974, 3
    %v986 = vpop.permute.xlu0 %985
    %s991 = scalar_lea.vmem [#allocation2], 24
    %992 = vst.msk [vmem:[%s991 + $0x3] sm:$0xff] %vm762, %v980
    %993 = vst.msk [vmem:[%s991 + $0xb] sm:$0xff] %vm762, %v982
    %994 = vst.msk [vmem:[%s991 + $0x33] sm:$0xff] %vm762, %v984
    %995 = vst.msk [vmem:[%s991 + $0x3b] sm:$0xff] %vm762, %v986
    %v996 = vld [vmem:[#allocation2] sm:$0xff]
    %v997 = vld [vmem:[#allocation2 + $0x8] sm:$0xff]
    %v998 = vld [vmem:[#allocation2 + $0x10] sm:$0x3f]
    %v999 = vld [vmem:[#allocation2 + $0x18] sm:$0xff]
    %v1000 = vld [vmem:[#allocation2 + $0x20] sm:$0xff]
    %v1001 = vld [vmem:[#allocation2 + $0x28] sm:$0x3f]
    %v1002 = vld [vmem:[#allocation2 + $0x30] sm:$0xff]
    %v1003 = vld [vmem:[#allocation2 + $0x38] sm:$0xff]
    %v1004 = vld [vmem:[#allocation2 + $0x40] sm:$0x3f]
    %v1005 = vld [vmem:[#allocation2 + $0x48] sm:$0xff]
    %v1006 = vld [vmem:[#allocation2 + $0x50] sm:$0xff]
    %v1007 = vld [vmem:[#allocation2 + $0x58] sm:$0x3f]
    %s1008 = sld [smem:[#allocation7]]
    %s1009 = sld [smem:[#allocation7 + $0x31]]
    %v1010 = vstv %s1008
    %v1011 = vstv %s1009
    %v1012 = vmul.f32 %v1010, %v996
    %v1013 = vmul.f32 %v1010, %v997
    %v1014 = vmul.f32 %v1011, %v999
    %v1015 = vmul.f32 %v1011, %v1000
    %v1016 = vmul.f32 %v1010, %v1002
    %v1017 = vmul.f32 %v1010, %v1003
    %v1018 = vmul.f32 %v1011, %v1005
    %v1019 = vmul.f32 %v1011, %v1006
    %v1020 = vadd.f32 %v1012, 0.0
    %v1021 = vadd.f32 %v1013, 0.0
    %v1022 = vadd.f32 %v1014, 0.0
    %v1023 = vadd.f32 %v1015, 0.0
    %v1024 = vadd.f32 %v1016, 0.0
    %v1025 = vadd.f32 %v1017, 0.0
    %v1026 = vadd.f32 %v1018, 0.0
    %v1027 = vadd.f32 %v1019, 0.0
    %s1028 = sld [smem:[#allocation7 + $0x1]]
    %s1029 = sld [smem:[#allocation7 + $0x32]]
    %v1030 = vstv %s1028
    %v1031 = vstv %s1029
    %v1032 = vmul.f32 %v1030, %v996
    %v1033 = vmul.f32 %v1030, %v997
    %v1034 = vmul.f32 %v1031, %v999
    %v1035 = vmul.f32 %v1031, %v1000
    %v1036 = vmul.f32 %v1030, %v1002
    %v1037 = vmul.f32 %v1030, %v1003
    %v1038 = vmul.f32 %v1031, %v1005
    %v1039 = vmul.f32 %v1031, %v1006
    %1048 = vrot.lane.b32.xlu0 %v1032, 127
    %v1049 = vpop.permute.xlu0 %1048
    %1050 = vrot.lane.b32.xlu0 %v1033, 127
    %v1051 = vpop.permute.xlu0 %1050
    %1052 = vrot.lane.b32.xlu0 %v1034, 127
    %v1053 = vpop.permute.xlu0 %1052
    %1054 = vrot.lane.b32.xlu0 %v1035, 127
    %v1055 = vpop.permute.xlu0 %1054
    %1056 = vrot.lane.b32.xlu0 %v1036, 127
    %v1057 = vpop.permute.xlu0 %1056
    %1058 = vrot.lane.b32.xlu0 %v1037, 127
    %v1059 = vpop.permute.xlu0 %1058
    %1060 = vrot.lane.b32.xlu0 %v1038, 127
    %v1061 = vpop.permute.xlu0 %1060
    %1062 = vrot.lane.b32.xlu0 %v1039, 127
    %v1063 = vpop.permute.xlu0 %1062
    %v1072 = vadd.f32 %v1020, %v1049
    %v1073 = vadd.f32 %v1021, %v1051
    %v1074 = vadd.f32 %v1022, %v1053
    %v1075 = vadd.f32 %v1023, %v1055
    %v1076 = vadd.f32 %v1024, %v1057
    %v1077 = vadd.f32 %v1025, %v1059
    %v1078 = vadd.f32 %v1026, %v1061
    %v1079 = vadd.f32 %v1027, %v1063
    %s1080 = sld [smem:[#allocation7 + $0x2]]
    %s1081 = sld [smem:[#allocation7 + $0x33]]
    %v1082 = vstv %s1080
    %v1083 = vstv %s1081
    %v1084 = vmul.f32 %v1082, %v996
    %v1085 = vmul.f32 %v1082, %v997
    %v1086 = vmul.f32 %v1083, %v999
    %v1087 = vmul.f32 %v1083, %v1000
    %v1088 = vmul.f32 %v1082, %v1002
    %v1089 = vmul.f32 %v1082, %v1003
    %v1090 = vmul.f32 %v1083, %v1005
    %v1091 = vmul.f32 %v1083, %v1006
    %1100 = vrot.lane.b32.xlu0 %v1084, 126
    %v1101 = vpop.permute.xlu0 %1100
    %1102 = vrot.lane.b32.xlu0 %v1085, 126
    %v1103 = vpop.permute.xlu0 %1102
    %1104 = vrot.lane.b32.xlu0 %v1086, 126
    %v1105 = vpop.permute.xlu0 %1104
    %1106 = vrot.lane.b32.xlu0 %v1087, 126
    %v1107 = vpop.permute.xlu0 %1106
    %1108 = vrot.lane.b32.xlu0 %v1088, 126
    %v1109 = vpop.permute.xlu0 %1108
    %1110 = vrot.lane.b32.xlu0 %v1089, 126
    %v1111 = vpop.permute.xlu0 %1110
    %1112 = vrot.lane.b32.xlu0 %v1090, 126
    %v1113 = vpop.permute.xlu0 %1112
    %1114 = vrot.lane.b32.xlu0 %v1091, 126
    %v1115 = vpop.permute.xlu0 %1114
    %v1124 = vadd.f32 %v1072, %v1101
    %v1125 = vadd.f32 %v1073, %v1103
    %v1126 = vadd.f32 %v1074, %v1105
    %v1127 = vadd.f32 %v1075, %v1107
    %v1128 = vadd.f32 %v1076, %v1109
    %v1129 = vadd.f32 %v1077, %v1111
    %v1130 = vadd.f32 %v1078, %v1113
    %v1131 = vadd.f32 %v1079, %v1115
    %s1132 = sld [smem:[#allocation7 + $0x3]]
    %s1133 = sld [smem:[#allocation7 + $0x34]]
    %v1134 = vstv %s1132
    %v1135 = vstv %s1133
    %v1136 = vmul.f32 %v1134, %v996
    %v1137 = vmul.f32 %v1134, %v997
    %v1138 = vmul.f32 %v1135, %v999
    %v1139 = vmul.f32 %v1135, %v1000
    %v1140 = vmul.f32 %v1134, %v1002
    %v1141 = vmul.f32 %v1134, %v1003
    %v1142 = vmul.f32 %v1135, %v1005
    %v1143 = vmul.f32 %v1135, %v1006
    %1152 = vrot.lane.b32.xlu0 %v1136, 125
    %v1153 = vpop.permute.xlu0 %1152
    %1154 = vrot.lane.b32.xlu0 %v1137, 125
    %v1155 = vpop.permute.xlu0 %1154
    %1156 = vrot.lane.b32.xlu0 %v1138, 125
    %v1157 = vpop.permute.xlu0 %1156
    %1158 = vrot.lane.b32.xlu0 %v1139, 125
    %v1159 = vpop.permute.xlu0 %1158
    %1160 = vrot.lane.b32.xlu0 %v1140, 125
    %v1161 = vpop.permute.xlu0 %1160
    %1162 = vrot.lane.b32.xlu0 %v1141, 125
    %v1163 = vpop.permute.xlu0 %1162
    %1164 = vrot.lane.b32.xlu0 %v1142, 125
    %v1165 = vpop.permute.xlu0 %1164
    %1166 = vrot.lane.b32.xlu0 %v1143, 125
    %v1167 = vpop.permute.xlu0 %1166
    %v1176 = vadd.f32 %v1124, %v1153
    %v1177 = vadd.f32 %v1125, %v1155
    %v1178 = vadd.f32 %v1126, %v1157
    %v1179 = vadd.f32 %v1127, %v1159
    %v1180 = vadd.f32 %v1128, %v1161
    %v1181 = vadd.f32 %v1129, %v1163
    %v1182 = vadd.f32 %v1130, %v1165
    %v1183 = vadd.f32 %v1131, %v1167
    %s1184 = sld [smem:[#allocation7 + $0x4]]
    %s1185 = sld [smem:[#allocation7 + $0x35]]
    %v1186 = vstv %s1184
    %v1187 = vstv %s1185
    %v1188 = vmul.f32 %v1186, %v996
    %v1189 = vmul.f32 %v1186, %v997
    %v1190 = vmul.f32 %v1187, %v999
    %v1191 = vmul.f32 %v1187, %v1000
    %v1192 = vmul.f32 %v1186, %v1002
    %v1193 = vmul.f32 %v1186, %v1003
    %v1194 = vmul.f32 %v1187, %v1005
    %v1195 = vmul.f32 %v1187, %v1006
    %1204 = vrot.lane.b32.xlu0 %v1188, 124
    %v1205 = vpop.permute.xlu0 %1204
    %1206 = vrot.lane.b32.xlu0 %v1189, 124
    %v1207 = vpop.permute.xlu0 %1206
    %1208 = vrot.lane.b32.xlu0 %v1190, 124
    %v1209 = vpop.permute.xlu0 %1208
    %1210 = vrot.lane.b32.xlu0 %v1191, 124
    %v1211 = vpop.permute.xlu0 %1210
    %1212 = vrot.lane.b32.xlu0 %v1192, 124
    %v1213 = vpop.permute.xlu0 %1212
    %1214 = vrot.lane.b32.xlu0 %v1193, 124
    %v1215 = vpop.permute.xlu0 %1214
    %1216 = vrot.lane.b32.xlu0 %v1194, 124
    %v1217 = vpop.permute.xlu0 %1216
    %1218 = vrot.lane.b32.xlu0 %v1195, 124
    %v1219 = vpop.permute.xlu0 %1218
    %v1228 = vadd.f32 %v1176, %v1205
    %v1229 = vadd.f32 %v1177, %v1207
    %v1230 = vadd.f32 %v1178, %v1209
    %v1231 = vadd.f32 %v1179, %v1211
    %v1232 = vadd.f32 %v1180, %v1213
    %v1233 = vadd.f32 %v1181, %v1215
    %v1234 = vadd.f32 %v1182, %v1217
    %v1235 = vadd.f32 %v1183, %v1219
    %s1236 = sld [smem:[#allocation7 + $0x5]]
    %s1237 = sld [smem:[#allocation7 + $0x36]]
    %v1238 = vstv %s1236
    %v1239 = vstv %s1237
    %v1240 = vmul.f32 %v1238, %v996
    %v1241 = vmul.f32 %v1238, %v997
    %v1242 = vmul.f32 %v1239, %v999
    %v1243 = vmul.f32 %v1239, %v1000
    %v1244 = vmul.f32 %v1238, %v1002
    %v1245 = vmul.f32 %v1238, %v1003
    %v1246 = vmul.f32 %v1239, %v1005
    %v1247 = vmul.f32 %v1239, %v1006
    %1256 = vrot.lane.b32.xlu0 %v1240, 123
    %v1257 = vpop.permute.xlu0 %1256
    %1258 = vrot.lane.b32.xlu0 %v1241, 123
    %v1259 = vpop.permute.xlu0 %1258
    %1260 = vrot.lane.b32.xlu0 %v1242, 123
    %v1261 = vpop.permute.xlu0 %1260
    %1262 = vrot.lane.b32.xlu0 %v1243, 123
    %v1263 = vpop.permute.xlu0 %1262
    %1264 = vrot.lane.b32.xlu0 %v1244, 123
    %v1265 = vpop.permute.xlu0 %1264
    %1266 = vrot.lane.b32.xlu0 %v1245, 123
    %v1267 = vpop.permute.xlu0 %1266
    %1268 = vrot.lane.b32.xlu0 %v1246, 123
    %v1269 = vpop.permute.xlu0 %1268
    %1270 = vrot.lane.b32.xlu0 %v1247, 123
    %v1271 = vpop.permute.xlu0 %1270
    %v1280 = vadd.f32 %v1228, %v1257
    %v1281 = vadd.f32 %v1229, %v1259
    %v1282 = vadd.f32 %v1230, %v1261
    %v1283 = vadd.f32 %v1231, %v1263
    %v1284 = vadd.f32 %v1232, %v1265
    %v1285 = vadd.f32 %v1233, %v1267
    %v1286 = vadd.f32 %v1234, %v1269
    %v1287 = vadd.f32 %v1235, %v1271
    %s1288 = sld [smem:[#allocation7 + $0x6]]
    %s1289 = sld [smem:[#allocation7 + $0x37]]
    %v1290 = vstv %s1288
    %v1291 = vstv %s1289
    %v1292 = vmul.f32 %v1290, %v996
    %v1293 = vmul.f32 %v1290, %v997
    %v1294 = vmul.f32 %v1291, %v999
    %v1295 = vmul.f32 %v1291, %v1000
    %v1296 = vmul.f32 %v1290, %v1002
    %v1297 = vmul.f32 %v1290, %v1003
    %v1298 = vmul.f32 %v1291, %v1005
    %v1299 = vmul.f32 %v1291, %v1006
    %1308 = vrot.lane.b32.xlu0 %v1292, 122
    %v1309 = vpop.permute.xlu0 %1308
    %1310 = vrot.lane.b32.xlu0 %v1293, 122
    %v1311 = vpop.permute.xlu0 %1310
    %1312 = vrot.lane.b32.xlu0 %v1294, 122
    %v1313 = vpop.permute.xlu0 %1312
    %1314 = vrot.lane.b32.xlu0 %v1295, 122
    %v1315 = vpop.permute.xlu0 %1314
    %1316 = vrot.lane.b32.xlu0 %v1296, 122
    %v1317 = vpop.permute.xlu0 %1316
    %1318 = vrot.lane.b32.xlu0 %v1297, 122
    %v1319 = vpop.permute.xlu0 %1318
    %1320 = vrot.lane.b32.xlu0 %v1298, 122
    %v1321 = vpop.permute.xlu0 %1320
    %1322 = vrot.lane.b32.xlu0 %v1299, 122
    %v1323 = vpop.permute.xlu0 %1322
    %v1332 = vadd.f32 %v1280, %v1309
    %v1333 = vadd.f32 %v1281, %v1311
    %v1334 = vadd.f32 %v1282, %v1313
    %v1335 = vadd.f32 %v1283, %v1315
    %v1336 = vadd.f32 %v1284, %v1317
    %v1337 = vadd.f32 %v1285, %v1319
    %v1338 = vadd.f32 %v1286, %v1321
    %v1339 = vadd.f32 %v1287, %v1323
    %s1340 = sld [smem:[#allocation7 + $0x7]]
    %s1341 = sld [smem:[#allocation7 + $0x38]]
    %v1342 = vstv %s1340
    %v1343 = vstv %s1341
    %v1344 = vmul.f32 %v1342, %v996
    %v1345 = vmul.f32 %v1342, %v997
    %v1346 = vmul.f32 %v1342, %v998
    %v1347 = vmul.f32 %v1343, %v999
    %v1348 = vmul.f32 %v1343, %v1000
    %v1349 = vmul.f32 %v1343, %v1001
    %v1350 = vmul.f32 %v1342, %v1002
    %v1351 = vmul.f32 %v1342, %v1003
    %v1352 = vmul.f32 %v1342, %v1004
    %v1353 = vmul.f32 %v1343, %v1005
    %v1354 = vmul.f32 %v1343, %v1006
    %v1355 = vmul.f32 %v1343, %v1007
    %vm1368 = vcmask 1046528
    %v1369 = vrot.slane %v1344, 1
    %v1370 = vrot.slane %v1345, 1
    %v1371 = vsel %vm1368, %v1369, %v1370
    %v1372 = vrot.slane %v1346, 1
    %v1373 = vsel %vm1368, %v1370, %v1372
    %v1374 = vrot.slane %v1347, 1
    %v1375 = vrot.slane %v1348, 1
    %v1376 = vsel %vm1368, %v1374, %v1375
    %v1377 = vrot.slane %v1349, 1
    %v1378 = vsel %vm1368, %v1375, %v1377
    %v1379 = vrot.slane %v1350, 1
    %v1380 = vrot.slane %v1351, 1
    %v1381 = vsel %vm1368, %v1379, %v1380
    %v1382 = vrot.slane %v1352, 1
    %v1383 = vsel %vm1368, %v1380, %v1382
    %v1384 = vrot.slane %v1353, 1
    %v1385 = vrot.slane %v1354, 1
    %v1386 = vsel %vm1368, %v1384, %v1385
    %v1387 = vrot.slane %v1355, 1
    %v1388 = vsel %vm1368, %v1385, %v1387
    %v1397 = vadd.f32 %v1332, %v1371
    %v1398 = vadd.f32 %v1333, %v1373
    %v1399 = vadd.f32 %v1334, %v1376
    %v1400 = vadd.f32 %v1335, %v1378
    %v1401 = vadd.f32 %v1336, %v1381
    %v1402 = vadd.f32 %v1337, %v1383
    %v1403 = vadd.f32 %v1338, %v1386
    %v1404 = vadd.f32 %v1339, %v1388
    %s1405 = sld [smem:[#allocation7 + $0x8]]
    %s1406 = sld [smem:[#allocation7 + $0x39]]
    %v1407 = vstv %s1405
    %v1408 = vstv %s1406
    %v1409 = vmul.f32 %v1407, %v996
    %v1410 = vmul.f32 %v1407, %v997
    %v1411 = vmul.f32 %v1407, %v998
    %v1412 = vmul.f32 %v1408, %v999
    %v1413 = vmul.f32 %v1408, %v1000
    %v1414 = vmul.f32 %v1408, %v1001
    %v1415 = vmul.f32 %v1407, %v1002
    %v1416 = vmul.f32 %v1407, %v1003
    %v1417 = vmul.f32 %v1407, %v1004
    %v1418 = vmul.f32 %v1408, %v1005
    %v1419 = vmul.f32 %v1408, %v1006
    %v1420 = vmul.f32 %v1408, %v1007
    %v1433 = vrot.slane %v1409, 1
    %v1434 = vrot.slane %v1410, 1
    %v1435 = vsel %vm1368, %v1433, %v1434
    %v1436 = vrot.slane %v1411, 1
    %v1437 = vsel %vm1368, %v1434, %v1436
    %v1438 = vrot.slane %v1412, 1
    %v1439 = vrot.slane %v1413, 1
    %v1440 = vsel %vm1368, %v1438, %v1439
    %v1441 = vrot.slane %v1414, 1
    %v1442 = vsel %vm1368, %v1439, %v1441
    %v1443 = vrot.slane %v1415, 1
    %v1444 = vrot.slane %v1416, 1
    %v1445 = vsel %vm1368, %v1443, %v1444
    %v1446 = vrot.slane %v1417, 1
    %v1447 = vsel %vm1368, %v1444, %v1446
    %v1448 = vrot.slane %v1418, 1
    %v1449 = vrot.slane %v1419, 1
    %v1450 = vsel %vm1368, %v1448, %v1449
    %v1451 = vrot.slane %v1420, 1
    %v1452 = vsel %vm1368, %v1449, %v1451
    %1453 = vrot.lane.b32.xlu0 %v1435, 127
    %v1454 = vpop.permute.xlu0 %1453
    %1455 = vrot.lane.b32.xlu0 %v1437, 127
    %v1456 = vpop.permute.xlu0 %1455
    %1457 = vrot.lane.b32.xlu0 %v1440, 127
    %v1458 = vpop.permute.xlu0 %1457
    %1459 = vrot.lane.b32.xlu0 %v1442, 127
    %v1460 = vpop.permute.xlu0 %1459
    %1461 = vrot.lane.b32.xlu0 %v1445, 127
    %v1462 = vpop.permute.xlu0 %1461
    %1463 = vrot.lane.b32.xlu0 %v1447, 127
    %v1464 = vpop.permute.xlu0 %1463
    %1465 = vrot.lane.b32.xlu0 %v1450, 127
    %v1466 = vpop.permute.xlu0 %1465
    %1467 = vrot.lane.b32.xlu0 %v1452, 127
    %v1468 = vpop.permute.xlu0 %1467
    %v1477 = vadd.f32 %v1397, %v1454
    %v1478 = vadd.f32 %v1398, %v1456
    %v1479 = vadd.f32 %v1399, %v1458
    %v1480 = vadd.f32 %v1400, %v1460
    %v1481 = vadd.f32 %v1401, %v1462
    %v1482 = vadd.f32 %v1402, %v1464
    %v1483 = vadd.f32 %v1403, %v1466
    %v1484 = vadd.f32 %v1404, %v1468
    %s1485 = sld [smem:[#allocation7 + $0x9]]
    %s1486 = sld [smem:[#allocation7 + $0x3a]]
    %v1487 = vstv %s1485
    %v1488 = vstv %s1486
    %v1489 = vmul.f32 %v1487, %v996
    %v1490 = vmul.f32 %v1487, %v997
    %v1491 = vmul.f32 %v1487, %v998
    %v1492 = vmul.f32 %v1488, %v999
    %v1493 = vmul.f32 %v1488, %v1000
    %v1494 = vmul.f32 %v1488, %v1001
    %v1495 = vmul.f32 %v1487, %v1002
    %v1496 = vmul.f32 %v1487, %v1003
    %v1497 = vmul.f32 %v1487, %v1004
    %v1498 = vmul.f32 %v1488, %v1005
    %v1499 = vmul.f32 %v1488, %v1006
    %v1500 = vmul.f32 %v1488, %v1007
    %v1513 = vrot.slane %v1489, 1
    %v1514 = vrot.slane %v1490, 1
    %v1515 = vsel %vm1368, %v1513, %v1514
    %v1516 = vrot.slane %v1491, 1
    %v1517 = vsel %vm1368, %v1514, %v1516
    %v1518 = vrot.slane %v1492, 1
    %v1519 = vrot.slane %v1493, 1
    %v1520 = vsel %vm1368, %v1518, %v1519
    %v1521 = vrot.slane %v1494, 1
    %v1522 = vsel %vm1368, %v1519, %v1521
    %v1523 = vrot.slane %v1495, 1
    %v1524 = vrot.slane %v1496, 1
    %v1525 = vsel %vm1368, %v1523, %v1524
    %v1526 = vrot.slane %v1497, 1
    %v1527 = vsel %vm1368, %v1524, %v1526
    %v1528 = vrot.slane %v1498, 1
    %v1529 = vrot.slane %v1499, 1
    %v1530 = vsel %vm1368, %v1528, %v1529
    %v1531 = vrot.slane %v1500, 1
    %v1532 = vsel %vm1368, %v1529, %v1531
    %1533 = vrot.lane.b32.xlu0 %v1515, 126
    %v1534 = vpop.permute.xlu0 %1533
    %1535 = vrot.lane.b32.xlu0 %v1517, 126
    %v1536 = vpop.permute.xlu0 %1535
    %1537 = vrot.lane.b32.xlu0 %v1520, 126
    %v1538 = vpop.permute.xlu0 %1537
    %1539 = vrot.lane.b32.xlu0 %v1522, 126
    %v1540 = vpop.permute.xlu0 %1539
    %1541 = vrot.lane.b32.xlu0 %v1525, 126
    %v1542 = vpop.permute.xlu0 %1541
    %1543 = vrot.lane.b32.xlu0 %v1527, 126
    %v1544 = vpop.permute.xlu0 %1543
    %1545 = vrot.lane.b32.xlu0 %v1530, 126
    %v1546 = vpop.permute.xlu0 %1545
    %1547 = vrot.lane.b32.xlu0 %v1532, 126
    %v1548 = vpop.permute.xlu0 %1547
    %v1557 = vadd.f32 %v1477, %v1534
    %v1558 = vadd.f32 %v1478, %v1536
    %v1559 = vadd.f32 %v1479, %v1538
    %v1560 = vadd.f32 %v1480, %v1540
    %v1561 = vadd.f32 %v1481, %v1542
    %v1562 = vadd.f32 %v1482, %v1544
    %v1563 = vadd.f32 %v1483, %v1546
    %v1564 = vadd.f32 %v1484, %v1548
    %s1565 = sld [smem:[#allocation7 + $0xa]]
    %s1566 = sld [smem:[#allocation7 + $0x3b]]
    %v1567 = vstv %s1565
    %v1568 = vstv %s1566
    %v1569 = vmul.f32 %v1567, %v996
    %v1570 = vmul.f32 %v1567, %v997
    %v1571 = vmul.f32 %v1567, %v998
    %v1572 = vmul.f32 %v1568, %v999
    %v1573 = vmul.f32 %v1568, %v1000
    %v1574 = vmul.f32 %v1568, %v1001
    %v1575 = vmul.f32 %v1567, %v1002
    %v1576 = vmul.f32 %v1567, %v1003
    %v1577 = vmul.f32 %v1567, %v1004
    %v1578 = vmul.f32 %v1568, %v1005
    %v1579 = vmul.f32 %v1568, %v1006
    %v1580 = vmul.f32 %v1568, %v1007
    %v1593 = vrot.slane %v1569, 1
    %v1594 = vrot.slane %v1570, 1
    %v1595 = vsel %vm1368, %v1593, %v1594
    %v1596 = vrot.slane %v1571, 1
    %v1597 = vsel %vm1368, %v1594, %v1596
    %v1598 = vrot.slane %v1572, 1
    %v1599 = vrot.slane %v1573, 1
    %v1600 = vsel %vm1368, %v1598, %v1599
    %v1601 = vrot.slane %v1574, 1
    %v1602 = vsel %vm1368, %v1599, %v1601
    %v1603 = vrot.slane %v1575, 1
    %v1604 = vrot.slane %v1576, 1
    %v1605 = vsel %vm1368, %v1603, %v1604
    %v1606 = vrot.slane %v1577, 1
    %v1607 = vsel %vm1368, %v1604, %v1606
    %v1608 = vrot.slane %v1578, 1
    %v1609 = vrot.slane %v1579, 1
    %v1610 = vsel %vm1368, %v1608, %v1609
    %v1611 = vrot.slane %v1580, 1
    %v1612 = vsel %vm1368, %v1609, %v1611
    %1613 = vrot.lane.b32.xlu0 %v1595, 125
    %v1614 = vpop.permute.xlu0 %1613
    %1615 = vrot.lane.b32.xlu0 %v1597, 125
    %v1616 = vpop.permute.xlu0 %1615
    %1617 = vrot.lane.b32.xlu0 %v1600, 125
    %v1618 = vpop.permute.xlu0 %1617
    %1619 = vrot.lane.b32.xlu0 %v1602, 125
    %v1620 = vpop.permute.xlu0 %1619
    %1621 = vrot.lane.b32.xlu0 %v1605, 125
    %v1622 = vpop.permute.xlu0 %1621
    %1623 = vrot.lane.b32.xlu0 %v1607, 125
    %v1624 = vpop.permute.xlu0 %1623
    %1625 = vrot.lane.b32.xlu0 %v1610, 125
    %v1626 = vpop.permute.xlu0 %1625
    %1627 = vrot.lane.b32.xlu0 %v1612, 125
    %v1628 = vpop.permute.xlu0 %1627
    %v1637 = vadd.f32 %v1557, %v1614
    %v1638 = vadd.f32 %v1558, %v1616
    %v1639 = vadd.f32 %v1559, %v1618
    %v1640 = vadd.f32 %v1560, %v1620
    %v1641 = vadd.f32 %v1561, %v1622
    %v1642 = vadd.f32 %v1562, %v1624
    %v1643 = vadd.f32 %v1563, %v1626
    %v1644 = vadd.f32 %v1564, %v1628
    %s1645 = sld [smem:[#allocation7 + $0xb]]
    %s1646 = sld [smem:[#allocation7 + $0x3c]]
    %v1647 = vstv %s1645
    %v1648 = vstv %s1646
    %v1649 = vmul.f32 %v1647, %v996
    %v1650 = vmul.f32 %v1647, %v997
    %v1651 = vmul.f32 %v1647, %v998
    %v1652 = vmul.f32 %v1648, %v999
    %v1653 = vmul.f32 %v1648, %v1000
    %v1654 = vmul.f32 %v1648, %v1001
    %v1655 = vmul.f32 %v1647, %v1002
    %v1656 = vmul.f32 %v1647, %v1003
    %v1657 = vmul.f32 %v1647, %v1004
    %v1658 = vmul.f32 %v1648, %v1005
    %v1659 = vmul.f32 %v1648, %v1006
    %v1660 = vmul.f32 %v1648, %v1007
    %v1673 = vrot.slane %v1649, 1
    %v1674 = vrot.slane %v1650, 1
    %v1675 = vsel %vm1368, %v1673, %v1674
    %v1676 = vrot.slane %v1651, 1
    %v1677 = vsel %vm1368, %v1674, %v1676
    %v1678 = vrot.slane %v1652, 1
    %v1679 = vrot.slane %v1653, 1
    %v1680 = vsel %vm1368, %v1678, %v1679
    %v1681 = vrot.slane %v1654, 1
    %v1682 = vsel %vm1368, %v1679, %v1681
    %v1683 = vrot.slane %v1655, 1
    %v1684 = vrot.slane %v1656, 1
    %v1685 = vsel %vm1368, %v1683, %v1684
    %v1686 = vrot.slane %v1657, 1
    %v1687 = vsel %vm1368, %v1684, %v1686
    %v1688 = vrot.slane %v1658, 1
    %v1689 = vrot.slane %v1659, 1
    %v1690 = vsel %vm1368, %v1688, %v1689
    %v1691 = vrot.slane %v1660, 1
    %v1692 = vsel %vm1368, %v1689, %v1691
    %1693 = vrot.lane.b32.xlu0 %v1675, 124
    %v1694 = vpop.permute.xlu0 %1693
    %1695 = vrot.lane.b32.xlu0 %v1677, 124
    %v1696 = vpop.permute.xlu0 %1695
    %1697 = vrot.lane.b32.xlu0 %v1680, 124
    %v1698 = vpop.permute.xlu0 %1697
    %1699 = vrot.lane.b32.xlu0 %v1682, 124
    %v1700 = vpop.permute.xlu0 %1699
    %1701 = vrot.lane.b32.xlu0 %v1685, 124
    %v1702 = vpop.permute.xlu0 %1701
    %1703 = vrot.lane.b32.xlu0 %v1687, 124
    %v1704 = vpop.permute.xlu0 %1703
    %1705 = vrot.lane.b32.xlu0 %v1690, 124
    %v1706 = vpop.permute.xlu0 %1705
    %1707 = vrot.lane.b32.xlu0 %v1692, 124
    %v1708 = vpop.permute.xlu0 %1707
    %v1717 = vadd.f32 %v1637, %v1694
    %v1718 = vadd.f32 %v1638, %v1696
    %v1719 = vadd.f32 %v1639, %v1698
    %v1720 = vadd.f32 %v1640, %v1700
    %v1721 = vadd.f32 %v1641, %v1702
    %v1722 = vadd.f32 %v1642, %v1704
    %v1723 = vadd.f32 %v1643, %v1706
    %v1724 = vadd.f32 %v1644, %v1708
    %s1725 = sld [smem:[#allocation7 + $0xc]]
    %s1726 = sld [smem:[#allocation7 + $0x3d]]
    %v1727 = vstv %s1725
    %v1728 = vstv %s1726
    %v1729 = vmul.f32 %v1727, %v996
    %v1730 = vmul.f32 %v1727, %v997
    %v1731 = vmul.f32 %v1727, %v998
    %v1732 = vmul.f32 %v1728, %v999
    %v1733 = vmul.f32 %v1728, %v1000
    %v1734 = vmul.f32 %v1728, %v1001
    %v1735 = vmul.f32 %v1727, %v1002
    %v1736 = vmul.f32 %v1727, %v1003
    %v1737 = vmul.f32 %v1727, %v1004
    %v1738 = vmul.f32 %v1728, %v1005
    %v1739 = vmul.f32 %v1728, %v1006
    %v1740 = vmul.f32 %v1728, %v1007
    %v1753 = vrot.slane %v1729, 1
    %v1754 = vrot.slane %v1730, 1
    %v1755 = vsel %vm1368, %v1753, %v1754
    %v1756 = vrot.slane %v1731, 1
    %v1757 = vsel %vm1368, %v1754, %v1756
    %v1758 = vrot.slane %v1732, 1
    %v1759 = vrot.slane %v1733, 1
    %v1760 = vsel %vm1368, %v1758, %v1759
    %v1761 = vrot.slane %v1734, 1
    %v1762 = vsel %vm1368, %v1759, %v1761
    %v1763 = vrot.slane %v1735, 1
    %v1764 = vrot.slane %v1736, 1
    %v1765 = vsel %vm1368, %v1763, %v1764
    %v1766 = vrot.slane %v1737, 1
    %v1767 = vsel %vm1368, %v1764, %v1766
    %v1768 = vrot.slane %v1738, 1
    %v1769 = vrot.slane %v1739, 1
    %v1770 = vsel %vm1368, %v1768, %v1769
    %v1771 = vrot.slane %v1740, 1
    %v1772 = vsel %vm1368, %v1769, %v1771
    %1773 = vrot.lane.b32.xlu0 %v1755, 123
    %v1774 = vpop.permute.xlu0 %1773
    %1775 = vrot.lane.b32.xlu0 %v1757, 123
    %v1776 = vpop.permute.xlu0 %1775
    %1777 = vrot.lane.b32.xlu0 %v1760, 123
    %v1778 = vpop.permute.xlu0 %1777
    %1779 = vrot.lane.b32.xlu0 %v1762, 123
    %v1780 = vpop.permute.xlu0 %1779
    %1781 = vrot.lane.b32.xlu0 %v1765, 123
    %v1782 = vpop.permute.xlu0 %1781
    %1783 = vrot.lane.b32.xlu0 %v1767, 123
    %v1784 = vpop.permute.xlu0 %1783
    %1785 = vrot.lane.b32.xlu0 %v1770, 123
    %v1786 = vpop.permute.xlu0 %1785
    %1787 = vrot.lane.b32.xlu0 %v1772, 123
    %v1788 = vpop.permute.xlu0 %1787
    %v1797 = vadd.f32 %v1717, %v1774
    %v1798 = vadd.f32 %v1718, %v1776
    %v1799 = vadd.f32 %v1719, %v1778
    %v1800 = vadd.f32 %v1720, %v1780
    %v1801 = vadd.f32 %v1721, %v1782
    %v1802 = vadd.f32 %v1722, %v1784
    %v1803 = vadd.f32 %v1723, %v1786
    %v1804 = vadd.f32 %v1724, %v1788
    %s1805 = sld [smem:[#allocation7 + $0xd]]
    %s1806 = sld [smem:[#allocation7 + $0x3e]]
    %v1807 = vstv %s1805
    %v1808 = vstv %s1806
    %v1809 = vmul.f32 %v1807, %v996
    %v1810 = vmul.f32 %v1807, %v997
    %v1811 = vmul.f32 %v1807, %v998
    %v1812 = vmul.f32 %v1808, %v999
    %v1813 = vmul.f32 %v1808, %v1000
    %v1814 = vmul.f32 %v1808, %v1001
    %v1815 = vmul.f32 %v1807, %v1002
    %v1816 = vmul.f32 %v1807, %v1003
    %v1817 = vmul.f32 %v1807, %v1004
    %v1818 = vmul.f32 %v1808, %v1005
    %v1819 = vmul.f32 %v1808, %v1006
    %v1820 = vmul.f32 %v1808, %v1007
    %v1833 = vrot.slane %v1809, 1
    %v1834 = vrot.slane %v1810, 1
    %v1835 = vsel %vm1368, %v1833, %v1834
    %v1836 = vrot.slane %v1811, 1
    %v1837 = vsel %vm1368, %v1834, %v1836
    %v1838 = vrot.slane %v1812, 1
    %v1839 = vrot.slane %v1813, 1
    %v1840 = vsel %vm1368, %v1838, %v1839
    %v1841 = vrot.slane %v1814, 1
    %v1842 = vsel %vm1368, %v1839, %v1841
    %v1843 = vrot.slane %v1815, 1
    %v1844 = vrot.slane %v1816, 1
    %v1845 = vsel %vm1368, %v1843, %v1844
    %v1846 = vrot.slane %v1817, 1
    %v1847 = vsel %vm1368, %v1844, %v1846
    %v1848 = vrot.slane %v1818, 1
    %v1849 = vrot.slane %v1819, 1
    %v1850 = vsel %vm1368, %v1848, %v1849
    %v1851 = vrot.slane %v1820, 1
    %v1852 = vsel %vm1368, %v1849, %v1851
    %1853 = vrot.lane.b32.xlu0 %v1835, 122
    %v1854 = vpop.permute.xlu0 %1853
    %1855 = vrot.lane.b32.xlu0 %v1837, 122
    %v1856 = vpop.permute.xlu0 %1855
    %1857 = vrot.lane.b32.xlu0 %v1840, 122
    %v1858 = vpop.permute.xlu0 %1857
    %1859 = vrot.lane.b32.xlu0 %v1842, 122
    %v1860 = vpop.permute.xlu0 %1859
    %1861 = vrot.lane.b32.xlu0 %v1845, 122
    %v1862 = vpop.permute.xlu0 %1861
    %1863 = vrot.lane.b32.xlu0 %v1847, 122
    %v1864 = vpop.permute.xlu0 %1863
    %1865 = vrot.lane.b32.xlu0 %v1850, 122
    %v1866 = vpop.permute.xlu0 %1865
    %1867 = vrot.lane.b32.xlu0 %v1852, 122
    %v1868 = vpop.permute.xlu0 %1867
    %v1877 = vadd.f32 %v1797, %v1854
    %v1878 = vadd.f32 %v1798, %v1856
    %v1879 = vadd.f32 %v1799, %v1858
    %v1880 = vadd.f32 %v1800, %v1860
    %v1881 = vadd.f32 %v1801, %v1862
    %v1882 = vadd.f32 %v1802, %v1864
    %v1883 = vadd.f32 %v1803, %v1866
    %v1884 = vadd.f32 %v1804, %v1868
    %s1885 = sld [smem:[#allocation7 + $0xe]]
    %s1886 = sld [smem:[#allocation7 + $0x3f]]
    %v1887 = vstv %s1885
    %v1888 = vstv %s1886
    %v1889 = vmul.f32 %v1887, %v996
    %v1890 = vmul.f32 %v1887, %v997
    %v1891 = vmul.f32 %v1887, %v998
    %v1892 = vmul.f32 %v1888, %v999
    %v1893 = vmul.f32 %v1888, %v1000
    %v1894 = vmul.f32 %v1888, %v1001
    %v1895 = vmul.f32 %v1887, %v1002
    %v1896 = vmul.f32 %v1887, %v1003
    %v1897 = vmul.f32 %v1887, %v1004
    %v1898 = vmul.f32 %v1888, %v1005
    %v1899 = vmul.f32 %v1888, %v1006
    %v1900 = vmul.f32 %v1888, %v1007
    %vm1913 = vcmask 1045504
    %v1914 = vrot.slane %v1889, 2
    %v1915 = vrot.slane %v1890, 2
    %v1916 = vsel %vm1913, %v1914, %v1915
    %v1917 = vrot.slane %v1891, 2
    %v1918 = vsel %vm1913, %v1915, %v1917
    %v1919 = vrot.slane %v1892, 2
    %v1920 = vrot.slane %v1893, 2
    %v1921 = vsel %vm1913, %v1919, %v1920
    %v1922 = vrot.slane %v1894, 2
    %v1923 = vsel %vm1913, %v1920, %v1922
    %v1924 = vrot.slane %v1895, 2
    %v1925 = vrot.slane %v1896, 2
    %v1926 = vsel %vm1913, %v1924, %v1925
    %v1927 = vrot.slane %v1897, 2
    %v1928 = vsel %vm1913, %v1925, %v1927
    %v1929 = vrot.slane %v1898, 2
    %v1930 = vrot.slane %v1899, 2
    %v1931 = vsel %vm1913, %v1929, %v1930
    %v1932 = vrot.slane %v1900, 2
    %v1933 = vsel %vm1913, %v1930, %v1932
    %v1942 = vadd.f32 %v1877, %v1916
    %v1943 = vadd.f32 %v1878, %v1918
    %v1944 = vadd.f32 %v1879, %v1921
    %v1945 = vadd.f32 %v1880, %v1923
    %v1946 = vadd.f32 %v1881, %v1926
    %v1947 = vadd.f32 %v1882, %v1928
    %v1948 = vadd.f32 %v1883, %v1931
    %v1949 = vadd.f32 %v1884, %v1933
    %s1950 = sld [smem:[#allocation7 + $0xf]]
    %s1951 = sld [smem:[#allocation7 + $0x40]]
    %v1952 = vstv %s1950
    %v1953 = vstv %s1951
    %v1954 = vmul.f32 %v1952, %v996
    %v1955 = vmul.f32 %v1952, %v997
    %v1956 = vmul.f32 %v1952, %v998
    %v1957 = vmul.f32 %v1953, %v999
    %v1958 = vmul.f32 %v1953, %v1000
    %v1959 = vmul.f32 %v1953, %v1001
    %v1960 = vmul.f32 %v1952, %v1002
    %v1961 = vmul.f32 %v1952, %v1003
    %v1962 = vmul.f32 %v1952, %v1004
    %v1963 = vmul.f32 %v1953, %v1005
    %v1964 = vmul.f32 %v1953, %v1006
    %v1965 = vmul.f32 %v1953, %v1007
    %v1978 = vrot.slane %v1954, 2
    %v1979 = vrot.slane %v1955, 2
    %v1980 = vsel %vm1913, %v1978, %v1979
    %v1981 = vrot.slane %v1956, 2
    %v1982 = vsel %vm1913, %v1979, %v1981
    %v1983 = vrot.slane %v1957, 2
    %v1984 = vrot.slane %v1958, 2
    %v1985 = vsel %vm1913, %v1983, %v1984
    %v1986 = vrot.slane %v1959, 2
    %v1987 = vsel %vm1913, %v1984, %v1986
    %v1988 = vrot.slane %v1960, 2
    %v1989 = vrot.slane %v1961, 2
    %v1990 = vsel %vm1913, %v1988, %v1989
    %v1991 = vrot.slane %v1962, 2
    %v1992 = vsel %vm1913, %v1989, %v1991
    %v1993 = vrot.slane %v1963, 2
    %v1994 = vrot.slane %v1964, 2
    %v1995 = vsel %vm1913, %v1993, %v1994
    %v1996 = vrot.slane %v1965, 2
    %v1997 = vsel %vm1913, %v1994, %v1996
    %1998 = vrot.lane.b32.xlu0 %v1980, 127
    %v1999 = vpop.permute.xlu0 %1998
    %2000 = vrot.lane.b32.xlu0 %v1982, 127
    %v2001 = vpop.permute.xlu0 %2000
    %2002 = vrot.lane.b32.xlu0 %v1985, 127
    %v2003 = vpop.permute.xlu0 %2002
    %2004 = vrot.lane.b32.xlu0 %v1987, 127
    %v2005 = vpop.permute.xlu0 %2004
    %2006 = vrot.lane.b32.xlu0 %v1990, 127
    %v2007 = vpop.permute.xlu0 %2006
    %2008 = vrot.lane.b32.xlu0 %v1992, 127
    %v2009 = vpop.permute.xlu0 %2008
    %2010 = vrot.lane.b32.xlu0 %v1995, 127
    %v2011 = vpop.permute.xlu0 %2010
    %2012 = vrot.lane.b32.xlu0 %v1997, 127
    %v2013 = vpop.permute.xlu0 %2012
    %v2022 = vadd.f32 %v1942, %v1999
    %v2023 = vadd.f32 %v1943, %v2001
    %v2024 = vadd.f32 %v1944, %v2003
    %v2025 = vadd.f32 %v1945, %v2005
    %v2026 = vadd.f32 %v1946, %v2007
    %v2027 = vadd.f32 %v1947, %v2009
    %v2028 = vadd.f32 %v1948, %v2011
    %v2029 = vadd.f32 %v1949, %v2013
    %s2030 = sld [smem:[#allocation7 + $0x10]]
    %s2031 = sld [smem:[#allocation7 + $0x41]]
    %v2032 = vstv %s2030
    %v2033 = vstv %s2031
    %v2034 = vmul.f32 %v2032, %v996
    %v2035 = vmul.f32 %v2032, %v997
    %v2036 = vmul.f32 %v2032, %v998
    %v2037 = vmul.f32 %v2033, %v999
    %v2038 = vmul.f32 %v2033, %v1000
    %v2039 = vmul.f32 %v2033, %v1001
    %v2040 = vmul.f32 %v2032, %v1002
    %v2041 = vmul.f32 %v2032, %v1003
    %v2042 = vmul.f32 %v2032, %v1004
    %v2043 = vmul.f32 %v2033, %v1005
    %v2044 = vmul.f32 %v2033, %v1006
    %v2045 = vmul.f32 %v2033, %v1007
    %v2058 = vrot.slane %v2034, 2
    %v2059 = vrot.slane %v2035, 2
    %v2060 = vsel %vm1913, %v2058, %v2059
    %v2061 = vrot.slane %v2036, 2
    %v2062 = vsel %vm1913, %v2059, %v2061
    %v2063 = vrot.slane %v2037, 2
    %v2064 = vrot.slane %v2038, 2
    %v2065 = vsel %vm1913, %v2063, %v2064
    %v2066 = vrot.slane %v2039, 2
    %v2067 = vsel %vm1913, %v2064, %v2066
    %v2068 = vrot.slane %v2040, 2
    %v2069 = vrot.slane %v2041, 2
    %v2070 = vsel %vm1913, %v2068, %v2069
    %v2071 = vrot.slane %v2042, 2
    %v2072 = vsel %vm1913, %v2069, %v2071
    %v2073 = vrot.slane %v2043, 2
    %v2074 = vrot.slane %v2044, 2
    %v2075 = vsel %vm1913, %v2073, %v2074
    %v2076 = vrot.slane %v2045, 2
    %v2077 = vsel %vm1913, %v2074, %v2076
    %2078 = vrot.lane.b32.xlu0 %v2060, 126
    %v2079 = vpop.permute.xlu0 %2078
    %2080 = vrot.lane.b32.xlu0 %v2062, 126
    %v2081 = vpop.permute.xlu0 %2080
    %2082 = vrot.lane.b32.xlu0 %v2065, 126
    %v2083 = vpop.permute.xlu0 %2082
    %2084 = vrot.lane.b32.xlu0 %v2067, 126
    %v2085 = vpop.permute.xlu0 %2084
    %2086 = vrot.lane.b32.xlu0 %v2070, 126
    %v2087 = vpop.permute.xlu0 %2086
    %2088 = vrot.lane.b32.xlu0 %v2072, 126
    %v2089 = vpop.permute.xlu0 %2088
    %2090 = vrot.lane.b32.xlu0 %v2075, 126
    %v2091 = vpop.permute.xlu0 %2090
    %2092 = vrot.lane.b32.xlu0 %v2077, 126
    %v2093 = vpop.permute.xlu0 %2092
    %v2102 = vadd.f32 %v2022, %v2079
    %v2103 = vadd.f32 %v2023, %v2081
    %v2104 = vadd.f32 %v2024, %v2083
    %v2105 = vadd.f32 %v2025, %v2085
    %v2106 = vadd.f32 %v2026, %v2087
    %v2107 = vadd.f32 %v2027, %v2089
    %v2108 = vadd.f32 %v2028, %v2091
    %v2109 = vadd.f32 %v2029, %v2093
    %s2110 = sld [smem:[#allocation7 + $0x11]]
    %s2111 = sld [smem:[#allocation7 + $0x42]]
    %v2112 = vstv %s2110
    %v2113 = vstv %s2111
    %v2114 = vmul.f32 %v2112, %v996
    %v2115 = vmul.f32 %v2112, %v997
    %v2116 = vmul.f32 %v2112, %v998
    %v2117 = vmul.f32 %v2113, %v999
    %v2118 = vmul.f32 %v2113, %v1000
    %v2119 = vmul.f32 %v2113, %v1001
    %v2120 = vmul.f32 %v2112, %v1002
    %v2121 = vmul.f32 %v2112, %v1003
    %v2122 = vmul.f32 %v2112, %v1004
    %v2123 = vmul.f32 %v2113, %v1005
    %v2124 = vmul.f32 %v2113, %v1006
    %v2125 = vmul.f32 %v2113, %v1007
    %v2138 = vrot.slane %v2114, 2
    %v2139 = vrot.slane %v2115, 2
    %v2140 = vsel %vm1913, %v2138, %v2139
    %v2141 = vrot.slane %v2116, 2
    %v2142 = vsel %vm1913, %v2139, %v2141
    %v2143 = vrot.slane %v2117, 2
    %v2144 = vrot.slane %v2118, 2
    %v2145 = vsel %vm1913, %v2143, %v2144
    %v2146 = vrot.slane %v2119, 2
    %v2147 = vsel %vm1913, %v2144, %v2146
    %v2148 = vrot.slane %v2120, 2
    %v2149 = vrot.slane %v2121, 2
    %v2150 = vsel %vm1913, %v2148, %v2149
    %v2151 = vrot.slane %v2122, 2
    %v2152 = vsel %vm1913, %v2149, %v2151
    %v2153 = vrot.slane %v2123, 2
    %v2154 = vrot.slane %v2124, 2
    %v2155 = vsel %vm1913, %v2153, %v2154
    %v2156 = vrot.slane %v2125, 2
    %v2157 = vsel %vm1913, %v2154, %v2156
    %2158 = vrot.lane.b32.xlu0 %v2140, 125
    %v2159 = vpop.permute.xlu0 %2158
    %2160 = vrot.lane.b32.xlu0 %v2142, 125
    %v2161 = vpop.permute.xlu0 %2160
    %2162 = vrot.lane.b32.xlu0 %v2145, 125
    %v2163 = vpop.permute.xlu0 %2162
    %2164 = vrot.lane.b32.xlu0 %v2147, 125
    %v2165 = vpop.permute.xlu0 %2164
    %2166 = vrot.lane.b32.xlu0 %v2150, 125
    %v2167 = vpop.permute.xlu0 %2166
    %2168 = vrot.lane.b32.xlu0 %v2152, 125
    %v2169 = vpop.permute.xlu0 %2168
    %2170 = vrot.lane.b32.xlu0 %v2155, 125
    %v2171 = vpop.permute.xlu0 %2170
    %2172 = vrot.lane.b32.xlu0 %v2157, 125
    %v2173 = vpop.permute.xlu0 %2172
    %v2182 = vadd.f32 %v2102, %v2159
    %v2183 = vadd.f32 %v2103, %v2161
    %v2184 = vadd.f32 %v2104, %v2163
    %v2185 = vadd.f32 %v2105, %v2165
    %v2186 = vadd.f32 %v2106, %v2167
    %v2187 = vadd.f32 %v2107, %v2169
    %v2188 = vadd.f32 %v2108, %v2171
    %v2189 = vadd.f32 %v2109, %v2173
    %s2190 = sld [smem:[#allocation7 + $0x12]]
    %s2191 = sld [smem:[#allocation7 + $0x43]]
    %v2192 = vstv %s2190
    %v2193 = vstv %s2191
    %v2194 = vmul.f32 %v2192, %v996
    %v2195 = vmul.f32 %v2192, %v997
    %v2196 = vmul.f32 %v2192, %v998
    %v2197 = vmul.f32 %v2193, %v999
    %v2198 = vmul.f32 %v2193, %v1000
    %v2199 = vmul.f32 %v2193, %v1001
    %v2200 = vmul.f32 %v2192, %v1002
    %v2201 = vmul.f32 %v2192, %v1003
    %v2202 = vmul.f32 %v2192, %v1004
    %v2203 = vmul.f32 %v2193, %v1005
    %v2204 = vmul.f32 %v2193, %v1006
    %v2205 = vmul.f32 %v2193, %v1007
    %v2218 = vrot.slane %v2194, 2
    %v2219 = vrot.slane %v2195, 2
    %v2220 = vsel %vm1913, %v2218, %v2219
    %v2221 = vrot.slane %v2196, 2
    %v2222 = vsel %vm1913, %v2219, %v2221
    %v2223 = vrot.slane %v2197, 2
    %v2224 = vrot.slane %v2198, 2
    %v2225 = vsel %vm1913, %v2223, %v2224
    %v2226 = vrot.slane %v2199, 2
    %v2227 = vsel %vm1913, %v2224, %v2226
    %v2228 = vrot.slane %v2200, 2
    %v2229 = vrot.slane %v2201, 2
    %v2230 = vsel %vm1913, %v2228, %v2229
    %v2231 = vrot.slane %v2202, 2
    %v2232 = vsel %vm1913, %v2229, %v2231
    %v2233 = vrot.slane %v2203, 2
    %v2234 = vrot.slane %v2204, 2
    %v2235 = vsel %vm1913, %v2233, %v2234
    %v2236 = vrot.slane %v2205, 2
    %v2237 = vsel %vm1913, %v2234, %v2236
    %2238 = vrot.lane.b32.xlu0 %v2220, 124
    %v2239 = vpop.permute.xlu0 %2238
    %2240 = vrot.lane.b32.xlu0 %v2222, 124
    %v2241 = vpop.permute.xlu0 %2240
    %2242 = vrot.lane.b32.xlu0 %v2225, 124
    %v2243 = vpop.permute.xlu0 %2242
    %2244 = vrot.lane.b32.xlu0 %v2227, 124
    %v2245 = vpop.permute.xlu0 %2244
    %2246 = vrot.lane.b32.xlu0 %v2230, 124
    %v2247 = vpop.permute.xlu0 %2246
    %2248 = vrot.lane.b32.xlu0 %v2232, 124
    %v2249 = vpop.permute.xlu0 %2248
    %2250 = vrot.lane.b32.xlu0 %v2235, 124
    %v2251 = vpop.permute.xlu0 %2250
    %2252 = vrot.lane.b32.xlu0 %v2237, 124
    %v2253 = vpop.permute.xlu0 %2252
    %v2262 = vadd.f32 %v2182, %v2239
    %v2263 = vadd.f32 %v2183, %v2241
    %v2264 = vadd.f32 %v2184, %v2243
    %v2265 = vadd.f32 %v2185, %v2245
    %v2266 = vadd.f32 %v2186, %v2247
    %v2267 = vadd.f32 %v2187, %v2249
    %v2268 = vadd.f32 %v2188, %v2251
    %v2269 = vadd.f32 %v2189, %v2253
    %s2270 = sld [smem:[#allocation7 + $0x13]]
    %s2271 = sld [smem:[#allocation7 + $0x44]]
    %v2272 = vstv %s2270
    %v2273 = vstv %s2271
    %v2274 = vmul.f32 %v2272, %v996
    %v2275 = vmul.f32 %v2272, %v997
    %v2276 = vmul.f32 %v2272, %v998
    %v2277 = vmul.f32 %v2273, %v999
    %v2278 = vmul.f32 %v2273, %v1000
    %v2279 = vmul.f32 %v2273, %v1001
    %v2280 = vmul.f32 %v2272, %v1002
    %v2281 = vmul.f32 %v2272, %v1003
    %v2282 = vmul.f32 %v2272, %v1004
    %v2283 = vmul.f32 %v2273, %v1005
    %v2284 = vmul.f32 %v2273, %v1006
    %v2285 = vmul.f32 %v2273, %v1007
    %v2298 = vrot.slane %v2274, 2
    %v2299 = vrot.slane %v2275, 2
    %v2300 = vsel %vm1913, %v2298, %v2299
    %v2301 = vrot.slane %v2276, 2
    %v2302 = vsel %vm1913, %v2299, %v2301
    %v2303 = vrot.slane %v2277, 2
    %v2304 = vrot.slane %v2278, 2
    %v2305 = vsel %vm1913, %v2303, %v2304
    %v2306 = vrot.slane %v2279, 2
    %v2307 = vsel %vm1913, %v2304, %v2306
    %v2308 = vrot.slane %v2280, 2
    %v2309 = vrot.slane %v2281, 2
    %v2310 = vsel %vm1913, %v2308, %v2309
    %v2311 = vrot.slane %v2282, 2
    %v2312 = vsel %vm1913, %v2309, %v2311
    %v2313 = vrot.slane %v2283, 2
    %v2314 = vrot.slane %v2284, 2
    %v2315 = vsel %vm1913, %v2313, %v2314
    %v2316 = vrot.slane %v2285, 2
    %v2317 = vsel %vm1913, %v2314, %v2316
    %2318 = vrot.lane.b32.xlu0 %v2300, 123
    %v2319 = vpop.permute.xlu0 %2318
    %2320 = vrot.lane.b32.xlu0 %v2302, 123
    %v2321 = vpop.permute.xlu0 %2320
    %2322 = vrot.lane.b32.xlu0 %v2305, 123
    %v2323 = vpop.permute.xlu0 %2322
    %2324 = vrot.lane.b32.xlu0 %v2307, 123
    %v2325 = vpop.permute.xlu0 %2324
    %2326 = vrot.lane.b32.xlu0 %v2310, 123
    %v2327 = vpop.permute.xlu0 %2326
    %2328 = vrot.lane.b32.xlu0 %v2312, 123
    %v2329 = vpop.permute.xlu0 %2328
    %2330 = vrot.lane.b32.xlu0 %v2315, 123
    %v2331 = vpop.permute.xlu0 %2330
    %2332 = vrot.lane.b32.xlu0 %v2317, 123
    %v2333 = vpop.permute.xlu0 %2332
    %v2342 = vadd.f32 %v2262, %v2319
    %v2343 = vadd.f32 %v2263, %v2321
    %v2344 = vadd.f32 %v2264, %v2323
    %v2345 = vadd.f32 %v2265, %v2325
    %v2346 = vadd.f32 %v2266, %v2327
    %v2347 = vadd.f32 %v2267, %v2329
    %v2348 = vadd.f32 %v2268, %v2331
    %v2349 = vadd.f32 %v2269, %v2333
    %s2350 = sld [smem:[#allocation7 + $0x14]]
    %s2351 = sld [smem:[#allocation7 + $0x45]]
    %v2352 = vstv %s2350
    %v2353 = vstv %s2351
    %v2354 = vmul.f32 %v2352, %v996
    %v2355 = vmul.f32 %v2352, %v997
    %v2356 = vmul.f32 %v2352, %v998
    %v2357 = vmul.f32 %v2353, %v999
    %v2358 = vmul.f32 %v2353, %v1000
    %v2359 = vmul.f32 %v2353, %v1001
    %v2360 = vmul.f32 %v2352, %v1002
    %v2361 = vmul.f32 %v2352, %v1003
    %v2362 = vmul.f32 %v2352, %v1004
    %v2363 = vmul.f32 %v2353, %v1005
    %v2364 = vmul.f32 %v2353, %v1006
    %v2365 = vmul.f32 %v2353, %v1007
    %v2378 = vrot.slane %v2354, 2
    %v2379 = vrot.slane %v2355, 2
    %v2380 = vsel %vm1913, %v2378, %v2379
    %v2381 = vrot.slane %v2356, 2
    %v2382 = vsel %vm1913, %v2379, %v2381
    %v2383 = vrot.slane %v2357, 2
    %v2384 = vrot.slane %v2358, 2
    %v2385 = vsel %vm1913, %v2383, %v2384
    %v2386 = vrot.slane %v2359, 2
    %v2387 = vsel %vm1913, %v2384, %v2386
    %v2388 = vrot.slane %v2360, 2
    %v2389 = vrot.slane %v2361, 2
    %v2390 = vsel %vm1913, %v2388, %v2389
    %v2391 = vrot.slane %v2362, 2
    %v2392 = vsel %vm1913, %v2389, %v2391
    %v2393 = vrot.slane %v2363, 2
    %v2394 = vrot.slane %v2364, 2
    %v2395 = vsel %vm1913, %v2393, %v2394
    %v2396 = vrot.slane %v2365, 2
    %v2397 = vsel %vm1913, %v2394, %v2396
    %2398 = vrot.lane.b32.xlu0 %v2380, 122
    %v2399 = vpop.permute.xlu0 %2398
    %2400 = vrot.lane.b32.xlu0 %v2382, 122
    %v2401 = vpop.permute.xlu0 %2400
    %2402 = vrot.lane.b32.xlu0 %v2385, 122
    %v2403 = vpop.permute.xlu0 %2402
    %2404 = vrot.lane.b32.xlu0 %v2387, 122
    %v2405 = vpop.permute.xlu0 %2404
    %2406 = vrot.lane.b32.xlu0 %v2390, 122
    %v2407 = vpop.permute.xlu0 %2406
    %2408 = vrot.lane.b32.xlu0 %v2392, 122
    %v2409 = vpop.permute.xlu0 %2408
    %2410 = vrot.lane.b32.xlu0 %v2395, 122
    %v2411 = vpop.permute.xlu0 %2410
    %2412 = vrot.lane.b32.xlu0 %v2397, 122
    %v2413 = vpop.permute.xlu0 %2412
    %v2422 = vadd.f32 %v2342, %v2399
    %v2423 = vadd.f32 %v2343, %v2401
    %v2424 = vadd.f32 %v2344, %v2403
    %v2425 = vadd.f32 %v2345, %v2405
    %v2426 = vadd.f32 %v2346, %v2407
    %v2427 = vadd.f32 %v2347, %v2409
    %v2428 = vadd.f32 %v2348, %v2411
    %v2429 = vadd.f32 %v2349, %v2413
    %s2430 = sld [smem:[#allocation7 + $0x15]]
    %s2431 = sld [smem:[#allocation7 + $0x46]]
    %v2432 = vstv %s2430
    %v2433 = vstv %s2431
    %v2434 = vmul.f32 %v2432, %v996
    %v2435 = vmul.f32 %v2432, %v997
    %v2436 = vmul.f32 %v2432, %v998
    %v2437 = vmul.f32 %v2433, %v999
    %v2438 = vmul.f32 %v2433, %v1000
    %v2439 = vmul.f32 %v2433, %v1001
    %v2440 = vmul.f32 %v2432, %v1002
    %v2441 = vmul.f32 %v2432, %v1003
    %v2442 = vmul.f32 %v2432, %v1004
    %v2443 = vmul.f32 %v2433, %v1005
    %v2444 = vmul.f32 %v2433, %v1006
    %v2445 = vmul.f32 %v2433, %v1007
    %vm2458 = vcmask 1044480
    %v2459 = vrot.slane %v2434, 3
    %v2460 = vrot.slane %v2435, 3
    %v2461 = vsel %vm2458, %v2459, %v2460
    %v2462 = vrot.slane %v2436, 3
    %v2463 = vsel %vm2458, %v2460, %v2462
    %v2464 = vrot.slane %v2437, 3
    %v2465 = vrot.slane %v2438, 3
    %v2466 = vsel %vm2458, %v2464, %v2465
    %v2467 = vrot.slane %v2439, 3
    %v2468 = vsel %vm2458, %v2465, %v2467
    %v2469 = vrot.slane %v2440, 3
    %v2470 = vrot.slane %v2441, 3
    %v2471 = vsel %vm2458, %v2469, %v2470
    %v2472 = vrot.slane %v2442, 3
    %v2473 = vsel %vm2458, %v2470, %v2472
    %v2474 = vrot.slane %v2443, 3
    %v2475 = vrot.slane %v2444, 3
    %v2476 = vsel %vm2458, %v2474, %v2475
    %v2477 = vrot.slane %v2445, 3
    %v2478 = vsel %vm2458, %v2475, %v2477
    %v2487 = vadd.f32 %v2422, %v2461
    %v2488 = vadd.f32 %v2423, %v2463
    %v2489 = vadd.f32 %v2424, %v2466
    %v2490 = vadd.f32 %v2425, %v2468
    %v2491 = vadd.f32 %v2426, %v2471
    %v2492 = vadd.f32 %v2427, %v2473
    %v2493 = vadd.f32 %v2428, %v2476
    %v2494 = vadd.f32 %v2429, %v2478
    %s2495 = sld [smem:[#allocation7 + $0x16]]
    %s2496 = sld [smem:[#allocation7 + $0x47]]
    %v2497 = vstv %s2495
    %v2498 = vstv %s2496
    %v2499 = vmul.f32 %v2497, %v996
    %v2500 = vmul.f32 %v2497, %v997
    %v2501 = vmul.f32 %v2497, %v998
    %v2502 = vmul.f32 %v2498, %v999
    %v2503 = vmul.f32 %v2498, %v1000
    %v2504 = vmul.f32 %v2498, %v1001
    %v2505 = vmul.f32 %v2497, %v1002
    %v2506 = vmul.f32 %v2497, %v1003
    %v2507 = vmul.f32 %v2497, %v1004
    %v2508 = vmul.f32 %v2498, %v1005
    %v2509 = vmul.f32 %v2498, %v1006
    %v2510 = vmul.f32 %v2498, %v1007
    %v2523 = vrot.slane %v2499, 3
    %v2524 = vrot.slane %v2500, 3
    %v2525 = vsel %vm2458, %v2523, %v2524
    %v2526 = vrot.slane %v2501, 3
    %v2527 = vsel %vm2458, %v2524, %v2526
    %v2528 = vrot.slane %v2502, 3
    %v2529 = vrot.slane %v2503, 3
    %v2530 = vsel %vm2458, %v2528, %v2529
    %v2531 = vrot.slane %v2504, 3
    %v2532 = vsel %vm2458, %v2529, %v2531
    %v2533 = vrot.slane %v2505, 3
    %v2534 = vrot.slane %v2506, 3
    %v2535 = vsel %vm2458, %v2533, %v2534
    %v2536 = vrot.slane %v2507, 3
    %v2537 = vsel %vm2458, %v2534, %v2536
    %v2538 = vrot.slane %v2508, 3
    %v2539 = vrot.slane %v2509, 3
    %v2540 = vsel %vm2458, %v2538, %v2539
    %v2541 = vrot.slane %v2510, 3
    %v2542 = vsel %vm2458, %v2539, %v2541
    %2543 = vrot.lane.b32.xlu0 %v2525, 127
    %v2544 = vpop.permute.xlu0 %2543
    %2545 = vrot.lane.b32.xlu0 %v2527, 127
    %v2546 = vpop.permute.xlu0 %2545
    %2547 = vrot.lane.b32.xlu0 %v2530, 127
    %v2548 = vpop.permute.xlu0 %2547
    %2549 = vrot.lane.b32.xlu0 %v2532, 127
    %v2550 = vpop.permute.xlu0 %2549
    %2551 = vrot.lane.b32.xlu0 %v2535, 127
    %v2552 = vpop.permute.xlu0 %2551
    %2553 = vrot.lane.b32.xlu0 %v2537, 127
    %v2554 = vpop.permute.xlu0 %2553
    %2555 = vrot.lane.b32.xlu0 %v2540, 127
    %v2556 = vpop.permute.xlu0 %2555
    %2557 = vrot.lane.b32.xlu0 %v2542, 127
    %v2558 = vpop.permute.xlu0 %2557
    %v2567 = vadd.f32 %v2487, %v2544
    %v2568 = vadd.f32 %v2488, %v2546
    %v2569 = vadd.f32 %v2489, %v2548
    %v2570 = vadd.f32 %v2490, %v2550
    %v2571 = vadd.f32 %v2491, %v2552
    %v2572 = vadd.f32 %v2492, %v2554
    %v2573 = vadd.f32 %v2493, %v2556
    %v2574 = vadd.f32 %v2494, %v2558
    %s2575 = sld [smem:[#allocation7 + $0x17]]
    %s2576 = sld [smem:[#allocation7 + $0x48]]
    %v2577 = vstv %s2575
    %v2578 = vstv %s2576
    %v2579 = vmul.f32 %v2577, %v996
    %v2580 = vmul.f32 %v2577, %v997
    %v2581 = vmul.f32 %v2577, %v998
    %v2582 = vmul.f32 %v2578, %v999
    %v2583 = vmul.f32 %v2578, %v1000
    %v2584 = vmul.f32 %v2578, %v1001
    %v2585 = vmul.f32 %v2577, %v1002
    %v2586 = vmul.f32 %v2577, %v1003
    %v2587 = vmul.f32 %v2577, %v1004
    %v2588 = vmul.f32 %v2578, %v1005
    %v2589 = vmul.f32 %v2578, %v1006
    %v2590 = vmul.f32 %v2578, %v1007
    %v2603 = vrot.slane %v2579, 3
    %v2604 = vrot.slane %v2580, 3
    %v2605 = vsel %vm2458, %v2603, %v2604
    %v2606 = vrot.slane %v2581, 3
    %v2607 = vsel %vm2458, %v2604, %v2606
    %v2608 = vrot.slane %v2582, 3
    %v2609 = vrot.slane %v2583, 3
    %v2610 = vsel %vm2458, %v2608, %v2609
    %v2611 = vrot.slane %v2584, 3
    %v2612 = vsel %vm2458, %v2609, %v2611
    %v2613 = vrot.slane %v2585, 3
    %v2614 = vrot.slane %v2586, 3
    %v2615 = vsel %vm2458, %v2613, %v2614
    %v2616 = vrot.slane %v2587, 3
    %v2617 = vsel %vm2458, %v2614, %v2616
    %v2618 = vrot.slane %v2588, 3
    %v2619 = vrot.slane %v2589, 3
    %v2620 = vsel %vm2458, %v2618, %v2619
    %v2621 = vrot.slane %v2590, 3
    %v2622 = vsel %vm2458, %v2619, %v2621
    %2623 = vrot.lane.b32.xlu0 %v2605, 126
    %v2624 = vpop.permute.xlu0 %2623
    %2625 = vrot.lane.b32.xlu0 %v2607, 126
    %v2626 = vpop.permute.xlu0 %2625
    %2627 = vrot.lane.b32.xlu0 %v2610, 126
    %v2628 = vpop.permute.xlu0 %2627
    %2629 = vrot.lane.b32.xlu0 %v2612, 126
    %v2630 = vpop.permute.xlu0 %2629
    %2631 = vrot.lane.b32.xlu0 %v2615, 126
    %v2632 = vpop.permute.xlu0 %2631
    %2633 = vrot.lane.b32.xlu0 %v2617, 126
    %v2634 = vpop.permute.xlu0 %2633
    %2635 = vrot.lane.b32.xlu0 %v2620, 126
    %v2636 = vpop.permute.xlu0 %2635
    %2637 = vrot.lane.b32.xlu0 %v2622, 126
    %v2638 = vpop.permute.xlu0 %2637
    %v2647 = vadd.f32 %v2567, %v2624
    %v2648 = vadd.f32 %v2568, %v2626
    %v2649 = vadd.f32 %v2569, %v2628
    %v2650 = vadd.f32 %v2570, %v2630
    %v2651 = vadd.f32 %v2571, %v2632
    %v2652 = vadd.f32 %v2572, %v2634
    %v2653 = vadd.f32 %v2573, %v2636
    %v2654 = vadd.f32 %v2574, %v2638
    %s2655 = sld [smem:[#allocation7 + $0x18]]
    %s2656 = sld [smem:[#allocation7 + $0x49]]
    %v2657 = vstv %s2655
    %v2658 = vstv %s2656
    %v2659 = vmul.f32 %v2657, %v996
    %v2660 = vmul.f32 %v2657, %v997
    %v2661 = vmul.f32 %v2657, %v998
    %v2662 = vmul.f32 %v2658, %v999
    %v2663 = vmul.f32 %v2658, %v1000
    %v2664 = vmul.f32 %v2658, %v1001
    %v2665 = vmul.f32 %v2657, %v1002
    %v2666 = vmul.f32 %v2657, %v1003
    %v2667 = vmul.f32 %v2657, %v1004
    %v2668 = vmul.f32 %v2658, %v1005
    %v2669 = vmul.f32 %v2658, %v1006
    %v2670 = vmul.f32 %v2658, %v1007
    %v2683 = vrot.slane %v2659, 3
    %v2684 = vrot.slane %v2660, 3
    %v2685 = vsel %vm2458, %v2683, %v2684
    %v2686 = vrot.slane %v2661, 3
    %v2687 = vsel %vm2458, %v2684, %v2686
    %v2688 = vrot.slane %v2662, 3
    %v2689 = vrot.slane %v2663, 3
    %v2690 = vsel %vm2458, %v2688, %v2689
    %v2691 = vrot.slane %v2664, 3
    %v2692 = vsel %vm2458, %v2689, %v2691
    %v2693 = vrot.slane %v2665, 3
    %v2694 = vrot.slane %v2666, 3
    %v2695 = vsel %vm2458, %v2693, %v2694
    %v2696 = vrot.slane %v2667, 3
    %v2697 = vsel %vm2458, %v2694, %v2696
    %v2698 = vrot.slane %v2668, 3
    %v2699 = vrot.slane %v2669, 3
    %v2700 = vsel %vm2458, %v2698, %v2699
    %v2701 = vrot.slane %v2670, 3
    %v2702 = vsel %vm2458, %v2699, %v2701
    %2703 = vrot.lane.b32.xlu0 %v2685, 125
    %v2704 = vpop.permute.xlu0 %2703
    %2705 = vrot.lane.b32.xlu0 %v2687, 125
    %v2706 = vpop.permute.xlu0 %2705
    %2707 = vrot.lane.b32.xlu0 %v2690, 125
    %v2708 = vpop.permute.xlu0 %2707
    %2709 = vrot.lane.b32.xlu0 %v2692, 125
    %v2710 = vpop.permute.xlu0 %2709
    %2711 = vrot.lane.b32.xlu0 %v2695, 125
    %v2712 = vpop.permute.xlu0 %2711
    %2713 = vrot.lane.b32.xlu0 %v2697, 125
    %v2714 = vpop.permute.xlu0 %2713
    %2715 = vrot.lane.b32.xlu0 %v2700, 125
    %v2716 = vpop.permute.xlu0 %2715
    %2717 = vrot.lane.b32.xlu0 %v2702, 125
    %v2718 = vpop.permute.xlu0 %2717
    %v2727 = vadd.f32 %v2647, %v2704
    %v2728 = vadd.f32 %v2648, %v2706
    %v2729 = vadd.f32 %v2649, %v2708
    %v2730 = vadd.f32 %v2650, %v2710
    %v2731 = vadd.f32 %v2651, %v2712
    %v2732 = vadd.f32 %v2652, %v2714
    %v2733 = vadd.f32 %v2653, %v2716
    %v2734 = vadd.f32 %v2654, %v2718
    %s2735 = sld [smem:[#allocation7 + $0x19]]
    %s2736 = sld [smem:[#allocation7 + $0x4a]]
    %v2737 = vstv %s2735
    %v2738 = vstv %s2736
    %v2739 = vmul.f32 %v2737, %v996
    %v2740 = vmul.f32 %v2737, %v997
    %v2741 = vmul.f32 %v2737, %v998
    %v2742 = vmul.f32 %v2738, %v999
    %v2743 = vmul.f32 %v2738, %v1000
    %v2744 = vmul.f32 %v2738, %v1001
    %v2745 = vmul.f32 %v2737, %v1002
    %v2746 = vmul.f32 %v2737, %v1003
    %v2747 = vmul.f32 %v2737, %v1004
    %v2748 = vmul.f32 %v2738, %v1005
    %v2749 = vmul.f32 %v2738, %v1006
    %v2750 = vmul.f32 %v2738, %v1007
    %v2763 = vrot.slane %v2739, 3
    %v2764 = vrot.slane %v2740, 3
    %v2765 = vsel %vm2458, %v2763, %v2764
    %v2766 = vrot.slane %v2741, 3
    %v2767 = vsel %vm2458, %v2764, %v2766
    %v2768 = vrot.slane %v2742, 3
    %v2769 = vrot.slane %v2743, 3
    %v2770 = vsel %vm2458, %v2768, %v2769
    %v2771 = vrot.slane %v2744, 3
    %v2772 = vsel %vm2458, %v2769, %v2771
    %v2773 = vrot.slane %v2745, 3
    %v2774 = vrot.slane %v2746, 3
    %v2775 = vsel %vm2458, %v2773, %v2774
    %v2776 = vrot.slane %v2747, 3
    %v2777 = vsel %vm2458, %v2774, %v2776
    %v2778 = vrot.slane %v2748, 3
    %v2779 = vrot.slane %v2749, 3
    %v2780 = vsel %vm2458, %v2778, %v2779
    %v2781 = vrot.slane %v2750, 3
    %v2782 = vsel %vm2458, %v2779, %v2781
    %2783 = vrot.lane.b32.xlu0 %v2765, 124
    %v2784 = vpop.permute.xlu0 %2783
    %2785 = vrot.lane.b32.xlu0 %v2767, 124
    %v2786 = vpop.permute.xlu0 %2785
    %2787 = vrot.lane.b32.xlu0 %v2770, 124
    %v2788 = vpop.permute.xlu0 %2787
    %2789 = vrot.lane.b32.xlu0 %v2772, 124
    %v2790 = vpop.permute.xlu0 %2789
    %2791 = vrot.lane.b32.xlu0 %v2775, 124
    %v2792 = vpop.permute.xlu0 %2791
    %2793 = vrot.lane.b32.xlu0 %v2777, 124
    %v2794 = vpop.permute.xlu0 %2793
    %2795 = vrot.lane.b32.xlu0 %v2780, 124
    %v2796 = vpop.permute.xlu0 %2795
    %2797 = vrot.lane.b32.xlu0 %v2782, 124
    %v2798 = vpop.permute.xlu0 %2797
    %v2807 = vadd.f32 %v2727, %v2784
    %v2808 = vadd.f32 %v2728, %v2786
    %v2809 = vadd.f32 %v2729, %v2788
    %v2810 = vadd.f32 %v2730, %v2790
    %v2811 = vadd.f32 %v2731, %v2792
    %v2812 = vadd.f32 %v2732, %v2794
    %v2813 = vadd.f32 %v2733, %v2796
    %v2814 = vadd.f32 %v2734, %v2798
    %s2815 = sld [smem:[#allocation7 + $0x1a]]
    %s2816 = sld [smem:[#allocation7 + $0x4b]]
    %v2817 = vstv %s2815
    %v2818 = vstv %s2816
    %v2819 = vmul.f32 %v2817, %v996
    %v2820 = vmul.f32 %v2817, %v997
    %v2821 = vmul.f32 %v2817, %v998
    %v2822 = vmul.f32 %v2818, %v999
    %v2823 = vmul.f32 %v2818, %v1000
    %v2824 = vmul.f32 %v2818, %v1001
    %v2825 = vmul.f32 %v2817, %v1002
    %v2826 = vmul.f32 %v2817, %v1003
    %v2827 = vmul.f32 %v2817, %v1004
    %v2828 = vmul.f32 %v2818, %v1005
    %v2829 = vmul.f32 %v2818, %v1006
    %v2830 = vmul.f32 %v2818, %v1007
    %v2843 = vrot.slane %v2819, 3
    %v2844 = vrot.slane %v2820, 3
    %v2845 = vsel %vm2458, %v2843, %v2844
    %v2846 = vrot.slane %v2821, 3
    %v2847 = vsel %vm2458, %v2844, %v2846
    %v2848 = vrot.slane %v2822, 3
    %v2849 = vrot.slane %v2823, 3
    %v2850 = vsel %vm2458, %v2848, %v2849
    %v2851 = vrot.slane %v2824, 3
    %v2852 = vsel %vm2458, %v2849, %v2851
    %v2853 = vrot.slane %v2825, 3
    %v2854 = vrot.slane %v2826, 3
    %v2855 = vsel %vm2458, %v2853, %v2854
    %v2856 = vrot.slane %v2827, 3
    %v2857 = vsel %vm2458, %v2854, %v2856
    %v2858 = vrot.slane %v2828, 3
    %v2859 = vrot.slane %v2829, 3
    %v2860 = vsel %vm2458, %v2858, %v2859
    %v2861 = vrot.slane %v2830, 3
    %v2862 = vsel %vm2458, %v2859, %v2861
    %2863 = vrot.lane.b32.xlu0 %v2845, 123
    %v2864 = vpop.permute.xlu0 %2863
    %2865 = vrot.lane.b32.xlu0 %v2847, 123
    %v2866 = vpop.permute.xlu0 %2865
    %2867 = vrot.lane.b32.xlu0 %v2850, 123
    %v2868 = vpop.permute.xlu0 %2867
    %2869 = vrot.lane.b32.xlu0 %v2852, 123
    %v2870 = vpop.permute.xlu0 %2869
    %2871 = vrot.lane.b32.xlu0 %v2855, 123
    %v2872 = vpop.permute.xlu0 %2871
    %2873 = vrot.lane.b32.xlu0 %v2857, 123
    %v2874 = vpop.permute.xlu0 %2873
    %2875 = vrot.lane.b32.xlu0 %v2860, 123
    %v2876 = vpop.permute.xlu0 %2875
    %2877 = vrot.lane.b32.xlu0 %v2862, 123
    %v2878 = vpop.permute.xlu0 %2877
    %v2887 = vadd.f32 %v2807, %v2864
    %v2888 = vadd.f32 %v2808, %v2866
    %v2889 = vadd.f32 %v2809, %v2868
    %v2890 = vadd.f32 %v2810, %v2870
    %v2891 = vadd.f32 %v2811, %v2872
    %v2892 = vadd.f32 %v2812, %v2874
    %v2893 = vadd.f32 %v2813, %v2876
    %v2894 = vadd.f32 %v2814, %v2878
    %s2895 = sld [smem:[#allocation7 + $0x1b]]
    %s2896 = sld [smem:[#allocation7 + $0x4c]]
    %v2897 = vstv %s2895
    %v2898 = vstv %s2896
    %v2899 = vmul.f32 %v2897, %v996
    %v2900 = vmul.f32 %v2897, %v997
    %v2901 = vmul.f32 %v2897, %v998
    %v2902 = vmul.f32 %v2898, %v999
    %v2903 = vmul.f32 %v2898, %v1000
    %v2904 = vmul.f32 %v2898, %v1001
    %v2905 = vmul.f32 %v2897, %v1002
    %v2906 = vmul.f32 %v2897, %v1003
    %v2907 = vmul.f32 %v2897, %v1004
    %v2908 = vmul.f32 %v2898, %v1005
    %v2909 = vmul.f32 %v2898, %v1006
    %v2910 = vmul.f32 %v2898, %v1007
    %v2923 = vrot.slane %v2899, 3
    %v2924 = vrot.slane %v2900, 3
    %v2925 = vsel %vm2458, %v2923, %v2924
    %v2926 = vrot.slane %v2901, 3
    %v2927 = vsel %vm2458, %v2924, %v2926
    %v2928 = vrot.slane %v2902, 3
    %v2929 = vrot.slane %v2903, 3
    %v2930 = vsel %vm2458, %v2928, %v2929
    %v2931 = vrot.slane %v2904, 3
    %v2932 = vsel %vm2458, %v2929, %v2931
    %v2933 = vrot.slane %v2905, 3
    %v2934 = vrot.slane %v2906, 3
    %v2935 = vsel %vm2458, %v2933, %v2934
    %v2936 = vrot.slane %v2907, 3
    %v2937 = vsel %vm2458, %v2934, %v2936
    %v2938 = vrot.slane %v2908, 3
    %v2939 = vrot.slane %v2909, 3
    %v2940 = vsel %vm2458, %v2938, %v2939
    %v2941 = vrot.slane %v2910, 3
    %v2942 = vsel %vm2458, %v2939, %v2941
    %2943 = vrot.lane.b32.xlu0 %v2925, 122
    %v2944 = vpop.permute.xlu0 %2943
    %2945 = vrot.lane.b32.xlu0 %v2927, 122
    %v2946 = vpop.permute.xlu0 %2945
    %2947 = vrot.lane.b32.xlu0 %v2930, 122
    %v2948 = vpop.permute.xlu0 %2947
    %2949 = vrot.lane.b32.xlu0 %v2932, 122
    %v2950 = vpop.permute.xlu0 %2949
    %2951 = vrot.lane.b32.xlu0 %v2935, 122
    %v2952 = vpop.permute.xlu0 %2951
    %2953 = vrot.lane.b32.xlu0 %v2937, 122
    %v2954 = vpop.permute.xlu0 %2953
    %2955 = vrot.lane.b32.xlu0 %v2940, 122
    %v2956 = vpop.permute.xlu0 %2955
    %2957 = vrot.lane.b32.xlu0 %v2942, 122
    %v2958 = vpop.permute.xlu0 %2957
    %v2967 = vadd.f32 %v2887, %v2944
    %v2968 = vadd.f32 %v2888, %v2946
    %v2969 = vadd.f32 %v2889, %v2948
    %v2970 = vadd.f32 %v2890, %v2950
    %v2971 = vadd.f32 %v2891, %v2952
    %v2972 = vadd.f32 %v2892, %v2954
    %v2973 = vadd.f32 %v2893, %v2956
    %v2974 = vadd.f32 %v2894, %v2958
    %s2975 = sld [smem:[#allocation7 + $0x1c]]
    %s2976 = sld [smem:[#allocation7 + $0x4d]]
    %v2977 = vstv %s2975
    %v2978 = vstv %s2976
    %v2979 = vmul.f32 %v2977, %v996
    %v2980 = vmul.f32 %v2977, %v997
    %v2981 = vmul.f32 %v2977, %v998
    %v2982 = vmul.f32 %v2978, %v999
    %v2983 = vmul.f32 %v2978, %v1000
    %v2984 = vmul.f32 %v2978, %v1001
    %v2985 = vmul.f32 %v2977, %v1002
    %v2986 = vmul.f32 %v2977, %v1003
    %v2987 = vmul.f32 %v2977, %v1004
    %v2988 = vmul.f32 %v2978, %v1005
    %v2989 = vmul.f32 %v2978, %v1006
    %v2990 = vmul.f32 %v2978, %v1007
    %vm3003 = vcmask 1043456
    %v3004 = vrot.slane %v2979, 4
    %v3005 = vrot.slane %v2980, 4
    %v3006 = vsel %vm3003, %v3004, %v3005
    %v3007 = vrot.slane %v2981, 4
    %v3008 = vsel %vm3003, %v3005, %v3007
    %v3009 = vrot.slane %v2982, 4
    %v3010 = vrot.slane %v2983, 4
    %v3011 = vsel %vm3003, %v3009, %v3010
    %v3012 = vrot.slane %v2984, 4
    %v3013 = vsel %vm3003, %v3010, %v3012
    %v3014 = vrot.slane %v2985, 4
    %v3015 = vrot.slane %v2986, 4
    %v3016 = vsel %vm3003, %v3014, %v3015
    %v3017 = vrot.slane %v2987, 4
    %v3018 = vsel %vm3003, %v3015, %v3017
    %v3019 = vrot.slane %v2988, 4
    %v3020 = vrot.slane %v2989, 4
    %v3021 = vsel %vm3003, %v3019, %v3020
    %v3022 = vrot.slane %v2990, 4
    %v3023 = vsel %vm3003, %v3020, %v3022
    %v3032 = vadd.f32 %v2967, %v3006
    %v3033 = vadd.f32 %v2968, %v3008
    %v3034 = vadd.f32 %v2969, %v3011
    %v3035 = vadd.f32 %v2970, %v3013
    %v3036 = vadd.f32 %v2971, %v3016
    %v3037 = vadd.f32 %v2972, %v3018
    %v3038 = vadd.f32 %v2973, %v3021
    %v3039 = vadd.f32 %v2974, %v3023
    %s3040 = sld [smem:[#allocation7 + $0x1d]]
    %s3041 = sld [smem:[#allocation7 + $0x4e]]
    %v3042 = vstv %s3040
    %v3043 = vstv %s3041
    %v3044 = vmul.f32 %v3042, %v996
    %v3045 = vmul.f32 %v3042, %v997
    %v3046 = vmul.f32 %v3042, %v998
    %v3047 = vmul.f32 %v3043, %v999
    %v3048 = vmul.f32 %v3043, %v1000
    %v3049 = vmul.f32 %v3043, %v1001
    %v3050 = vmul.f32 %v3042, %v1002
    %v3051 = vmul.f32 %v3042, %v1003
    %v3052 = vmul.f32 %v3042, %v1004
    %v3053 = vmul.f32 %v3043, %v1005
    %v3054 = vmul.f32 %v3043, %v1006
    %v3055 = vmul.f32 %v3043, %v1007
    %v3068 = vrot.slane %v3044, 4
    %v3069 = vrot.slane %v3045, 4
    %v3070 = vsel %vm3003, %v3068, %v3069
    %v3071 = vrot.slane %v3046, 4
    %v3072 = vsel %vm3003, %v3069, %v3071
    %v3073 = vrot.slane %v3047, 4
    %v3074 = vrot.slane %v3048, 4
    %v3075 = vsel %vm3003, %v3073, %v3074
    %v3076 = vrot.slane %v3049, 4
    %v3077 = vsel %vm3003, %v3074, %v3076
    %v3078 = vrot.slane %v3050, 4
    %v3079 = vrot.slane %v3051, 4
    %v3080 = vsel %vm3003, %v3078, %v3079
    %v3081 = vrot.slane %v3052, 4
    %v3082 = vsel %vm3003, %v3079, %v3081
    %v3083 = vrot.slane %v3053, 4
    %v3084 = vrot.slane %v3054, 4
    %v3085 = vsel %vm3003, %v3083, %v3084
    %v3086 = vrot.slane %v3055, 4
    %v3087 = vsel %vm3003, %v3084, %v3086
    %3088 = vrot.lane.b32.xlu0 %v3070, 127
    %v3089 = vpop.permute.xlu0 %3088
    %3090 = vrot.lane.b32.xlu0 %v3072, 127
    %v3091 = vpop.permute.xlu0 %3090
    %3092 = vrot.lane.b32.xlu0 %v3075, 127
    %v3093 = vpop.permute.xlu0 %3092
    %3094 = vrot.lane.b32.xlu0 %v3077, 127
    %v3095 = vpop.permute.xlu0 %3094
    %3096 = vrot.lane.b32.xlu0 %v3080, 127
    %v3097 = vpop.permute.xlu0 %3096
    %3098 = vrot.lane.b32.xlu0 %v3082, 127
    %v3099 = vpop.permute.xlu0 %3098
    %3100 = vrot.lane.b32.xlu0 %v3085, 127
    %v3101 = vpop.permute.xlu0 %3100
    %3102 = vrot.lane.b32.xlu0 %v3087, 127
    %v3103 = vpop.permute.xlu0 %3102
    %v3112 = vadd.f32 %v3032, %v3089
    %v3113 = vadd.f32 %v3033, %v3091
    %v3114 = vadd.f32 %v3034, %v3093
    %v3115 = vadd.f32 %v3035, %v3095
    %v3116 = vadd.f32 %v3036, %v3097
    %v3117 = vadd.f32 %v3037, %v3099
    %v3118 = vadd.f32 %v3038, %v3101
    %v3119 = vadd.f32 %v3039, %v3103
    %s3120 = sld [smem:[#allocation7 + $0x1e]]
    %s3121 = sld [smem:[#allocation7 + $0x4f]]
    %v3122 = vstv %s3120
    %v3123 = vstv %s3121
    %v3124 = vmul.f32 %v3122, %v996
    %v3125 = vmul.f32 %v3122, %v997
    %v3126 = vmul.f32 %v3122, %v998
    %v3127 = vmul.f32 %v3123, %v999
    %v3128 = vmul.f32 %v3123, %v1000
    %v3129 = vmul.f32 %v3123, %v1001
    %v3130 = vmul.f32 %v3122, %v1002
    %v3131 = vmul.f32 %v3122, %v1003
    %v3132 = vmul.f32 %v3122, %v1004
    %v3133 = vmul.f32 %v3123, %v1005
    %v3134 = vmul.f32 %v3123, %v1006
    %v3135 = vmul.f32 %v3123, %v1007
    %v3148 = vrot.slane %v3124, 4
    %v3149 = vrot.slane %v3125, 4
    %v3150 = vsel %vm3003, %v3148, %v3149
    %v3151 = vrot.slane %v3126, 4
    %v3152 = vsel %vm3003, %v3149, %v3151
    %v3153 = vrot.slane %v3127, 4
    %v3154 = vrot.slane %v3128, 4
    %v3155 = vsel %vm3003, %v3153, %v3154
    %v3156 = vrot.slane %v3129, 4
    %v3157 = vsel %vm3003, %v3154, %v3156
    %v3158 = vrot.slane %v3130, 4
    %v3159 = vrot.slane %v3131, 4
    %v3160 = vsel %vm3003, %v3158, %v3159
    %v3161 = vrot.slane %v3132, 4
    %v3162 = vsel %vm3003, %v3159, %v3161
    %v3163 = vrot.slane %v3133, 4
    %v3164 = vrot.slane %v3134, 4
    %v3165 = vsel %vm3003, %v3163, %v3164
    %v3166 = vrot.slane %v3135, 4
    %v3167 = vsel %vm3003, %v3164, %v3166
    %3168 = vrot.lane.b32.xlu0 %v3150, 126
    %v3169 = vpop.permute.xlu0 %3168
    %3170 = vrot.lane.b32.xlu0 %v3152, 126
    %v3171 = vpop.permute.xlu0 %3170
    %3172 = vrot.lane.b32.xlu0 %v3155, 126
    %v3173 = vpop.permute.xlu0 %3172
    %3174 = vrot.lane.b32.xlu0 %v3157, 126
    %v3175 = vpop.permute.xlu0 %3174
    %3176 = vrot.lane.b32.xlu0 %v3160, 126
    %v3177 = vpop.permute.xlu0 %3176
    %3178 = vrot.lane.b32.xlu0 %v3162, 126
    %v3179 = vpop.permute.xlu0 %3178
    %3180 = vrot.lane.b32.xlu0 %v3165, 126
    %v3181 = vpop.permute.xlu0 %3180
    %3182 = vrot.lane.b32.xlu0 %v3167, 126
    %v3183 = vpop.permute.xlu0 %3182
    %v3192 = vadd.f32 %v3112, %v3169
    %v3193 = vadd.f32 %v3113, %v3171
    %v3194 = vadd.f32 %v3114, %v3173
    %v3195 = vadd.f32 %v3115, %v3175
    %v3196 = vadd.f32 %v3116, %v3177
    %v3197 = vadd.f32 %v3117, %v3179
    %v3198 = vadd.f32 %v3118, %v3181
    %v3199 = vadd.f32 %v3119, %v3183
    %s3200 = sld [smem:[#allocation7 + $0x1f]]
    %s3201 = sld [smem:[#allocation7 + $0x50]]
    %v3202 = vstv %s3200
    %v3203 = vstv %s3201
    %v3204 = vmul.f32 %v3202, %v996
    %v3205 = vmul.f32 %v3202, %v997
    %v3206 = vmul.f32 %v3202, %v998
    %v3207 = vmul.f32 %v3203, %v999
    %v3208 = vmul.f32 %v3203, %v1000
    %v3209 = vmul.f32 %v3203, %v1001
    %v3210 = vmul.f32 %v3202, %v1002
    %v3211 = vmul.f32 %v3202, %v1003
    %v3212 = vmul.f32 %v3202, %v1004
    %v3213 = vmul.f32 %v3203, %v1005
    %v3214 = vmul.f32 %v3203, %v1006
    %v3215 = vmul.f32 %v3203, %v1007
    %v3228 = vrot.slane %v3204, 4
    %v3229 = vrot.slane %v3205, 4
    %v3230 = vsel %vm3003, %v3228, %v3229
    %v3231 = vrot.slane %v3206, 4
    %v3232 = vsel %vm3003, %v3229, %v3231
    %v3233 = vrot.slane %v3207, 4
    %v3234 = vrot.slane %v3208, 4
    %v3235 = vsel %vm3003, %v3233, %v3234
    %v3236 = vrot.slane %v3209, 4
    %v3237 = vsel %vm3003, %v3234, %v3236
    %v3238 = vrot.slane %v3210, 4
    %v3239 = vrot.slane %v3211, 4
    %v3240 = vsel %vm3003, %v3238, %v3239
    %v3241 = vrot.slane %v3212, 4
    %v3242 = vsel %vm3003, %v3239, %v3241
    %v3243 = vrot.slane %v3213, 4
    %v3244 = vrot.slane %v3214, 4
    %v3245 = vsel %vm3003, %v3243, %v3244
    %v3246 = vrot.slane %v3215, 4
    %v3247 = vsel %vm3003, %v3244, %v3246
    %3248 = vrot.lane.b32.xlu0 %v3230, 125
    %v3249 = vpop.permute.xlu0 %3248
    %3250 = vrot.lane.b32.xlu0 %v3232, 125
    %v3251 = vpop.permute.xlu0 %3250
    %3252 = vrot.lane.b32.xlu0 %v3235, 125
    %v3253 = vpop.permute.xlu0 %3252
    %3254 = vrot.lane.b32.xlu0 %v3237, 125
    %v3255 = vpop.permute.xlu0 %3254
    %3256 = vrot.lane.b32.xlu0 %v3240, 125
    %v3257 = vpop.permute.xlu0 %3256
    %3258 = vrot.lane.b32.xlu0 %v3242, 125
    %v3259 = vpop.permute.xlu0 %3258
    %3260 = vrot.lane.b32.xlu0 %v3245, 125
    %v3261 = vpop.permute.xlu0 %3260
    %3262 = vrot.lane.b32.xlu0 %v3247, 125
    %v3263 = vpop.permute.xlu0 %3262
    %v3272 = vadd.f32 %v3192, %v3249
    %v3273 = vadd.f32 %v3193, %v3251
    %v3274 = vadd.f32 %v3194, %v3253
    %v3275 = vadd.f32 %v3195, %v3255
    %v3276 = vadd.f32 %v3196, %v3257
    %v3277 = vadd.f32 %v3197, %v3259
    %v3278 = vadd.f32 %v3198, %v3261
    %v3279 = vadd.f32 %v3199, %v3263
    %s3280 = sld [smem:[#allocation7 + $0x20]]
    %s3281 = sld [smem:[#allocation7 + $0x51]]
    %v3282 = vstv %s3280
    %v3283 = vstv %s3281
    %v3284 = vmul.f32 %v3282, %v996
    %v3285 = vmul.f32 %v3282, %v997
    %v3286 = vmul.f32 %v3282, %v998
    %v3287 = vmul.f32 %v3283, %v999
    %v3288 = vmul.f32 %v3283, %v1000
    %v3289 = vmul.f32 %v3283, %v1001
    %v3290 = vmul.f32 %v3282, %v1002
    %v3291 = vmul.f32 %v3282, %v1003
    %v3292 = vmul.f32 %v3282, %v1004
    %v3293 = vmul.f32 %v3283, %v1005
    %v3294 = vmul.f32 %v3283, %v1006
    %v3295 = vmul.f32 %v3283, %v1007
    %v3308 = vrot.slane %v3284, 4
    %v3309 = vrot.slane %v3285, 4
    %v3310 = vsel %vm3003, %v3308, %v3309
    %v3311 = vrot.slane %v3286, 4
    %v3312 = vsel %vm3003, %v3309, %v3311
    %v3313 = vrot.slane %v3287, 4
    %v3314 = vrot.slane %v3288, 4
    %v3315 = vsel %vm3003, %v3313, %v3314
    %v3316 = vrot.slane %v3289, 4
    %v3317 = vsel %vm3003, %v3314, %v3316
    %v3318 = vrot.slane %v3290, 4
    %v3319 = vrot.slane %v3291, 4
    %v3320 = vsel %vm3003, %v3318, %v3319
    %v3321 = vrot.slane %v3292, 4
    %v3322 = vsel %vm3003, %v3319, %v3321
    %v3323 = vrot.slane %v3293, 4
    %v3324 = vrot.slane %v3294, 4
    %v3325 = vsel %vm3003, %v3323, %v3324
    %v3326 = vrot.slane %v3295, 4
    %v3327 = vsel %vm3003, %v3324, %v3326
    %3328 = vrot.lane.b32.xlu0 %v3310, 124
    %v3329 = vpop.permute.xlu0 %3328
    %3330 = vrot.lane.b32.xlu0 %v3312, 124
    %v3331 = vpop.permute.xlu0 %3330
    %3332 = vrot.lane.b32.xlu0 %v3315, 124
    %v3333 = vpop.permute.xlu0 %3332
    %3334 = vrot.lane.b32.xlu0 %v3317, 124
    %v3335 = vpop.permute.xlu0 %3334
    %3336 = vrot.lane.b32.xlu0 %v3320, 124
    %v3337 = vpop.permute.xlu0 %3336
    %3338 = vrot.lane.b32.xlu0 %v3322, 124
    %v3339 = vpop.permute.xlu0 %3338
    %3340 = vrot.lane.b32.xlu0 %v3325, 124
    %v3341 = vpop.permute.xlu0 %3340
    %3342 = vrot.lane.b32.xlu0 %v3327, 124
    %v3343 = vpop.permute.xlu0 %3342
    %v3352 = vadd.f32 %v3272, %v3329
    %v3353 = vadd.f32 %v3273, %v3331
    %v3354 = vadd.f32 %v3274, %v3333
    %v3355 = vadd.f32 %v3275, %v3335
    %v3356 = vadd.f32 %v3276, %v3337
    %v3357 = vadd.f32 %v3277, %v3339
    %v3358 = vadd.f32 %v3278, %v3341
    %v3359 = vadd.f32 %v3279, %v3343
    %s3360 = sld [smem:[#allocation7 + $0x21]]
    %s3361 = sld [smem:[#allocation7 + $0x52]]
    %v3362 = vstv %s3360
    %v3363 = vstv %s3361
    %v3364 = vmul.f32 %v3362, %v996
    %v3365 = vmul.f32 %v3362, %v997
    %v3366 = vmul.f32 %v3362, %v998
    %v3367 = vmul.f32 %v3363, %v999
    %v3368 = vmul.f32 %v3363, %v1000
    %v3369 = vmul.f32 %v3363, %v1001
    %v3370 = vmul.f32 %v3362, %v1002
    %v3371 = vmul.f32 %v3362, %v1003
    %v3372 = vmul.f32 %v3362, %v1004
    %v3373 = vmul.f32 %v3363, %v1005
    %v3374 = vmul.f32 %v3363, %v1006
    %v3375 = vmul.f32 %v3363, %v1007
    %v3388 = vrot.slane %v3364, 4
    %v3389 = vrot.slane %v3365, 4
    %v3390 = vsel %vm3003, %v3388, %v3389
    %v3391 = vrot.slane %v3366, 4
    %v3392 = vsel %vm3003, %v3389, %v3391
    %v3393 = vrot.slane %v3367, 4
    %v3394 = vrot.slane %v3368, 4
    %v3395 = vsel %vm3003, %v3393, %v3394
    %v3396 = vrot.slane %v3369, 4
    %v3397 = vsel %vm3003, %v3394, %v3396
    %v3398 = vrot.slane %v3370, 4
    %v3399 = vrot.slane %v3371, 4
    %v3400 = vsel %vm3003, %v3398, %v3399
    %v3401 = vrot.slane %v3372, 4
    %v3402 = vsel %vm3003, %v3399, %v3401
    %v3403 = vrot.slane %v3373, 4
    %v3404 = vrot.slane %v3374, 4
    %v3405 = vsel %vm3003, %v3403, %v3404
    %v3406 = vrot.slane %v3375, 4
    %v3407 = vsel %vm3003, %v3404, %v3406
    %3408 = vrot.lane.b32.xlu0 %v3390, 123
    %v3409 = vpop.permute.xlu0 %3408
    %3410 = vrot.lane.b32.xlu0 %v3392, 123
    %v3411 = vpop.permute.xlu0 %3410
    %3412 = vrot.lane.b32.xlu0 %v3395, 123
    %v3413 = vpop.permute.xlu0 %3412
    %3414 = vrot.lane.b32.xlu0 %v3397, 123
    %v3415 = vpop.permute.xlu0 %3414
    %3416 = vrot.lane.b32.xlu0 %v3400, 123
    %v3417 = vpop.permute.xlu0 %3416
    %3418 = vrot.lane.b32.xlu0 %v3402, 123
    %v3419 = vpop.permute.xlu0 %3418
    %3420 = vrot.lane.b32.xlu0 %v3405, 123
    %v3421 = vpop.permute.xlu0 %3420
    %3422 = vrot.lane.b32.xlu0 %v3407, 123
    %v3423 = vpop.permute.xlu0 %3422
    %v3432 = vadd.f32 %v3352, %v3409
    %v3433 = vadd.f32 %v3353, %v3411
    %v3434 = vadd.f32 %v3354, %v3413
    %v3435 = vadd.f32 %v3355, %v3415
    %v3436 = vadd.f32 %v3356, %v3417
    %v3437 = vadd.f32 %v3357, %v3419
    %v3438 = vadd.f32 %v3358, %v3421
    %v3439 = vadd.f32 %v3359, %v3423
    %s3440 = sld [smem:[#allocation7 + $0x22]]
    %s3441 = sld [smem:[#allocation7 + $0x53]]
    %v3442 = vstv %s3440
    %v3443 = vstv %s3441
    %v3444 = vmul.f32 %v3442, %v996
    %v3445 = vmul.f32 %v3442, %v997
    %v3446 = vmul.f32 %v3442, %v998
    %v3447 = vmul.f32 %v3443, %v999
    %v3448 = vmul.f32 %v3443, %v1000
    %v3449 = vmul.f32 %v3443, %v1001
    %v3450 = vmul.f32 %v3442, %v1002
    %v3451 = vmul.f32 %v3442, %v1003
    %v3452 = vmul.f32 %v3442, %v1004
    %v3453 = vmul.f32 %v3443, %v1005
    %v3454 = vmul.f32 %v3443, %v1006
    %v3455 = vmul.f32 %v3443, %v1007
    %v3468 = vrot.slane %v3444, 4
    %v3469 = vrot.slane %v3445, 4
    %v3470 = vsel %vm3003, %v3468, %v3469
    %v3471 = vrot.slane %v3446, 4
    %v3472 = vsel %vm3003, %v3469, %v3471
    %v3473 = vrot.slane %v3447, 4
    %v3474 = vrot.slane %v3448, 4
    %v3475 = vsel %vm3003, %v3473, %v3474
    %v3476 = vrot.slane %v3449, 4
    %v3477 = vsel %vm3003, %v3474, %v3476
    %v3478 = vrot.slane %v3450, 4
    %v3479 = vrot.slane %v3451, 4
    %v3480 = vsel %vm3003, %v3478, %v3479
    %v3481 = vrot.slane %v3452, 4
    %v3482 = vsel %vm3003, %v3479, %v3481
    %v3483 = vrot.slane %v3453, 4
    %v3484 = vrot.slane %v3454, 4
    %v3485 = vsel %vm3003, %v3483, %v3484
    %v3486 = vrot.slane %v3455, 4
    %v3487 = vsel %vm3003, %v3484, %v3486
    %3488 = vrot.lane.b32.xlu0 %v3470, 122
    %v3489 = vpop.permute.xlu0 %3488
    %3490 = vrot.lane.b32.xlu0 %v3472, 122
    %v3491 = vpop.permute.xlu0 %3490
    %3492 = vrot.lane.b32.xlu0 %v3475, 122
    %v3493 = vpop.permute.xlu0 %3492
    %3494 = vrot.lane.b32.xlu0 %v3477, 122
    %v3495 = vpop.permute.xlu0 %3494
    %3496 = vrot.lane.b32.xlu0 %v3480, 122
    %v3497 = vpop.permute.xlu0 %3496
    %3498 = vrot.lane.b32.xlu0 %v3482, 122
    %v3499 = vpop.permute.xlu0 %3498
    %3500 = vrot.lane.b32.xlu0 %v3485, 122
    %v3501 = vpop.permute.xlu0 %3500
    %3502 = vrot.lane.b32.xlu0 %v3487, 122
    %v3503 = vpop.permute.xlu0 %3502
    %v3512 = vadd.f32 %v3432, %v3489
    %v3513 = vadd.f32 %v3433, %v3491
    %v3514 = vadd.f32 %v3434, %v3493
    %v3515 = vadd.f32 %v3435, %v3495
    %v3516 = vadd.f32 %v3436, %v3497
    %v3517 = vadd.f32 %v3437, %v3499
    %v3518 = vadd.f32 %v3438, %v3501
    %v3519 = vadd.f32 %v3439, %v3503
    %s3520 = sld [smem:[#allocation7 + $0x23]]
    %s3521 = sld [smem:[#allocation7 + $0x54]]
    %v3522 = vstv %s3520
    %v3523 = vstv %s3521
    %v3524 = vmul.f32 %v3522, %v996
    %v3525 = vmul.f32 %v3522, %v997
    %v3526 = vmul.f32 %v3522, %v998
    %v3527 = vmul.f32 %v3523, %v999
    %v3528 = vmul.f32 %v3523, %v1000
    %v3529 = vmul.f32 %v3523, %v1001
    %v3530 = vmul.f32 %v3522, %v1002
    %v3531 = vmul.f32 %v3522, %v1003
    %v3532 = vmul.f32 %v3522, %v1004
    %v3533 = vmul.f32 %v3523, %v1005
    %v3534 = vmul.f32 %v3523, %v1006
    %v3535 = vmul.f32 %v3523, %v1007
    %vm3548 = vcmask 1042432
    %v3549 = vrot.slane %v3524, 5
    %v3550 = vrot.slane %v3525, 5
    %v3551 = vsel %vm3548, %v3549, %v3550
    %v3552 = vrot.slane %v3526, 5
    %v3553 = vsel %vm3548, %v3550, %v3552
    %v3554 = vrot.slane %v3527, 5
    %v3555 = vrot.slane %v3528, 5
    %v3556 = vsel %vm3548, %v3554, %v3555
    %v3557 = vrot.slane %v3529, 5
    %v3558 = vsel %vm3548, %v3555, %v3557
    %v3559 = vrot.slane %v3530, 5
    %v3560 = vrot.slane %v3531, 5
    %v3561 = vsel %vm3548, %v3559, %v3560
    %v3562 = vrot.slane %v3532, 5
    %v3563 = vsel %vm3548, %v3560, %v3562
    %v3564 = vrot.slane %v3533, 5
    %v3565 = vrot.slane %v3534, 5
    %v3566 = vsel %vm3548, %v3564, %v3565
    %v3567 = vrot.slane %v3535, 5
    %v3568 = vsel %vm3548, %v3565, %v3567
    %v3577 = vadd.f32 %v3512, %v3551
    %v3578 = vadd.f32 %v3513, %v3553
    %v3579 = vadd.f32 %v3514, %v3556
    %v3580 = vadd.f32 %v3515, %v3558
    %v3581 = vadd.f32 %v3516, %v3561
    %v3582 = vadd.f32 %v3517, %v3563
    %v3583 = vadd.f32 %v3518, %v3566
    %v3584 = vadd.f32 %v3519, %v3568
    %s3585 = sld [smem:[#allocation7 + $0x24]]
    %s3586 = sld [smem:[#allocation7 + $0x55]]
    %v3587 = vstv %s3585
    %v3588 = vstv %s3586
    %v3589 = vmul.f32 %v3587, %v996
    %v3590 = vmul.f32 %v3587, %v997
    %v3591 = vmul.f32 %v3587, %v998
    %v3592 = vmul.f32 %v3588, %v999
    %v3593 = vmul.f32 %v3588, %v1000
    %v3594 = vmul.f32 %v3588, %v1001
    %v3595 = vmul.f32 %v3587, %v1002
    %v3596 = vmul.f32 %v3587, %v1003
    %v3597 = vmul.f32 %v3587, %v1004
    %v3598 = vmul.f32 %v3588, %v1005
    %v3599 = vmul.f32 %v3588, %v1006
    %v3600 = vmul.f32 %v3588, %v1007
    %v3613 = vrot.slane %v3589, 5
    %v3614 = vrot.slane %v3590, 5
    %v3615 = vsel %vm3548, %v3613, %v3614
    %v3616 = vrot.slane %v3591, 5
    %v3617 = vsel %vm3548, %v3614, %v3616
    %v3618 = vrot.slane %v3592, 5
    %v3619 = vrot.slane %v3593, 5
    %v3620 = vsel %vm3548, %v3618, %v3619
    %v3621 = vrot.slane %v3594, 5
    %v3622 = vsel %vm3548, %v3619, %v3621
    %v3623 = vrot.slane %v3595, 5
    %v3624 = vrot.slane %v3596, 5
    %v3625 = vsel %vm3548, %v3623, %v3624
    %v3626 = vrot.slane %v3597, 5
    %v3627 = vsel %vm3548, %v3624, %v3626
    %v3628 = vrot.slane %v3598, 5
    %v3629 = vrot.slane %v3599, 5
    %v3630 = vsel %vm3548, %v3628, %v3629
    %v3631 = vrot.slane %v3600, 5
    %v3632 = vsel %vm3548, %v3629, %v3631
    %3633 = vrot.lane.b32.xlu0 %v3615, 127
    %v3634 = vpop.permute.xlu0 %3633
    %3635 = vrot.lane.b32.xlu0 %v3617, 127
    %v3636 = vpop.permute.xlu0 %3635
    %3637 = vrot.lane.b32.xlu0 %v3620, 127
    %v3638 = vpop.permute.xlu0 %3637
    %3639 = vrot.lane.b32.xlu0 %v3622, 127
    %v3640 = vpop.permute.xlu0 %3639
    %3641 = vrot.lane.b32.xlu0 %v3625, 127
    %v3642 = vpop.permute.xlu0 %3641
    %3643 = vrot.lane.b32.xlu0 %v3627, 127
    %v3644 = vpop.permute.xlu0 %3643
    %3645 = vrot.lane.b32.xlu0 %v3630, 127
    %v3646 = vpop.permute.xlu0 %3645
    %3647 = vrot.lane.b32.xlu0 %v3632, 127
    %v3648 = vpop.permute.xlu0 %3647
    %v3657 = vadd.f32 %v3577, %v3634
    %v3658 = vadd.f32 %v3578, %v3636
    %v3659 = vadd.f32 %v3579, %v3638
    %v3660 = vadd.f32 %v3580, %v3640
    %v3661 = vadd.f32 %v3581, %v3642
    %v3662 = vadd.f32 %v3582, %v3644
    %v3663 = vadd.f32 %v3583, %v3646
    %v3664 = vadd.f32 %v3584, %v3648
    %s3665 = sld [smem:[#allocation7 + $0x25]]
    %s3666 = sld [smem:[#allocation7 + $0x56]]
    %v3667 = vstv %s3665
    %v3668 = vstv %s3666
    %v3669 = vmul.f32 %v3667, %v996
    %v3670 = vmul.f32 %v3667, %v997
    %v3671 = vmul.f32 %v3667, %v998
    %v3672 = vmul.f32 %v3668, %v999
    %v3673 = vmul.f32 %v3668, %v1000
    %v3674 = vmul.f32 %v3668, %v1001
    %v3675 = vmul.f32 %v3667, %v1002
    %v3676 = vmul.f32 %v3667, %v1003
    %v3677 = vmul.f32 %v3667, %v1004
    %v3678 = vmul.f32 %v3668, %v1005
    %v3679 = vmul.f32 %v3668, %v1006
    %v3680 = vmul.f32 %v3668, %v1007
    %v3693 = vrot.slane %v3669, 5
    %v3694 = vrot.slane %v3670, 5
    %v3695 = vsel %vm3548, %v3693, %v3694
    %v3696 = vrot.slane %v3671, 5
    %v3697 = vsel %vm3548, %v3694, %v3696
    %v3698 = vrot.slane %v3672, 5
    %v3699 = vrot.slane %v3673, 5
    %v3700 = vsel %vm3548, %v3698, %v3699
    %v3701 = vrot.slane %v3674, 5
    %v3702 = vsel %vm3548, %v3699, %v3701
    %v3703 = vrot.slane %v3675, 5
    %v3704 = vrot.slane %v3676, 5
    %v3705 = vsel %vm3548, %v3703, %v3704
    %v3706 = vrot.slane %v3677, 5
    %v3707 = vsel %vm3548, %v3704, %v3706
    %v3708 = vrot.slane %v3678, 5
    %v3709 = vrot.slane %v3679, 5
    %v3710 = vsel %vm3548, %v3708, %v3709
    %v3711 = vrot.slane %v3680, 5
    %v3712 = vsel %vm3548, %v3709, %v3711
    %3713 = vrot.lane.b32.xlu0 %v3695, 126
    %v3714 = vpop.permute.xlu0 %3713
    %3715 = vrot.lane.b32.xlu0 %v3697, 126
    %v3716 = vpop.permute.xlu0 %3715
    %3717 = vrot.lane.b32.xlu0 %v3700, 126
    %v3718 = vpop.permute.xlu0 %3717
    %3719 = vrot.lane.b32.xlu0 %v3702, 126
    %v3720 = vpop.permute.xlu0 %3719
    %3721 = vrot.lane.b32.xlu0 %v3705, 126
    %v3722 = vpop.permute.xlu0 %3721
    %3723 = vrot.lane.b32.xlu0 %v3707, 126
    %v3724 = vpop.permute.xlu0 %3723
    %3725 = vrot.lane.b32.xlu0 %v3710, 126
    %v3726 = vpop.permute.xlu0 %3725
    %3727 = vrot.lane.b32.xlu0 %v3712, 126
    %v3728 = vpop.permute.xlu0 %3727
    %v3737 = vadd.f32 %v3657, %v3714
    %v3738 = vadd.f32 %v3658, %v3716
    %v3739 = vadd.f32 %v3659, %v3718
    %v3740 = vadd.f32 %v3660, %v3720
    %v3741 = vadd.f32 %v3661, %v3722
    %v3742 = vadd.f32 %v3662, %v3724
    %v3743 = vadd.f32 %v3663, %v3726
    %v3744 = vadd.f32 %v3664, %v3728
    %s3745 = sld [smem:[#allocation7 + $0x26]]
    %s3746 = sld [smem:[#allocation7 + $0x57]]
    %v3747 = vstv %s3745
    %v3748 = vstv %s3746
    %v3749 = vmul.f32 %v3747, %v996
    %v3750 = vmul.f32 %v3747, %v997
    %v3751 = vmul.f32 %v3747, %v998
    %v3752 = vmul.f32 %v3748, %v999
    %v3753 = vmul.f32 %v3748, %v1000
    %v3754 = vmul.f32 %v3748, %v1001
    %v3755 = vmul.f32 %v3747, %v1002
    %v3756 = vmul.f32 %v3747, %v1003
    %v3757 = vmul.f32 %v3747, %v1004
    %v3758 = vmul.f32 %v3748, %v1005
    %v3759 = vmul.f32 %v3748, %v1006
    %v3760 = vmul.f32 %v3748, %v1007
    %v3773 = vrot.slane %v3749, 5
    %v3774 = vrot.slane %v3750, 5
    %v3775 = vsel %vm3548, %v3773, %v3774
    %v3776 = vrot.slane %v3751, 5
    %v3777 = vsel %vm3548, %v3774, %v3776
    %v3778 = vrot.slane %v3752, 5
    %v3779 = vrot.slane %v3753, 5
    %v3780 = vsel %vm3548, %v3778, %v3779
    %v3781 = vrot.slane %v3754, 5
    %v3782 = vsel %vm3548, %v3779, %v3781
    %v3783 = vrot.slane %v3755, 5
    %v3784 = vrot.slane %v3756, 5
    %v3785 = vsel %vm3548, %v3783, %v3784
    %v3786 = vrot.slane %v3757, 5
    %v3787 = vsel %vm3548, %v3784, %v3786
    %v3788 = vrot.slane %v3758, 5
    %v3789 = vrot.slane %v3759, 5
    %v3790 = vsel %vm3548, %v3788, %v3789
    %v3791 = vrot.slane %v3760, 5
    %v3792 = vsel %vm3548, %v3789, %v3791
    %3793 = vrot.lane.b32.xlu0 %v3775, 125
    %v3794 = vpop.permute.xlu0 %3793
    %3795 = vrot.lane.b32.xlu0 %v3777, 125
    %v3796 = vpop.permute.xlu0 %3795
    %3797 = vrot.lane.b32.xlu0 %v3780, 125
    %v3798 = vpop.permute.xlu0 %3797
    %3799 = vrot.lane.b32.xlu0 %v3782, 125
    %v3800 = vpop.permute.xlu0 %3799
    %3801 = vrot.lane.b32.xlu0 %v3785, 125
    %v3802 = vpop.permute.xlu0 %3801
    %3803 = vrot.lane.b32.xlu0 %v3787, 125
    %v3804 = vpop.permute.xlu0 %3803
    %3805 = vrot.lane.b32.xlu0 %v3790, 125
    %v3806 = vpop.permute.xlu0 %3805
    %3807 = vrot.lane.b32.xlu0 %v3792, 125
    %v3808 = vpop.permute.xlu0 %3807
    %v3817 = vadd.f32 %v3737, %v3794
    %v3818 = vadd.f32 %v3738, %v3796
    %v3819 = vadd.f32 %v3739, %v3798
    %v3820 = vadd.f32 %v3740, %v3800
    %v3821 = vadd.f32 %v3741, %v3802
    %v3822 = vadd.f32 %v3742, %v3804
    %v3823 = vadd.f32 %v3743, %v3806
    %v3824 = vadd.f32 %v3744, %v3808
    %s3825 = sld [smem:[#allocation7 + $0x27]]
    %s3826 = sld [smem:[#allocation7 + $0x58]]
    %v3827 = vstv %s3825
    %v3828 = vstv %s3826
    %v3829 = vmul.f32 %v3827, %v996
    %v3830 = vmul.f32 %v3827, %v997
    %v3831 = vmul.f32 %v3827, %v998
    %v3832 = vmul.f32 %v3828, %v999
    %v3833 = vmul.f32 %v3828, %v1000
    %v3834 = vmul.f32 %v3828, %v1001
    %v3835 = vmul.f32 %v3827, %v1002
    %v3836 = vmul.f32 %v3827, %v1003
    %v3837 = vmul.f32 %v3827, %v1004
    %v3838 = vmul.f32 %v3828, %v1005
    %v3839 = vmul.f32 %v3828, %v1006
    %v3840 = vmul.f32 %v3828, %v1007
    %v3853 = vrot.slane %v3829, 5
    %v3854 = vrot.slane %v3830, 5
    %v3855 = vsel %vm3548, %v3853, %v3854
    %v3856 = vrot.slane %v3831, 5
    %v3857 = vsel %vm3548, %v3854, %v3856
    %v3858 = vrot.slane %v3832, 5
    %v3859 = vrot.slane %v3833, 5
    %v3860 = vsel %vm3548, %v3858, %v3859
    %v3861 = vrot.slane %v3834, 5
    %v3862 = vsel %vm3548, %v3859, %v3861
    %v3863 = vrot.slane %v3835, 5
    %v3864 = vrot.slane %v3836, 5
    %v3865 = vsel %vm3548, %v3863, %v3864
    %v3866 = vrot.slane %v3837, 5
    %v3867 = vsel %vm3548, %v3864, %v3866
    %v3868 = vrot.slane %v3838, 5
    %v3869 = vrot.slane %v3839, 5
    %v3870 = vsel %vm3548, %v3868, %v3869
    %v3871 = vrot.slane %v3840, 5
    %v3872 = vsel %vm3548, %v3869, %v3871
    %3873 = vrot.lane.b32.xlu0 %v3855, 124
    %v3874 = vpop.permute.xlu0 %3873
    %3875 = vrot.lane.b32.xlu0 %v3857, 124
    %v3876 = vpop.permute.xlu0 %3875
    %3877 = vrot.lane.b32.xlu0 %v3860, 124
    %v3878 = vpop.permute.xlu0 %3877
    %3879 = vrot.lane.b32.xlu0 %v3862, 124
    %v3880 = vpop.permute.xlu0 %3879
    %3881 = vrot.lane.b32.xlu0 %v3865, 124
    %v3882 = vpop.permute.xlu0 %3881
    %3883 = vrot.lane.b32.xlu0 %v3867, 124
    %v3884 = vpop.permute.xlu0 %3883
    %3885 = vrot.lane.b32.xlu0 %v3870, 124
    %v3886 = vpop.permute.xlu0 %3885
    %3887 = vrot.lane.b32.xlu0 %v3872, 124
    %v3888 = vpop.permute.xlu0 %3887
    %v3897 = vadd.f32 %v3817, %v3874
    %v3898 = vadd.f32 %v3818, %v3876
    %v3899 = vadd.f32 %v3819, %v3878
    %v3900 = vadd.f32 %v3820, %v3880
    %v3901 = vadd.f32 %v3821, %v3882
    %v3902 = vadd.f32 %v3822, %v3884
    %v3903 = vadd.f32 %v3823, %v3886
    %v3904 = vadd.f32 %v3824, %v3888
    %s3905 = sld [smem:[#allocation7 + $0x28]]
    %s3906 = sld [smem:[#allocation7 + $0x59]]
    %v3907 = vstv %s3905
    %v3908 = vstv %s3906
    %v3909 = vmul.f32 %v3907, %v996
    %v3910 = vmul.f32 %v3907, %v997
    %v3911 = vmul.f32 %v3907, %v998
    %v3912 = vmul.f32 %v3908, %v999
    %v3913 = vmul.f32 %v3908, %v1000
    %v3914 = vmul.f32 %v3908, %v1001
    %v3915 = vmul.f32 %v3907, %v1002
    %v3916 = vmul.f32 %v3907, %v1003
    %v3917 = vmul.f32 %v3907, %v1004
    %v3918 = vmul.f32 %v3908, %v1005
    %v3919 = vmul.f32 %v3908, %v1006
    %v3920 = vmul.f32 %v3908, %v1007
    %v3933 = vrot.slane %v3909, 5
    %v3934 = vrot.slane %v3910, 5
    %v3935 = vsel %vm3548, %v3933, %v3934
    %v3936 = vrot.slane %v3911, 5
    %v3937 = vsel %vm3548, %v3934, %v3936
    %v3938 = vrot.slane %v3912, 5
    %v3939 = vrot.slane %v3913, 5
    %v3940 = vsel %vm3548, %v3938, %v3939
    %v3941 = vrot.slane %v3914, 5
    %v3942 = vsel %vm3548, %v3939, %v3941
    %v3943 = vrot.slane %v3915, 5
    %v3944 = vrot.slane %v3916, 5
    %v3945 = vsel %vm3548, %v3943, %v3944
    %v3946 = vrot.slane %v3917, 5
    %v3947 = vsel %vm3548, %v3944, %v3946
    %v3948 = vrot.slane %v3918, 5
    %v3949 = vrot.slane %v3919, 5
    %v3950 = vsel %vm3548, %v3948, %v3949
    %v3951 = vrot.slane %v3920, 5
    %v3952 = vsel %vm3548, %v3949, %v3951
    %3953 = vrot.lane.b32.xlu0 %v3935, 123
    %v3954 = vpop.permute.xlu0 %3953
    %3955 = vrot.lane.b32.xlu0 %v3937, 123
    %v3956 = vpop.permute.xlu0 %3955
    %3957 = vrot.lane.b32.xlu0 %v3940, 123
    %v3958 = vpop.permute.xlu0 %3957
    %3959 = vrot.lane.b32.xlu0 %v3942, 123
    %v3960 = vpop.permute.xlu0 %3959
    %3961 = vrot.lane.b32.xlu0 %v3945, 123
    %v3962 = vpop.permute.xlu0 %3961
    %3963 = vrot.lane.b32.xlu0 %v3947, 123
    %v3964 = vpop.permute.xlu0 %3963
    %3965 = vrot.lane.b32.xlu0 %v3950, 123
    %v3966 = vpop.permute.xlu0 %3965
    %3967 = vrot.lane.b32.xlu0 %v3952, 123
    %v3968 = vpop.permute.xlu0 %3967
    %v3977 = vadd.f32 %v3897, %v3954
    %v3978 = vadd.f32 %v3898, %v3956
    %v3979 = vadd.f32 %v3899, %v3958
    %v3980 = vadd.f32 %v3900, %v3960
    %v3981 = vadd.f32 %v3901, %v3962
    %v3982 = vadd.f32 %v3902, %v3964
    %v3983 = vadd.f32 %v3903, %v3966
    %v3984 = vadd.f32 %v3904, %v3968
    %s3985 = sld [smem:[#allocation7 + $0x29]]
    %s3986 = sld [smem:[#allocation7 + $0x5a]]
    %v3987 = vstv %s3985
    %v3988 = vstv %s3986
    %v3989 = vmul.f32 %v3987, %v996
    %v3990 = vmul.f32 %v3987, %v997
    %v3991 = vmul.f32 %v3987, %v998
    %v3992 = vmul.f32 %v3988, %v999
    %v3993 = vmul.f32 %v3988, %v1000
    %v3994 = vmul.f32 %v3988, %v1001
    %v3995 = vmul.f32 %v3987, %v1002
    %v3996 = vmul.f32 %v3987, %v1003
    %v3997 = vmul.f32 %v3987, %v1004
    %v3998 = vmul.f32 %v3988, %v1005
    %v3999 = vmul.f32 %v3988, %v1006
    %v4000 = vmul.f32 %v3988, %v1007
    %v4013 = vrot.slane %v3989, 5
    %v4014 = vrot.slane %v3990, 5
    %v4015 = vsel %vm3548, %v4013, %v4014
    %v4016 = vrot.slane %v3991, 5
    %v4017 = vsel %vm3548, %v4014, %v4016
    %v4018 = vrot.slane %v3992, 5
    %v4019 = vrot.slane %v3993, 5
    %v4020 = vsel %vm3548, %v4018, %v4019
    %v4021 = vrot.slane %v3994, 5
    %v4022 = vsel %vm3548, %v4019, %v4021
    %v4023 = vrot.slane %v3995, 5
    %v4024 = vrot.slane %v3996, 5
    %v4025 = vsel %vm3548, %v4023, %v4024
    %v4026 = vrot.slane %v3997, 5
    %v4027 = vsel %vm3548, %v4024, %v4026
    %v4028 = vrot.slane %v3998, 5
    %v4029 = vrot.slane %v3999, 5
    %v4030 = vsel %vm3548, %v4028, %v4029
    %v4031 = vrot.slane %v4000, 5
    %v4032 = vsel %vm3548, %v4029, %v4031
    %4033 = vrot.lane.b32.xlu0 %v4015, 122
    %v4034 = vpop.permute.xlu0 %4033
    %4035 = vrot.lane.b32.xlu0 %v4017, 122
    %v4036 = vpop.permute.xlu0 %4035
    %4037 = vrot.lane.b32.xlu0 %v4020, 122
    %v4038 = vpop.permute.xlu0 %4037
    %4039 = vrot.lane.b32.xlu0 %v4022, 122
    %v4040 = vpop.permute.xlu0 %4039
    %4041 = vrot.lane.b32.xlu0 %v4025, 122
    %v4042 = vpop.permute.xlu0 %4041
    %4043 = vrot.lane.b32.xlu0 %v4027, 122
    %v4044 = vpop.permute.xlu0 %4043
    %4045 = vrot.lane.b32.xlu0 %v4030, 122
    %v4046 = vpop.permute.xlu0 %4045
    %4047 = vrot.lane.b32.xlu0 %v4032, 122
    %v4048 = vpop.permute.xlu0 %4047
    %v4057 = vadd.f32 %v3977, %v4034
    %v4058 = vadd.f32 %v3978, %v4036
    %v4059 = vadd.f32 %v3979, %v4038
    %v4060 = vadd.f32 %v3980, %v4040
    %v4061 = vadd.f32 %v3981, %v4042
    %v4062 = vadd.f32 %v3982, %v4044
    %v4063 = vadd.f32 %v3983, %v4046
    %v4064 = vadd.f32 %v3984, %v4048
    %s4065 = sld [smem:[#allocation7 + $0x2a]]
    %s4066 = sld [smem:[#allocation7 + $0x5b]]
    %v4067 = vstv %s4065
    %v4068 = vstv %s4066
    %v4069 = vmul.f32 %v4067, %v996
    %v4070 = vmul.f32 %v4067, %v997
    %v4071 = vmul.f32 %v4067, %v998
    %v4072 = vmul.f32 %v4068, %v999
    %v4073 = vmul.f32 %v4068, %v1000
    %v4074 = vmul.f32 %v4068, %v1001
    %v4075 = vmul.f32 %v4067, %v1002
    %v4076 = vmul.f32 %v4067, %v1003
    %v4077 = vmul.f32 %v4067, %v1004
    %v4078 = vmul.f32 %v4068, %v1005
    %v4079 = vmul.f32 %v4068, %v1006
    %v4080 = vmul.f32 %v4068, %v1007
    %v4093 = vrot.slane %v4069, 6
    %v4094 = vrot.slane %v4070, 6
    %v4095 = vsel %vm224, %v4093, %v4094
    %v4096 = vrot.slane %v4071, 6
    %v4097 = vsel %vm224, %v4094, %v4096
    %v4098 = vrot.slane %v4072, 6
    %v4099 = vrot.slane %v4073, 6
    %v4100 = vsel %vm224, %v4098, %v4099
    %v4101 = vrot.slane %v4074, 6
    %v4102 = vsel %vm224, %v4099, %v4101
    %v4103 = vrot.slane %v4075, 6
    %v4104 = vrot.slane %v4076, 6
    %v4105 = vsel %vm224, %v4103, %v4104
    %v4106 = vrot.slane %v4077, 6
    %v4107 = vsel %vm224, %v4104, %v4106
    %v4108 = vrot.slane %v4078, 6
    %v4109 = vrot.slane %v4079, 6
    %v4110 = vsel %vm224, %v4108, %v4109
    %v4111 = vrot.slane %v4080, 6
    %v4112 = vsel %vm224, %v4109, %v4111
    %v4121 = vadd.f32 %v4057, %v4095
    %v4122 = vadd.f32 %v4058, %v4097
    %v4123 = vadd.f32 %v4059, %v4100
    %v4124 = vadd.f32 %v4060, %v4102
    %v4125 = vadd.f32 %v4061, %v4105
    %v4126 = vadd.f32 %v4062, %v4107
    %v4127 = vadd.f32 %v4063, %v4110
    %v4128 = vadd.f32 %v4064, %v4112
    %s4129 = sld [smem:[#allocation7 + $0x2b]]
    %s4130 = sld [smem:[#allocation7 + $0x5c]]
    %v4131 = vstv %s4129
    %v4132 = vstv %s4130
    %v4133 = vmul.f32 %v4131, %v996
    %v4134 = vmul.f32 %v4131, %v997
    %v4135 = vmul.f32 %v4131, %v998
    %v4136 = vmul.f32 %v4132, %v999
    %v4137 = vmul.f32 %v4132, %v1000
    %v4138 = vmul.f32 %v4132, %v1001
    %v4139 = vmul.f32 %v4131, %v1002
    %v4140 = vmul.f32 %v4131, %v1003
    %v4141 = vmul.f32 %v4131, %v1004
    %v4142 = vmul.f32 %v4132, %v1005
    %v4143 = vmul.f32 %v4132, %v1006
    %v4144 = vmul.f32 %v4132, %v1007
    %v4157 = vrot.slane %v4133, 6
    %v4158 = vrot.slane %v4134, 6
    %v4159 = vsel %vm224, %v4157, %v4158
    %v4160 = vrot.slane %v4135, 6
    %v4161 = vsel %vm224, %v4158, %v4160
    %v4162 = vrot.slane %v4136, 6
    %v4163 = vrot.slane %v4137, 6
    %v4164 = vsel %vm224, %v4162, %v4163
    %v4165 = vrot.slane %v4138, 6
    %v4166 = vsel %vm224, %v4163, %v4165
    %v4167 = vrot.slane %v4139, 6
    %v4168 = vrot.slane %v4140, 6
    %v4169 = vsel %vm224, %v4167, %v4168
    %v4170 = vrot.slane %v4141, 6
    %v4171 = vsel %vm224, %v4168, %v4170
    %v4172 = vrot.slane %v4142, 6
    %v4173 = vrot.slane %v4143, 6
    %v4174 = vsel %vm224, %v4172, %v4173
    %v4175 = vrot.slane %v4144, 6
    %v4176 = vsel %vm224, %v4173, %v4175
    %4177 = vrot.lane.b32.xlu0 %v4159, 127
    %v4178 = vpop.permute.xlu0 %4177
    %4179 = vrot.lane.b32.xlu0 %v4161, 127
    %v4180 = vpop.permute.xlu0 %4179
    %4181 = vrot.lane.b32.xlu0 %v4164, 127
    %v4182 = vpop.permute.xlu0 %4181
    %4183 = vrot.lane.b32.xlu0 %v4166, 127
    %v4184 = vpop.permute.xlu0 %4183
    %4185 = vrot.lane.b32.xlu0 %v4169, 127
    %v4186 = vpop.permute.xlu0 %4185
    %4187 = vrot.lane.b32.xlu0 %v4171, 127
    %v4188 = vpop.permute.xlu0 %4187
    %4189 = vrot.lane.b32.xlu0 %v4174, 127
    %v4190 = vpop.permute.xlu0 %4189
    %4191 = vrot.lane.b32.xlu0 %v4176, 127
    %v4192 = vpop.permute.xlu0 %4191
    %v4201 = vadd.f32 %v4121, %v4178
    %v4202 = vadd.f32 %v4122, %v4180
    %v4203 = vadd.f32 %v4123, %v4182
    %v4204 = vadd.f32 %v4124, %v4184
    %v4205 = vadd.f32 %v4125, %v4186
    %v4206 = vadd.f32 %v4126, %v4188
    %v4207 = vadd.f32 %v4127, %v4190
    %v4208 = vadd.f32 %v4128, %v4192
    %s4209 = sld [smem:[#allocation7 + $0x2c]]
    %s4210 = sld [smem:[#allocation7 + $0x5d]]
    %v4211 = vstv %s4209
    %v4212 = vstv %s4210
    %v4213 = vmul.f32 %v4211, %v996
    %v4214 = vmul.f32 %v4211, %v997
    %v4215 = vmul.f32 %v4211, %v998
    %v4216 = vmul.f32 %v4212, %v999
    %v4217 = vmul.f32 %v4212, %v1000
    %v4218 = vmul.f32 %v4212, %v1001
    %v4219 = vmul.f32 %v4211, %v1002
    %v4220 = vmul.f32 %v4211, %v1003
    %v4221 = vmul.f32 %v4211, %v1004
    %v4222 = vmul.f32 %v4212, %v1005
    %v4223 = vmul.f32 %v4212, %v1006
    %v4224 = vmul.f32 %v4212, %v1007
    %v4237 = vrot.slane %v4213, 6
    %v4238 = vrot.slane %v4214, 6
    %v4239 = vsel %vm224, %v4237, %v4238
    %v4240 = vrot.slane %v4215, 6
    %v4241 = vsel %vm224, %v4238, %v4240
    %v4242 = vrot.slane %v4216, 6
    %v4243 = vrot.slane %v4217, 6
    %v4244 = vsel %vm224, %v4242, %v4243
    %v4245 = vrot.slane %v4218, 6
    %v4246 = vsel %vm224, %v4243, %v4245
    %v4247 = vrot.slane %v4219, 6
    %v4248 = vrot.slane %v4220, 6
    %v4249 = vsel %vm224, %v4247, %v4248
    %v4250 = vrot.slane %v4221, 6
    %v4251 = vsel %vm224, %v4248, %v4250
    %v4252 = vrot.slane %v4222, 6
    %v4253 = vrot.slane %v4223, 6
    %v4254 = vsel %vm224, %v4252, %v4253
    %v4255 = vrot.slane %v4224, 6
    %v4256 = vsel %vm224, %v4253, %v4255
    %4257 = vrot.lane.b32.xlu0 %v4239, 126
    %v4258 = vpop.permute.xlu0 %4257
    %4259 = vrot.lane.b32.xlu0 %v4241, 126
    %v4260 = vpop.permute.xlu0 %4259
    %4261 = vrot.lane.b32.xlu0 %v4244, 126
    %v4262 = vpop.permute.xlu0 %4261
    %4263 = vrot.lane.b32.xlu0 %v4246, 126
    %v4264 = vpop.permute.xlu0 %4263
    %4265 = vrot.lane.b32.xlu0 %v4249, 126
    %v4266 = vpop.permute.xlu0 %4265
    %4267 = vrot.lane.b32.xlu0 %v4251, 126
    %v4268 = vpop.permute.xlu0 %4267
    %4269 = vrot.lane.b32.xlu0 %v4254, 126
    %v4270 = vpop.permute.xlu0 %4269
    %4271 = vrot.lane.b32.xlu0 %v4256, 126
    %v4272 = vpop.permute.xlu0 %4271
    %v4281 = vadd.f32 %v4201, %v4258
    %v4282 = vadd.f32 %v4202, %v4260
    %v4283 = vadd.f32 %v4203, %v4262
    %v4284 = vadd.f32 %v4204, %v4264
    %v4285 = vadd.f32 %v4205, %v4266
    %v4286 = vadd.f32 %v4206, %v4268
    %v4287 = vadd.f32 %v4207, %v4270
    %v4288 = vadd.f32 %v4208, %v4272
    %s4289 = sld [smem:[#allocation7 + $0x2d]]
    %s4290 = sld [smem:[#allocation7 + $0x5e]]
    %v4291 = vstv %s4289
    %v4292 = vstv %s4290
    %v4293 = vmul.f32 %v4291, %v996
    %v4294 = vmul.f32 %v4291, %v997
    %v4295 = vmul.f32 %v4291, %v998
    %v4296 = vmul.f32 %v4292, %v999
    %v4297 = vmul.f32 %v4292, %v1000
    %v4298 = vmul.f32 %v4292, %v1001
    %v4299 = vmul.f32 %v4291, %v1002
    %v4300 = vmul.f32 %v4291, %v1003
    %v4301 = vmul.f32 %v4291, %v1004
    %v4302 = vmul.f32 %v4292, %v1005
    %v4303 = vmul.f32 %v4292, %v1006
    %v4304 = vmul.f32 %v4292, %v1007
    %v4317 = vrot.slane %v4293, 6
    %v4318 = vrot.slane %v4294, 6
    %v4319 = vsel %vm224, %v4317, %v4318
    %v4320 = vrot.slane %v4295, 6
    %v4321 = vsel %vm224, %v4318, %v4320
    %v4322 = vrot.slane %v4296, 6
    %v4323 = vrot.slane %v4297, 6
    %v4324 = vsel %vm224, %v4322, %v4323
    %v4325 = vrot.slane %v4298, 6
    %v4326 = vsel %vm224, %v4323, %v4325
    %v4327 = vrot.slane %v4299, 6
    %v4328 = vrot.slane %v4300, 6
    %v4329 = vsel %vm224, %v4327, %v4328
    %v4330 = vrot.slane %v4301, 6
    %v4331 = vsel %vm224, %v4328, %v4330
    %v4332 = vrot.slane %v4302, 6
    %v4333 = vrot.slane %v4303, 6
    %v4334 = vsel %vm224, %v4332, %v4333
    %v4335 = vrot.slane %v4304, 6
    %v4336 = vsel %vm224, %v4333, %v4335
    %4337 = vrot.lane.b32.xlu0 %v4319, 125
    %v4338 = vpop.permute.xlu0 %4337
    %4339 = vrot.lane.b32.xlu0 %v4321, 125
    %v4340 = vpop.permute.xlu0 %4339
    %4341 = vrot.lane.b32.xlu0 %v4324, 125
    %v4342 = vpop.permute.xlu0 %4341
    %4343 = vrot.lane.b32.xlu0 %v4326, 125
    %v4344 = vpop.permute.xlu0 %4343
    %4345 = vrot.lane.b32.xlu0 %v4329, 125
    %v4346 = vpop.permute.xlu0 %4345
    %4347 = vrot.lane.b32.xlu0 %v4331, 125
    %v4348 = vpop.permute.xlu0 %4347
    %4349 = vrot.lane.b32.xlu0 %v4334, 125
    %v4350 = vpop.permute.xlu0 %4349
    %4351 = vrot.lane.b32.xlu0 %v4336, 125
    %v4352 = vpop.permute.xlu0 %4351
    %v4361 = vadd.f32 %v4281, %v4338
    %v4362 = vadd.f32 %v4282, %v4340
    %v4363 = vadd.f32 %v4283, %v4342
    %v4364 = vadd.f32 %v4284, %v4344
    %v4365 = vadd.f32 %v4285, %v4346
    %v4366 = vadd.f32 %v4286, %v4348
    %v4367 = vadd.f32 %v4287, %v4350
    %v4368 = vadd.f32 %v4288, %v4352
    %s4369 = sld [smem:[#allocation7 + $0x2e]]
    %s4370 = sld [smem:[#allocation7 + $0x5f]]
    %v4371 = vstv %s4369
    %v4372 = vstv %s4370
    %v4373 = vmul.f32 %v4371, %v996
    %v4374 = vmul.f32 %v4371, %v997
    %v4375 = vmul.f32 %v4371, %v998
    %v4376 = vmul.f32 %v4372, %v999
    %v4377 = vmul.f32 %v4372, %v1000
    %v4378 = vmul.f32 %v4372, %v1001
    %v4379 = vmul.f32 %v4371, %v1002
    %v4380 = vmul.f32 %v4371, %v1003
    %v4381 = vmul.f32 %v4371, %v1004
    %v4382 = vmul.f32 %v4372, %v1005
    %v4383 = vmul.f32 %v4372, %v1006
    %v4384 = vmul.f32 %v4372, %v1007
    %v4397 = vrot.slane %v4373, 6
    %v4398 = vrot.slane %v4374, 6
    %v4399 = vsel %vm224, %v4397, %v4398
    %v4400 = vrot.slane %v4375, 6
    %v4401 = vsel %vm224, %v4398, %v4400
    %v4402 = vrot.slane %v4376, 6
    %v4403 = vrot.slane %v4377, 6
    %v4404 = vsel %vm224, %v4402, %v4403
    %v4405 = vrot.slane %v4378, 6
    %v4406 = vsel %vm224, %v4403, %v4405
    %v4407 = vrot.slane %v4379, 6
    %v4408 = vrot.slane %v4380, 6
    %v4409 = vsel %vm224, %v4407, %v4408
    %v4410 = vrot.slane %v4381, 6
    %v4411 = vsel %vm224, %v4408, %v4410
    %v4412 = vrot.slane %v4382, 6
    %v4413 = vrot.slane %v4383, 6
    %v4414 = vsel %vm224, %v4412, %v4413
    %v4415 = vrot.slane %v4384, 6
    %v4416 = vsel %vm224, %v4413, %v4415
    %4417 = vrot.lane.b32.xlu0 %v4399, 124
    %v4418 = vpop.permute.xlu0 %4417
    %4419 = vrot.lane.b32.xlu0 %v4401, 124
    %v4420 = vpop.permute.xlu0 %4419
    %4421 = vrot.lane.b32.xlu0 %v4404, 124
    %v4422 = vpop.permute.xlu0 %4421
    %4423 = vrot.lane.b32.xlu0 %v4406, 124
    %v4424 = vpop.permute.xlu0 %4423
    %4425 = vrot.lane.b32.xlu0 %v4409, 124
    %v4426 = vpop.permute.xlu0 %4425
    %4427 = vrot.lane.b32.xlu0 %v4411, 124
    %v4428 = vpop.permute.xlu0 %4427
    %4429 = vrot.lane.b32.xlu0 %v4414, 124
    %v4430 = vpop.permute.xlu0 %4429
    %4431 = vrot.lane.b32.xlu0 %v4416, 124
    %v4432 = vpop.permute.xlu0 %4431
    %v4441 = vadd.f32 %v4361, %v4418
    %v4442 = vadd.f32 %v4362, %v4420
    %v4443 = vadd.f32 %v4363, %v4422
    %v4444 = vadd.f32 %v4364, %v4424
    %v4445 = vadd.f32 %v4365, %v4426
    %v4446 = vadd.f32 %v4366, %v4428
    %v4447 = vadd.f32 %v4367, %v4430
    %v4448 = vadd.f32 %v4368, %v4432
    %s4449 = sld [smem:[#allocation7 + $0x2f]]
    %s4450 = sld [smem:[#allocation7 + $0x60]]
    %v4451 = vstv %s4449
    %v4452 = vstv %s4450
    %v4453 = vmul.f32 %v4451, %v996
    %v4454 = vmul.f32 %v4451, %v997
    %v4455 = vmul.f32 %v4451, %v998
    %v4456 = vmul.f32 %v4452, %v999
    %v4457 = vmul.f32 %v4452, %v1000
    %v4458 = vmul.f32 %v4452, %v1001
    %v4459 = vmul.f32 %v4451, %v1002
    %v4460 = vmul.f32 %v4451, %v1003
    %v4461 = vmul.f32 %v4451, %v1004
    %v4462 = vmul.f32 %v4452, %v1005
    %v4463 = vmul.f32 %v4452, %v1006
    %v4464 = vmul.f32 %v4452, %v1007
    %v4477 = vrot.slane %v4453, 6
    %v4478 = vrot.slane %v4454, 6
    %v4479 = vsel %vm224, %v4477, %v4478
    %v4480 = vrot.slane %v4455, 6
    %v4481 = vsel %vm224, %v4478, %v4480
    %v4482 = vrot.slane %v4456, 6
    %v4483 = vrot.slane %v4457, 6
    %v4484 = vsel %vm224, %v4482, %v4483
    %v4485 = vrot.slane %v4458, 6
    %v4486 = vsel %vm224, %v4483, %v4485
    %v4487 = vrot.slane %v4459, 6
    %v4488 = vrot.slane %v4460, 6
    %v4489 = vsel %vm224, %v4487, %v4488
    %v4490 = vrot.slane %v4461, 6
    %v4491 = vsel %vm224, %v4488, %v4490
    %v4492 = vrot.slane %v4462, 6
    %v4493 = vrot.slane %v4463, 6
    %v4494 = vsel %vm224, %v4492, %v4493
    %v4495 = vrot.slane %v4464, 6
    %v4496 = vsel %vm224, %v4493, %v4495
    %4497 = vrot.lane.b32.xlu0 %v4479, 123
    %v4498 = vpop.permute.xlu0 %4497
    %4499 = vrot.lane.b32.xlu0 %v4481, 123
    %v4500 = vpop.permute.xlu0 %4499
    %4501 = vrot.lane.b32.xlu0 %v4484, 123
    %v4502 = vpop.permute.xlu0 %4501
    %4503 = vrot.lane.b32.xlu0 %v4486, 123
    %v4504 = vpop.permute.xlu0 %4503
    %4505 = vrot.lane.b32.xlu0 %v4489, 123
    %v4506 = vpop.permute.xlu0 %4505
    %4507 = vrot.lane.b32.xlu0 %v4491, 123
    %v4508 = vpop.permute.xlu0 %4507
    %4509 = vrot.lane.b32.xlu0 %v4494, 123
    %v4510 = vpop.permute.xlu0 %4509
    %4511 = vrot.lane.b32.xlu0 %v4496, 123
    %v4512 = vpop.permute.xlu0 %4511
    %v4521 = vadd.f32 %v4441, %v4498
    %v4522 = vadd.f32 %v4442, %v4500
    %v4523 = vadd.f32 %v4443, %v4502
    %v4524 = vadd.f32 %v4444, %v4504
    %v4525 = vadd.f32 %v4445, %v4506
    %v4526 = vadd.f32 %v4446, %v4508
    %v4527 = vadd.f32 %v4447, %v4510
    %v4528 = vadd.f32 %v4448, %v4512
    %s4529 = sld [smem:[#allocation7 + $0x30]]
    %s4530 = sld [smem:[#allocation7 + $0x61]]
    %v4531 = vstv %s4529
    %v4532 = vstv %s4530
    %v4533 = vmul.f32 %v4531, %v996
    %v4534 = vmul.f32 %v4531, %v997
    %v4535 = vmul.f32 %v4531, %v998
    %v4536 = vmul.f32 %v4532, %v999
    %v4537 = vmul.f32 %v4532, %v1000
    %v4538 = vmul.f32 %v4532, %v1001
    %v4539 = vmul.f32 %v4531, %v1002
    %v4540 = vmul.f32 %v4531, %v1003
    %v4541 = vmul.f32 %v4531, %v1004
    %v4542 = vmul.f32 %v4532, %v1005
    %v4543 = vmul.f32 %v4532, %v1006
    %v4544 = vmul.f32 %v4532, %v1007
    %v4557 = vrot.slane %v4533, 6
    %v4558 = vrot.slane %v4534, 6
    %v4559 = vsel %vm224, %v4557, %v4558
    %v4560 = vrot.slane %v4535, 6
    %v4561 = vsel %vm224, %v4558, %v4560
    %v4562 = vrot.slane %v4536, 6
    %v4563 = vrot.slane %v4537, 6
    %v4564 = vsel %vm224, %v4562, %v4563
    %v4565 = vrot.slane %v4538, 6
    %v4566 = vsel %vm224, %v4563, %v4565
    %v4567 = vrot.slane %v4539, 6
    %v4568 = vrot.slane %v4540, 6
    %v4569 = vsel %vm224, %v4567, %v4568
    %v4570 = vrot.slane %v4541, 6
    %v4571 = vsel %vm224, %v4568, %v4570
    %v4572 = vrot.slane %v4542, 6
    %v4573 = vrot.slane %v4543, 6
    %v4574 = vsel %vm224, %v4572, %v4573
    %v4575 = vrot.slane %v4544, 6
    %v4576 = vsel %vm224, %v4573, %v4575
    %4577 = vrot.lane.b32.xlu0 %v4559, 122
    %v4578 = vpop.permute.xlu0 %4577
    %4579 = vrot.lane.b32.xlu0 %v4561, 122
    %v4580 = vpop.permute.xlu0 %4579
    %4581 = vrot.lane.b32.xlu0 %v4564, 122
    %v4582 = vpop.permute.xlu0 %4581
    %4583 = vrot.lane.b32.xlu0 %v4566, 122
    %v4584 = vpop.permute.xlu0 %4583
    %4585 = vrot.lane.b32.xlu0 %v4569, 122
    %v4586 = vpop.permute.xlu0 %4585
    %4587 = vrot.lane.b32.xlu0 %v4571, 122
    %v4588 = vpop.permute.xlu0 %4587
    %4589 = vrot.lane.b32.xlu0 %v4574, 122
    %v4590 = vpop.permute.xlu0 %4589
    %4591 = vrot.lane.b32.xlu0 %v4576, 122
    %v4592 = vpop.permute.xlu0 %4591
    %v4601 = vadd.f32 %v4521, %v4578
    %v4602 = vadd.f32 %v4522, %v4580
    %v4603 = vadd.f32 %v4523, %v4582
    %v4604 = vadd.f32 %v4524, %v4584
    %v4605 = vadd.f32 %v4525, %v4586
    %v4606 = vadd.f32 %v4526, %v4588
    %v4607 = vadd.f32 %v4527, %v4590
    %v4608 = vadd.f32 %v4528, %v4592
    %v4609 = vadd.f32 %v4601, %v4603
    %v4610 = vadd.f32 %v4602, %v4604
    %v4611 = vadd.f32 %v4605, %v4607
    %v4612 = vadd.f32 %v4606, %v4608
    %v4613 = vxor.u32 %v4609, 2147483648
    %v4614 = vxor.u32 %v4610, 2147483648
    %v4615 = vxor.u32 %v4611, 2147483648
    %v4616 = vxor.u32 %v4612, 2147483648
    %v4617 = vmul.f32 %v4613, 1.442695
    %v4618 = vpow.pop %v4617
    %v4619 = vmul.f32 %v4614, 1.442695
    %v4620 = vpow.pop %v4619
    %v4621 = vmul.f32 %v4615, 1.442695
    %v4622 = vpow.pop %v4621
    %v4623 = vmul.f32 %v4616, 1.442695
    %v4624 = vpow.pop %v4623
    %v4625 = vadd.f32 %v4618, 1.0
    %v4626 = vadd.f32 %v4620, 1.0
    %v4627 = vadd.f32 %v4622, 1.0
    %v4628 = vadd.f32 %v4624, 1.0
    %v4629 = vrcp.pop %v4625
    %v4630 = vmul.f32 1.0, %v4629
    %v4631 = vrcp.pop %v4626
    %v4632 = vmul.f32 1.0, %v4631
    %v4633 = vrcp.pop %v4627
    %v4634 = vmul.f32 1.0, %v4633
    %v4635 = vrcp.pop %v4628
    %v4636 = vmul.f32 1.0, %v4635
    %v4637 = vcombine.high %v4630, 0.0
    %v4639 = vunpack.c.l.s4 1983009808
    %v4640 = vunpack.c.0.s8 %v4639
    %v4641 = vlaneseq
    %v4642 = vshrl.u32 %v4641, 7
    %v4643 = vsub.s32 %v4640, %v4642
    %v4644 = vrot.slane %v4630, %v4643
    %v4646 = vunpack.c.l.s4 1983009808
    %v4647 = vunpack.c.0.s8 %v4646
    %v4648 = vlaneseq
    %v4649 = vshrl.u32 %v4648, 7
    %v4650 = vsub.s32 %v4647, %v4649
    %v4651 = vrot.slane %v4637, %v4650
    %v4652 = vcombine.high %v4644, 0.0
    %v4654 = vunpack.c.l.s4 1934713408
    %v4655 = vunpack.c.0.s8 %v4654
    %v4656 = vlaneseq
    %v4657 = vshrl.u32 %v4656, 7
    %v4658 = vsub.s32 %v4655, %v4657
    %v4659 = vrot.slane %v4644, %v4658
    %v4661 = vunpack.c.l.s4 1934713408
    %v4662 = vunpack.c.0.s8 %v4661
    %v4663 = vlaneseq
    %v4664 = vshrl.u32 %v4663, 7
    %v4665 = vsub.s32 %v4662, %v4664
    %v4666 = vrot.slane %v4652, %v4665
    %v4667 = vcombine.high %v4651, 0.0
    %v4669 = vunpack.c.l.s4 1934713408
    %v4670 = vunpack.c.0.s8 %v4669
    %v4671 = vlaneseq
    %v4672 = vshrl.u32 %v4671, 7
    %v4673 = vsub.s32 %v4670, %v4672
    %v4674 = vrot.slane %v4651, %v4673
    %v4676 = vunpack.c.l.s4 1934713408
    %v4677 = vunpack.c.0.s8 %v4676
    %v4678 = vlaneseq
    %v4679 = vshrl.u32 %v4678, 7
    %v4680 = vsub.s32 %v4677, %v4679
    %v4681 = vrot.slane %v4667, %v4680
    %v4682 = vcombine.high %v4659, 0.0
    %v4683 = vcombine.high %v4666, 0.0
    %v4684 = vcombine.high %v4674, 0.0
    %v4685 = vcombine.high %v4681, 0.0
    %v4686 = vcombine.high %v4632, 0.0
    %v4688 = vunpack.c.l.s4 1983009808
    %v4689 = vunpack.c.0.s8 %v4688
    %v4690 = vlaneseq
    %v4691 = vshrl.u32 %v4690, 7
    %v4692 = vsub.s32 %v4689, %v4691
    %v4693 = vrot.slane %v4632, %v4692
    %v4695 = vunpack.c.l.s4 1983009808
    %v4696 = vunpack.c.0.s8 %v4695
    %v4697 = vlaneseq
    %v4698 = vshrl.u32 %v4697, 7
    %v4699 = vsub.s32 %v4696, %v4698
    %v4700 = vrot.slane %v4686, %v4699
    %v4701 = vcombine.high %v4693, 0.0
    %v4703 = vunpack.c.l.s4 1934713408
    %v4704 = vunpack.c.0.s8 %v4703
    %v4705 = vlaneseq
    %v4706 = vshrl.u32 %v4705, 7
    %v4707 = vsub.s32 %v4704, %v4706
    %v4708 = vrot.slane %v4693, %v4707
    %v4710 = vunpack.c.l.s4 1934713408
    %v4711 = vunpack.c.0.s8 %v4710
    %v4712 = vlaneseq
    %v4713 = vshrl.u32 %v4712, 7
    %v4714 = vsub.s32 %v4711, %v4713
    %v4715 = vrot.slane %v4701, %v4714
    %v4716 = vcombine.high %v4700, 0.0
    %v4718 = vunpack.c.l.s4 1934713408
    %v4719 = vunpack.c.0.s8 %v4718
    %v4720 = vlaneseq
    %v4721 = vshrl.u32 %v4720, 7
    %v4722 = vsub.s32 %v4719, %v4721
    %v4723 = vrot.slane %v4700, %v4722
    %v4725 = vunpack.c.l.s4 1934713408
    %v4726 = vunpack.c.0.s8 %v4725
    %v4727 = vlaneseq
    %v4728 = vshrl.u32 %v4727, 7
    %v4729 = vsub.s32 %v4726, %v4728
    %v4730 = vrot.slane %v4716, %v4729
    %v4731 = vcombine.high %v4708, 0.0
    %v4732 = vcombine.high %v4715, 0.0
    %v4733 = vcombine.high %v4723, 0.0
    %v4734 = vcombine.high %v4730, 0.0
    %v4735 = vcombine.high %v4634, 0.0
    %v4737 = vunpack.c.l.s4 1983009808
    %v4738 = vunpack.c.0.s8 %v4737
    %v4739 = vlaneseq
    %v4740 = vshrl.u32 %v4739, 7
    %v4741 = vsub.s32 %v4738, %v4740
    %v4742 = vrot.slane %v4634, %v4741
    %v4744 = vunpack.c.l.s4 1983009808
    %v4745 = vunpack.c.0.s8 %v4744
    %v4746 = vlaneseq
    %v4747 = vshrl.u32 %v4746, 7
    %v4748 = vsub.s32 %v4745, %v4747
    %v4749 = vrot.slane %v4735, %v4748
    %v4750 = vcombine.high %v4742, 0.0
    %v4752 = vunpack.c.l.s4 1934713408
    %v4753 = vunpack.c.0.s8 %v4752
    %v4754 = vlaneseq
    %v4755 = vshrl.u32 %v4754, 7
    %v4756 = vsub.s32 %v4753, %v4755
    %v4757 = vrot.slane %v4742, %v4756
    %v4759 = vunpack.c.l.s4 1934713408
    %v4760 = vunpack.c.0.s8 %v4759
    %v4761 = vlaneseq
    %v4762 = vshrl.u32 %v4761, 7
    %v4763 = vsub.s32 %v4760, %v4762
    %v4764 = vrot.slane %v4750, %v4763
    %v4765 = vcombine.high %v4749, 0.0
    %v4767 = vunpack.c.l.s4 1934713408
    %v4768 = vunpack.c.0.s8 %v4767
    %v4769 = vlaneseq
    %v4770 = vshrl.u32 %v4769, 7
    %v4771 = vsub.s32 %v4768, %v4770
    %v4772 = vrot.slane %v4749, %v4771
    %v4774 = vunpack.c.l.s4 1934713408
    %v4775 = vunpack.c.0.s8 %v4774
    %v4776 = vlaneseq
    %v4777 = vshrl.u32 %v4776, 7
    %v4778 = vsub.s32 %v4775, %v4777
    %v4779 = vrot.slane %v4765, %v4778
    %v4780 = vcombine.high %v4757, 0.0
    %v4781 = vcombine.high %v4764, 0.0
    %v4782 = vcombine.high %v4772, 0.0
    %v4783 = vcombine.high %v4779, 0.0
    %v4784 = vcombine.high %v4636, 0.0
    %v4786 = vunpack.c.l.s4 1983009808
    %v4787 = vunpack.c.0.s8 %v4786
    %v4788 = vlaneseq
    %v4789 = vshrl.u32 %v4788, 7
    %v4790 = vsub.s32 %v4787, %v4789
    %v4791 = vrot.slane %v4636, %v4790
    %v4793 = vunpack.c.l.s4 1983009808
    %v4794 = vunpack.c.0.s8 %v4793
    %v4795 = vlaneseq
    %v4796 = vshrl.u32 %v4795, 7
    %v4797 = vsub.s32 %v4794, %v4796
    %v4798 = vrot.slane %v4784, %v4797
    %v4799 = vcombine.high %v4791, 0.0
    %v4801 = vunpack.c.l.s4 1934713408
    %v4802 = vunpack.c.0.s8 %v4801
    %v4803 = vlaneseq
    %v4804 = vshrl.u32 %v4803, 7
    %v4805 = vsub.s32 %v4802, %v4804
    %v4806 = vrot.slane %v4791, %v4805
    %v4808 = vunpack.c.l.s4 1934713408
    %v4809 = vunpack.c.0.s8 %v4808
    %v4810 = vlaneseq
    %v4811 = vshrl.u32 %v4810, 7
    %v4812 = vsub.s32 %v4809, %v4811
    %v4813 = vrot.slane %v4799, %v4812
    %v4814 = vcombine.high %v4798, 0.0
    %v4816 = vunpack.c.l.s4 1934713408
    %v4817 = vunpack.c.0.s8 %v4816
    %v4818 = vlaneseq
    %v4819 = vshrl.u32 %v4818, 7
    %v4820 = vsub.s32 %v4817, %v4819
    %v4821 = vrot.slane %v4798, %v4820
    %v4823 = vunpack.c.l.s4 1934713408
    %v4824 = vunpack.c.0.s8 %v4823
    %v4825 = vlaneseq
    %v4826 = vshrl.u32 %v4825, 7
    %v4827 = vsub.s32 %v4824, %v4826
    %v4828 = vrot.slane %v4814, %v4827
    %v4829 = vcombine.high %v4806, 0.0
    %v4830 = vcombine.high %v4813, 0.0
    %v4831 = vcombine.high %v4821, 0.0
    %v4832 = vcombine.high %v4828, 0.0
    %4835 = vrot.lane.b32.xlu0 %v4682, 16
    %v4836 = vpop.permute.xlu0 %4835
    %4837 = vrot.lane.b32.xlu0 %v4780, 16
    %v4838 = vpop.permute.xlu0 %4837
    %4843 = vrot.lane.b32.xlu0 %v4666, 32
    %v4844 = vpop.permute.xlu0 %4843
    %4845 = vrot.lane.b32.xlu0 %v4764, 32
    %v4846 = vpop.permute.xlu0 %4845
    %4851 = vrot.lane.b32.xlu0 %v4683, 48
    %v4852 = vpop.permute.xlu0 %4851
    %4853 = vrot.lane.b32.xlu0 %v4781, 48
    %v4854 = vpop.permute.xlu0 %4853
    %4859 = vrot.lane.b32.xlu0 %v4674, 64
    %v4860 = vpop.permute.xlu0 %4859
    %4861 = vrot.lane.b32.xlu0 %v4772, 64
    %v4862 = vpop.permute.xlu0 %4861
    %4867 = vrot.lane.b32.xlu0 %v4684, 80
    %v4868 = vpop.permute.xlu0 %4867
    %4869 = vrot.lane.b32.xlu0 %v4782, 80
    %v4870 = vpop.permute.xlu0 %4869
    %4875 = vrot.lane.b32.xlu0 %v4681, 96
    %v4876 = vpop.permute.xlu0 %4875
    %4877 = vrot.lane.b32.xlu0 %v4779, 96
    %v4878 = vpop.permute.xlu0 %4877
    %4883 = vrot.lane.b32.xlu0 %v4685, 112
    %v4884 = vpop.permute.xlu0 %4883
    %4885 = vrot.lane.b32.xlu0 %v4783, 112
    %v4886 = vpop.permute.xlu0 %4885
    %4891 = vrot.lane.b32.xlu0 %v4731, 16
    %v4892 = vpop.permute.xlu0 %4891
    %4893 = vrot.lane.b32.xlu0 %v4829, 16
    %v4894 = vpop.permute.xlu0 %4893
    %4899 = vrot.lane.b32.xlu0 %v4715, 32
    %v4900 = vpop.permute.xlu0 %4899
    %4901 = vrot.lane.b32.xlu0 %v4813, 32
    %v4902 = vpop.permute.xlu0 %4901
    %4907 = vrot.lane.b32.xlu0 %v4732, 48
    %v4908 = vpop.permute.xlu0 %4907
    %4909 = vrot.lane.b32.xlu0 %v4830, 48
    %v4910 = vpop.permute.xlu0 %4909
    %4915 = vrot.lane.b32.xlu0 %v4723, 64
    %v4916 = vpop.permute.xlu0 %4915
    %4917 = vrot.lane.b32.xlu0 %v4821, 64
    %v4918 = vpop.permute.xlu0 %4917
    %4923 = vrot.lane.b32.xlu0 %v4733, 80
    %v4924 = vpop.permute.xlu0 %4923
    %4925 = vrot.lane.b32.xlu0 %v4831, 80
    %v4926 = vpop.permute.xlu0 %4925
    %4931 = vrot.lane.b32.xlu0 %v4730, 96
    %v4932 = vpop.permute.xlu0 %4931
    %4933 = vrot.lane.b32.xlu0 %v4828, 96
    %v4934 = vpop.permute.xlu0 %4933
    %4939 = vrot.lane.b32.xlu0 %v4734, 112
    %v4940 = vpop.permute.xlu0 %4939
    %4941 = vrot.lane.b32.xlu0 %v4832, 112
    %v4942 = vpop.permute.xlu0 %4941
    %vm4945 = vcmask 130048
    %v4946 = vsel %vm4945, %v4659, %v4836
    %v4947 = vsel %vm4945, %v4757, %v4838
    %v4948 = vsel %vm230, %v4946, %v4844
    %v4949 = vsel %vm230, %v4947, %v4846
    %vm4950 = vcmask 392192
    %v4951 = vsel %vm4950, %v4948, %v4852
    %v4952 = vsel %vm4950, %v4949, %v4854
    %vm4953 = vcmask 523264
    %v4954 = vsel %vm4953, %v4951, %v4860
    %v4955 = vsel %vm4953, %v4952, %v4862
    %vm4956 = vcmask 654336
    %v4957 = vsel %vm4956, %v4954, %v4868
    %v4958 = vsel %vm4956, %v4955, %v4870
    %vm4959 = vcmask 785408
    %v4960 = vsel %vm4959, %v4957, %v4876
    %v4961 = vsel %vm4959, %v4958, %v4878
    %vm4962 = vcmask 916480
    %v4963 = vsel %vm4962, %v4960, %v4884
    %v4964 = vsel %vm4962, %v4961, %v4886
    %v4965 = vsel %vm4945, %v4708, %v4892
    %v4966 = vsel %vm4945, %v4806, %v4894
    %v4967 = vsel %vm230, %v4965, %v4900
    %v4968 = vsel %vm230, %v4966, %v4902
    %v4969 = vsel %vm4950, %v4967, %v4908
    %v4970 = vsel %vm4950, %v4968, %v4910
    %v4971 = vsel %vm4953, %v4969, %v4916
    %v4972 = vsel %vm4953, %v4970, %v4918
    %v4973 = vsel %vm4956, %v4971, %v4924
    %v4974 = vsel %vm4956, %v4972, %v4926
    %v4975 = vsel %vm4959, %v4973, %v4932
    %v4976 = vsel %vm4959, %v4974, %v4934
    %v4977 = vsel %vm4962, %v4975, %v4940
    %v4978 = vsel %vm4962, %v4976, %v4942
    %v4979 = vlaneseq
    %v4980 = vshrl.u32 %v4979, 7
    %v4981 = vsub.s32 0, %v4980
    %v4982 = vrot.slane %v4963, %v4981
    %v4983 = vlaneseq
    %v4984 = vshrl.u32 %v4983, 7
    %v4985 = vsub.s32 0, %v4984
    %v4986 = vrot.slane %v4977, %v4985
    %v4987 = vlaneseq
    %v4988 = vshrl.u32 %v4987, 7
    %v4989 = vsub.s32 0, %v4988
    %v4990 = vrot.slane %v4964, %v4989
    %v4991 = vlaneseq
    %v4992 = vshrl.u32 %v4991, 7
    %v4993 = vsub.s32 0, %v4992
    %v4994 = vrot.slane %v4978, %v4993
    %v4995 = vmul.f32 %v431, %v4982
    %v4996 = vmul.f32 %v432, %v4986
    %v4997 = vmul.f32 %v433, %v4982
    %v4998 = vmul.f32 %v434, %v4986
    %v4999 = vmul.f32 %v435, %v4982
    %v5000 = vmul.f32 %v436, %v4986
    %v5001 = vmul.f32 %v437, %v4982
    %v5002 = vmul.f32 %v438, %v4986
    %v5003 = vmul.f32 %v439, %v4990
    %v5004 = vmul.f32 %v440, %v4994
    %v5005 = vmul.f32 %v441, %v4990
    %v5006 = vmul.f32 %v442, %v4994
    %v5007 = vmul.f32 %v443, %v4990
    %v5008 = vmul.f32 %v444, %v4994
    %v5009 = vmul.f32 %v445, %v4990
    %v5010 = vmul.f32 %v446, %v4994
    %5011 = vst [vmem:[#allocation8] sm:$0xff] %v4995
    %5012 = vst [vmem:[#allocation8 + $0x8] sm:$0xff] %v4996
    %5013 = vst [vmem:[#allocation8 + $0x10] sm:$0xff] %v4997
    %5014 = vst [vmem:[#allocation8 + $0x18] sm:$0xff] %v4998
    %5015 = vst [vmem:[#allocation8 + $0x20] sm:$0xff] %v4999
    %5016 = vst [vmem:[#allocation8 + $0x28] sm:$0xff] %v5000
    %5017 = vst [vmem:[#allocation8 + $0x30] sm:$0xff] %v5001
    %5018 = vst [vmem:[#allocation8 + $0x38] sm:$0xff] %v5002
    %5019 = vst [vmem:[#allocation8 + $0x40] sm:$0xff] %v5003
    %5020 = vst [vmem:[#allocation8 + $0x48] sm:$0xff] %v5004
    %5021 = vst [vmem:[#allocation8 + $0x50] sm:$0xff] %v5005
    %5022 = vst [vmem:[#allocation8 + $0x58] sm:$0xff] %v5006
    %5023 = vst [vmem:[#allocation8 + $0x60] sm:$0xff] %v5007
    %5024 = vst [vmem:[#allocation8 + $0x68] sm:$0xff] %v5008
    %5025 = vst [vmem:[#allocation8 + $0x70] sm:$0xff] %v5009
    %5026 = vst [vmem:[#allocation8 + $0x78] sm:$0xff] %v5010
    // Predicated region
    $region26: #{tpu_custom_call.1} parent=1 // pred_check
      _
    $region27: #{tpu_custom_call.1} parent=1 // pred_check_branch
      %5028 = sbr.rel (0) target = $region29
    $region28: #{tpu_custom_call.1} parent=1 // pred_region
      %s5030 = ssub.s32 2048, 2048
      %5031 = vsyncadd [#allocation5], %s5030
      %s5032 = sshll.u32 [#allocation8], 4
      %s5033 = int_to_ptr.vmem [resolvable:$true] %s5032
      %5038 = dma.vmem_to_hbm [thread:$0]  %s5033, 2048, %s4, [#allocation5], 256, 256, 16
    $region29: #{tpu_custom_call.1} parent=1 // pred_fallthru
      _
    // Predicated region
    $region30: #{tpu_custom_call.1} parent=1 // pred_check
      _
    $region31: #{tpu_custom_call.1} parent=1 // pred_check_branch
      %5040 = sbr.rel (0) target = $region33
    $region32: #{tpu_custom_call.1} parent=1 // pred_region
      %5041 = dma.done [#allocation5], 2048
    $region33: #{tpu_custom_call.1} parent=1 // pred_fallthru
      _
    %5042 = vsyncpa [#allocation4], 1
    %5043 = vsyncpa [#allocation5], 1
    %5044 = vsyncpa [#allocation6], 1

</llo_original>
